<compile_context>
chip_gen: v6e
topology: v6e:2x2x1
jax: 0.10.0
libtpu: 0.0.40
codegen_flags: <defaults>
</compile_context>

<pallas_src>
import jax
import jax.numpy as jnp
from jax.experimental import pallas as pl
from jax.experimental.pallas import tpu as pltpu

IN = 784        # flattened 1x28x28 image (= 6*128 + 16)
H_RAW = 400     # torch hidden width of fc1 / fc3-out / fc4-in
HP = 512        # hidden width padded to 4*128 lanes (zero pad, exact no-op)
LPAD = 128      # latent dim padded to one full lane group


def _round_up(n, m):
    return ((n + m - 1) // m) * m


def _cdiv(a, b):
    return -(-a // b)


def _choose_tile(B, block_b, min_grid):
    """Balanced batch tile: minimize padding, keep >=2 grid steps when possible."""
    n = max(1, _cdiv(B, block_b))
    if B >= min_grid * 8:          # only split if every tile gets >= 8 rows
        n = max(n, min_grid)
    if n <= 1:
        return B, B                # single step: block == full dims, no padding
    tb = _round_up(_cdiv(B, n), 8)
    bp = _round_up(B, tb)
    return tb, bp


# -----------------------------------------------------------------------------
# Kernel
# -----------------------------------------------------------------------------
def vae_forward_kernel(x_ref, eps_ref,
                       w1_ref, b1_ref,
                       wlat_ref, blat_ref,
                       w3_ref, b3_ref,
                       w4_ref, b4_ref,
                       recon_ref, mu_ref, logvar_ref):
    latent = mu_ref.shape[1]

    # ---- encode: h1 = relu(x @ W1 + b1)   (bf16 MXU, f32 accumulate) ----
    x = x_ref[...].astype(jnp.bfloat16)
    h1 = jnp.dot(x, w1_ref[...], preferred_element_type=jnp.float32) + b1_ref[...]
    h1 = jnp.maximum(h1, 0.0).astype(jnp.bfloat16)

    # ---- fused mu || logvar projection (one MXU issue, 256 lanes) ----
    lat = jnp.dot(h1, wlat_ref[...],
                  preferred_element_type=jnp.float32) + blat_ref[...]
    mu_pad = lat[:, :LPAD]                    # lane-aligned split at 128
    logvar_pad = lat[:, LPAD:]

    # store mu / logvar at their true width (no post-kernel slice pass)
    mu_ref[...] = mu_pad[:, :latent]
    logvar_ref[...] = logvar_pad[:, :latent]

    # ---- reparameterize: z = mu + eps * exp(0.5 * logvar)   (f32) ----
    std = jnp.exp(0.5 * logvar_pad)           # padded cols: exp(0) = 1
    z = mu_pad + eps_ref[...].astype(jnp.float32) * std   # padded cols stay 0

    # ---- decode: relu(z @ W3 + b3) -> sigmoid(h3 @ W4 + b4) ----
    h3 = jnp.dot(z.astype(jnp.bfloat16), w3_ref[...],
                 preferred_element_type=jnp.float32) + b3_ref[...]
    h3 = jnp.maximum(h3, 0.0).astype(jnp.bfloat16)
    logits = jnp.dot(h3, w4_ref[...],
                     preferred_element_type=jnp.float32) + b4_ref[...]
    recon_ref[...] = jax.nn.sigmoid(logits).astype(recon_ref.dtype)


# -----------------------------------------------------------------------------
# Parameter packing (do once, reuse across calls)
# -----------------------------------------------------------------------------
def pack_params(params):
    """Pack (in, out)-layout params into padded bf16 weights / f32 biases."""
    latent = params["w21"].shape[1]

    # fc1: pad N 400 -> 512
    w1 = jnp.zeros((IN, HP), jnp.float32)
    w1 = w1.at[:, :H_RAW].set(params["w1"]).astype(jnp.bfloat16)        # (784, 512)
    b1 = jnp.zeros((1, HP), jnp.float32).at[:, :H_RAW].set(params["b1"].reshape(1, -1))

    # fused mu||logvar projection: K padded to 512, each half padded to 128 lanes
    wlat = jnp.zeros((HP, 2 * LPAD), jnp.float32)
    wlat = wlat.at[:H_RAW, :latent].set(params["w21"])
    wlat = wlat.at[:H_RAW, LPAD:LPAD + latent].set(params["w22"])
    wlat = wlat.astype(jnp.bfloat16)                                    # (512, 256)
    blat = jnp.zeros((1, 2 * LPAD), jnp.float32)
    blat = blat.at[:, :latent].set(params["b21"].reshape(1, -1))
    blat = blat.at[:, LPAD:LPAD + latent].set(params["b22"].reshape(1, -1))

    # decoder: fc3 (K pad to 128, N pad to 512), fc4 (K pad to 512, N = 784)
    w3 = jnp.zeros((LPAD, HP), jnp.float32)
    w3 = w3.at[:latent, :H_RAW].set(params["w3"]).astype(jnp.bfloat16)  # (128, 512)
    b3 = jnp.zeros((1, HP), jnp.float32).at[:, :H_RAW].set(params["b3"].reshape(1, -1))
    w4 = jnp.zeros((HP, IN), jnp.float32)
    w4 = w4.at[:H_RAW, :].set(params["w4"]).astype(jnp.bfloat16)        # (512, 784)
    b4 = params["b4"].reshape(1, IN).astype(jnp.float32)

    return dict(latent_dim=latent, w1=w1, b1=b1, wlat=wlat, blat=blat,
                w3=w3, b3=b3, w4=w4, b4=b4)


# -----------------------------------------------------------------------------
# Wrapper
# -----------------------------------------------------------------------------
def vae_forward(x, packed, eps, *, block_b=512, min_grid=2,
                vmem_limit_bytes=48 * 1024 * 1024,
                recon_dtype=jnp.bfloat16):
    """x: (B, 1, 28, 28) or (B, 784), f32 or bf16. Returns (recon, mu, logvar).

    recon is bf16 by default (halves the dominant HBM output stream); pass
    recon_dtype=jnp.float32 for closer bit-parity with the torch module.
    On v6e, vmem_limit_bytes can be raised (~96 MiB) and block_b grown to 1024;
    on v7x keep block_b in the 512-768 range (64 MiB VMEM per TensorCore).
    """
    latent = packed["latent_dim"]
    x2d = x.reshape(-1, IN)                 # keep caller dtype; cast in-kernel
    B = x2d.shape[0]

    TB, Bp = _choose_tile(B, block_b, min_grid)
    if Bp != B:
        x2d = jnp.pad(x2d, ((0, Bp - B), (0, 0)))
    eps_p = jnp.zeros((Bp, LPAD), jnp.float32)
    eps_p = eps_p.at[:B, :latent].set(eps.astype(jnp.float32))

    grid = (Bp // TB,)

    def row_spec(feat):
        return pl.BlockSpec((TB, feat), lambda i: (i, 0))

    def const_spec(shape):
        return pl.BlockSpec(shape, lambda i: (0, 0))

    # advisory cost estimate, kept in sync with the padded shapes / dtypes
    flops = 2 * Bp * (IN * HP + HP * 2 * LPAD + LPAD * HP + HP * IN)
    transcendentals = Bp * (LPAD + IN)
    weight_bytes = 2 * (IN * HP + HP * 2 * LPAD + LPAD * HP + HP * IN) \
        + 4 * (HP + 2 * LPAD + HP + IN)
    io_bytes = (jnp.dtype(x2d.dtype).itemsize * Bp * IN     # x
                + 4 * Bp * LPAD                             # eps
                + jnp.dtype(recon_dtype).itemsize * Bp * IN  # recon
                + 4 * Bp * 2 * latent)                      # mu, logvar
    bytes_accessed = weight_bytes + io_bytes

    recon, mu, logvar = pl.pallas_call(
        vae_forward_kernel,
        out_shape=(
            jax.ShapeDtypeStruct((Bp, IN), recon_dtype),      # recon (784 cols)
            jax.ShapeDtypeStruct((Bp, latent), jnp.float32),  # mu
            jax.ShapeDtypeStruct((Bp, latent), jnp.float32),  # logvar
        ),
        grid=grid,
        in_specs=[
            row_spec(IN),                 # x
            row_spec(LPAD),               # eps (zero-padded to 128 lanes)
            const_spec((IN, HP)),         # w1 (bf16)
            const_spec((1, HP)),          # b1
            const_spec((HP, 2 * LPAD)),   # wlat (bf16)
            const_spec((1, 2 * LPAD)),    # blat
            const_spec((LPAD, HP)),       # w3 (bf16)
            const_spec((1, HP)),          # b3
            const_spec((HP, IN)),         # w4 (bf16)
            const_spec((1, IN)),          # b4
        ],
        out_specs=(row_spec(IN), row_spec(latent), row_spec(latent)),
        compiler_params=pltpu.CompilerParams(
            dimension_semantics=("parallel",),
            vmem_limit_bytes=vmem_limit_bytes,
        ),
        cost_estimate=pl.CostEstimate(
            flops=flops,
            transcendentals=transcendentals,
            bytes_accessed=bytes_accessed,
        ),
    )(x2d, eps_p,
      packed["w1"], packed["b1"],
      packed["wlat"], packed["blat"],
      packed["w3"], packed["b3"],
      packed["w4"], packed["b4"])

    if Bp != B:       # only when the batch genuinely needed padding
        recon, mu, logvar = recon[:B], mu[:B], logvar[:B]
    return recon, mu, logvar


# -----------------------------------------------------------------------------
# Synthetic params + pure-JAX reference
# -----------------------------------------------------------------------------
def init_params(key, latent_dim=20):
    """Deterministic synthetic parameters matching the torch module's shapes
    ((in, out) layout; torch's (out, in) weights would just be transposed)."""
    def linear(k, fan_in, fan_out):
        kw, kb = jax.random.split(k)
        bound = 1.0 / jnp.sqrt(fan_in)
        w = jax.random.uniform(kw, (fan_in, fan_out), jnp.float32, -bound, bound)
        b = jax.random.uniform(kb, (1, fan_out), jnp.float32, -bound, bound)
        return w, b

    k1, k2, k3, k4, k5 = jax.random.split(key, 5)
    w1, b1 = linear(k1, 784, 400)
    w21, b21 = linear(k2, 400, latent_dim)
    w22, b22 = linear(k3, 400, latent_dim)
    w3, b3 = linear(k4, latent_dim, 400)
    w4, b4 = linear(k5, 400, 784)
    return dict(w1=w1, b1=b1, w21=w21, b21=b21, w22=w22, b22=b22,
                w3=w3, b3=b3, w4=w4, b4=b4)


def vae_forward_ref(x, params, eps):
    """Pure-JAX f32 reference for a sanity check."""
    x2d = x.reshape(-1, IN).astype(jnp.float32)
    h1 = jnp.maximum(x2d @ params["w1"] + params["b1"], 0.0)
    mu = h1 @ params["w21"] + params["b21"]
    logvar = h1 @ params["w22"] + params["b22"]
    z = mu + eps * jnp.exp(0.5 * logvar)
    h3 = jnp.maximum(z @ params["w3"] + params["b3"], 0.0)
    recon = jax.nn.sigmoid(h3 @ params["w4"] + params["b4"])
    return recon, mu, logvar


if __name__ == "__main__":
    key = jax.random.PRNGKey(0)
    k_param, k_x, k_eps = jax.random.split(key, 3)

    latent_dim = 20
    batch = 2
    params = init_params(k_param, latent_dim=latent_dim)
    packed = pack_params(params)

    # MNIST-like NCHW input, flattened inside the wrapper (x.view(-1, 784)).
    x = jax.random.uniform(k_x, (batch, 1, 28, 28), jnp.float32)
    # eps sampled outside the kernel (deterministic torch.randn_like stand-in)
    eps = jax.random.normal(k_eps, (batch, latent_dim), jnp.float32)

    recon, mu, logvar = jax.block_until_ready(vae_forward(x, packed, eps))

    recon_r, mu_r, logvar_r = vae_forward_ref(x, params, eps)
    assert recon.shape == (batch, IN)
    assert mu.shape == (batch, latent_dim)
    assert logvar.shape == (batch, latent_dim)
    # bf16 weights/recon with f32 accumulation: loosened atol + rtol vs f32 ref.
    assert jnp.allclose(recon.astype(jnp.float32), recon_r, atol=2e-2, rtol=2e-2)
    assert jnp.allclose(mu, mu_r, atol=2e-2, rtol=2e-2)
    assert jnp.allclose(logvar, logvar_r, atol=2e-2, rtol=2e-2)

    print("KERNEL_OK")
</pallas_src>

<mosaic_0001>
module attributes {stable_mosaic.version = 11 : i64} {
  func.func @vae_forward_kernel(%arg0: i32, %arg1: memref<2x784xf32, #tpu.memory_space<vmem>>, %arg2: memref<2x128xf32, #tpu.memory_space<vmem>>, %arg3: memref<784x512xbf16, #tpu.memory_space<vmem>>, %arg4: memref<1x512xf32, #tpu.memory_space<vmem>>, %arg5: memref<512x256xbf16, #tpu.memory_space<vmem>>, %arg6: memref<1x256xf32, #tpu.memory_space<vmem>>, %arg7: memref<128x512xbf16, #tpu.memory_space<vmem>>, %arg8: memref<1x512xf32, #tpu.memory_space<vmem>>, %arg9: memref<512x784xbf16, #tpu.memory_space<vmem>>, %arg10: memref<1x784xf32, #tpu.memory_space<vmem>>, %arg11: memref<2x784xbf16, #tpu.memory_space<vmem>>, %arg12: memref<2x20xf32, #tpu.memory_space<vmem>>, %arg13: memref<2x20xf32, #tpu.memory_space<vmem>>) attributes {dimension_semantics = [#tpu.dimension_semantics<parallel>], iteration_bounds = array<i64: 1>, scalar_prefetch = 0 : i64, scratch_operands = 0 : i64, tpu.core_type = #tpu.core_type<tc>, window_params = [{transform_indices = @transform_0, window_bounds = array<i64: 2, 784>}, {transform_indices = @transform_1, window_bounds = array<i64: 2, 128>}, {pipeline_mode = #tpu.pipeline_mode<synchronous>, transform_indices = @transform_2, window_bounds = array<i64: 784, 512>}, {pipeline_mode = #tpu.pipeline_mode<synchronous>, transform_indices = @transform_3, window_bounds = array<i64: 1, 512>}, {pipeline_mode = #tpu.pipeline_mode<synchronous>, transform_indices = @transform_4, window_bounds = array<i64: 512, 256>}, {pipeline_mode = #tpu.pipeline_mode<synchronous>, transform_indices = @transform_5, window_bounds = array<i64: 1, 256>}, {pipeline_mode = #tpu.pipeline_mode<synchronous>, transform_indices = @transform_6, window_bounds = array<i64: 128, 512>}, {pipeline_mode = #tpu.pipeline_mode<synchronous>, transform_indices = @transform_7, window_bounds = array<i64: 1, 512>}, {pipeline_mode = #tpu.pipeline_mode<synchronous>, transform_indices = @transform_8, window_bounds = array<i64: 512, 784>}, {pipeline_mode = #tpu.pipeline_mode<synchronous>, transform_indices = @transform_9, window_bounds = array<i64: 1, 784>}, {transform_indices = @transform_10, window_bounds = array<i64: 2, 784>}, {transform_indices = @transform_11, window_bounds = array<i64: 2, 20>}, {transform_indices = @transform_12, window_bounds = array<i64: 2, 20>}]} {
    %c0 = arith.constant 0 : index
    %c0_0 = arith.constant 0 : index
    %0 = vector.load %arg1[%c0, %c0_0] : memref<2x784xf32, #tpu.memory_space<vmem>>, vector<2x784xf32>
    %1 = arith.truncf %0 : vector<2x784xf32> to vector<2x784xbf16>
    %c0_1 = arith.constant 0 : index
    %c0_2 = arith.constant 0 : index
    %2 = vector.load %arg3[%c0_1, %c0_2] : memref<784x512xbf16, #tpu.memory_space<vmem>>, vector<784x512xbf16>
    %cst = arith.constant dense<0.000000e+00> : vector<2x512xf32>
    %3 = tpu.matmul %1, %2, %cst {dimension_numbers = #tpu.dot_dimension_numbers<[1], [0], [0], [1], [0, 0, 1, 1], [], []>} : vector<2x784xbf16>, vector<784x512xbf16>, vector<2x512xf32> -> vector<2x512xf32>
    %c0_3 = arith.constant 0 : index
    %c0_4 = arith.constant 0 : index
    %4 = vector.load %arg4[%c0_3, %c0_4] : memref<1x512xf32, #tpu.memory_space<vmem>>, vector<1x512xf32>
    %5 = vector.broadcast %4 : vector<1x512xf32> to vector<2x512xf32>
    %6 = arith.addf %3, %5 : vector<2x512xf32>
    %cst_5 = arith.constant 0.000000e+00 : f32
    %7 = vector.broadcast %cst_5 : f32 to vector<2x512xf32>
    %8 = arith.maximumf %6, %7 : vector<2x512xf32>
    %9 = arith.truncf %8 : vector<2x512xf32> to vector<2x512xbf16>
    %c0_6 = arith.constant 0 : index
    %c0_7 = arith.constant 0 : index
    %10 = vector.load %arg5[%c0_6, %c0_7] : memref<512x256xbf16, #tpu.memory_space<vmem>>, vector<512x256xbf16>
    %cst_8 = arith.constant dense<0.000000e+00> : vector<2x256xf32>
    %11 = tpu.matmul %9, %10, %cst_8 {dimension_numbers = #tpu.dot_dimension_numbers<[1], [0], [0], [1], [0, 0, 1, 1], [], []>} : vector<2x512xbf16>, vector<512x256xbf16>, vector<2x256xf32> -> vector<2x256xf32>
    %c0_9 = arith.constant 0 : index
    %c0_10 = arith.constant 0 : index
    %12 = vector.load %arg6[%c0_9, %c0_10] : memref<1x256xf32, #tpu.memory_space<vmem>>, vector<1x256xf32>
    %13 = vector.broadcast %12 : vector<1x256xf32> to vector<2x256xf32>
    %14 = arith.addf %11, %13 : vector<2x256xf32>
    %15 = vector.extract_strided_slice %14 {offsets = [0, 0], sizes = [2, 128], strides = [1, 1]} : vector<2x256xf32> to vector<2x128xf32>
    %16 = vector.extract_strided_slice %14 {offsets = [0, 128], sizes = [2, 128], strides = [1, 1]} : vector<2x256xf32> to vector<2x128xf32>
    %17 = vector.extract_strided_slice %15 {offsets = [0, 0], sizes = [2, 20], strides = [1, 1]} : vector<2x128xf32> to vector<2x20xf32>
    %c0_11 = arith.constant 0 : index
    %c0_12 = arith.constant 0 : index
    %18 = vector.load %arg12[%c0_11, %c0_12] : memref<2x20xf32, #tpu.memory_space<vmem>>, vector<2x20xf32>
    tpu.vector_store %arg12[%c0_11, %c0_12], %17 {strides = array<i32>} : memref<2x20xf32, #tpu.memory_space<vmem>>, vector<2x20xf32>,
    %19 = vector.extract_strided_slice %16 {offsets = [0, 0], sizes = [2, 20], strides = [1, 1]} : vector<2x128xf32> to vector<2x20xf32>
    %c0_13 = arith.constant 0 : index
    %c0_14 = arith.constant 0 : index
    %20 = vector.load %arg13[%c0_13, %c0_14] : memref<2x20xf32, #tpu.memory_space<vmem>>, vector<2x20xf32>
    tpu.vector_store %arg13[%c0_13, %c0_14], %19 {strides = array<i32>} : memref<2x20xf32, #tpu.memory_space<vmem>>, vector<2x20xf32>,
    %cst_15 = arith.constant 5.000000e-01 : f32
    %21 = vector.broadcast %cst_15 : f32 to vector<2x128xf32>
    %22 = arith.mulf %21, %16 : vector<2x128xf32>
    %23 = math.exp %22 : vector<2x128xf32>
    %c0_16 = arith.constant 0 : index
    %c0_17 = arith.constant 0 : index
    %24 = vector.load %arg2[%c0_16, %c0_17] : memref<2x128xf32, #tpu.memory_space<vmem>>, vector<2x128xf32>
    %25 = arith.mulf %24, %23 : vector<2x128xf32>
    %26 = arith.addf %15, %25 : vector<2x128xf32>
    %27 = arith.truncf %26 : vector<2x128xf32> to vector<2x128xbf16>
    %c0_18 = arith.constant 0 : index
    %c0_19 = arith.constant 0 : index
    %28 = vector.load %arg7[%c0_18, %c0_19] : memref<128x512xbf16, #tpu.memory_space<vmem>>, vector<128x512xbf16>
    %cst_20 = arith.constant dense<0.000000e+00> : vector<2x512xf32>
    %29 = tpu.matmul %27, %28, %cst_20 {dimension_numbers = #tpu.dot_dimension_numbers<[1], [0], [0], [1], [0, 0, 1, 1], [], []>} : vector<2x128xbf16>, vector<128x512xbf16>, vector<2x512xf32> -> vector<2x512xf32>
    %c0_21 = arith.constant 0 : index
    %c0_22 = arith.constant 0 : index
    %30 = vector.load %arg8[%c0_21, %c0_22] : memref<1x512xf32, #tpu.memory_space<vmem>>, vector<1x512xf32>
    %31 = vector.broadcast %30 : vector<1x512xf32> to vector<2x512xf32>
    %32 = arith.addf %29, %31 : vector<2x512xf32>
    %cst_23 = arith.constant 0.000000e+00 : f32
    %33 = vector.broadcast %cst_23 : f32 to vector<2x512xf32>
    %34 = arith.maximumf %32, %33 : vector<2x512xf32>
    %35 = arith.truncf %34 : vector<2x512xf32> to vector<2x512xbf16>
    %c0_24 = arith.constant 0 : index
    %c0_25 = arith.constant 0 : index
    %36 = vector.load %arg9[%c0_24, %c0_25] : memref<512x784xbf16, #tpu.memory_space<vmem>>, vector<512x784xbf16>
    %cst_26 = arith.constant dense<0.000000e+00> : vector<2x784xf32>
    %37 = tpu.matmul %35, %36, %cst_26 {dimension_numbers = #tpu.dot_dimension_numbers<[1], [0], [0], [1], [0, 0, 1, 1], [], []>} : vector<2x512xbf16>, vector<512x784xbf16>, vector<2x784xf32> -> vector<2x784xf32>
    %c0_27 = arith.constant 0 : index
    %c0_28 = arith.constant 0 : index
    %38 = vector.load %arg10[%c0_27, %c0_28] : memref<1x784xf32, #tpu.memory_space<vmem>>, vector<1x784xf32>
    %39 = vector.broadcast %38 : vector<1x784xf32> to vector<2x784xf32>
    %40 = arith.addf %37, %39 : vector<2x784xf32>
    %41 = arith.negf %40 : vector<2x784xf32>
    %42 = math.exp %41 : vector<2x784xf32>
    %cst_29 = arith.constant 1.000000e+00 : f32
    %43 = vector.broadcast %cst_29 : f32 to vector<2x784xf32>
    %44 = arith.addf %43, %42 : vector<2x784xf32>
    %45 = arith.divf %43, %44 : vector<2x784xf32>
    %46 = arith.truncf %45 : vector<2x784xf32> to vector<2x784xbf16>
    %c0_30 = arith.constant 0 : index
    %c0_31 = arith.constant 0 : index
    %47 = vector.load %arg11[%c0_30, %c0_31] : memref<2x784xbf16, #tpu.memory_space<vmem>>, vector<2x784xbf16>
    tpu.vector_store %arg11[%c0_30, %c0_31], %46 {strides = array<i32>} : memref<2x784xbf16, #tpu.memory_space<vmem>>, vector<2x784xbf16>,
    return
  }
  func.func @transform_0(%arg0: i32) -> (i32, i32) {
    %c0_i32 = arith.constant 0 : i32
    %c0_i32_0 = arith.constant 0 : i32
    return %arg0, %c0_i32 : i32, i32
  }
  func.func @transform_1(%arg0: i32) -> (i32, i32) {
    %c0_i32 = arith.constant 0 : i32
    %c0_i32_0 = arith.constant 0 : i32
    return %arg0, %c0_i32 : i32, i32
  }
  func.func @transform_2(%arg0: i32) -> (i32, i32) {
    %c0_i32 = arith.constant 0 : i32
    %c0_i32_0 = arith.constant 0 : i32
    %c0_i32_1 = arith.constant 0 : i32
    return %c0_i32, %c0_i32_0 : i32, i32
  }
  func.func @transform_3(%arg0: i32) -> (i32, i32) {
    %c0_i32 = arith.constant 0 : i32
    %c0_i32_0 = arith.constant 0 : i32
    %c0_i32_1 = arith.constant 0 : i32
    return %c0_i32, %c0_i32_0 : i32, i32
  }
  func.func @transform_4(%arg0: i32) -> (i32, i32) {
    %c0_i32 = arith.constant 0 : i32
    %c0_i32_0 = arith.constant 0 : i32
    %c0_i32_1 = arith.constant 0 : i32
    return %c0_i32, %c0_i32_0 : i32, i32
  }
  func.func @transform_5(%arg0: i32) -> (i32, i32) {
    %c0_i32 = arith.constant 0 : i32
    %c0_i32_0 = arith.constant 0 : i32
    %c0_i32_1 = arith.constant 0 : i32
    return %c0_i32, %c0_i32_0 : i32, i32
  }
  func.func @transform_6(%arg0: i32) -> (i32, i32) {
    %c0_i32 = arith.constant 0 : i32
    %c0_i32_0 = arith.constant 0 : i32
    %c0_i32_1 = arith.constant 0 : i32
    return %c0_i32, %c0_i32_0 : i32, i32
  }
  func.func @transform_7(%arg0: i32) -> (i32, i32) {
    %c0_i32 = arith.constant 0 : i32
    %c0_i32_0 = arith.constant 0 : i32
    %c0_i32_1 = arith.constant 0 : i32
    return %c0_i32, %c0_i32_0 : i32, i32
  }
  func.func @transform_8(%arg0: i32) -> (i32, i32) {
    %c0_i32 = arith.constant 0 : i32
    %c0_i32_0 = arith.constant 0 : i32
    %c0_i32_1 = arith.constant 0 : i32
    return %c0_i32, %c0_i32_0 : i32, i32
  }
  func.func @transform_9(%arg0: i32) -> (i32, i32) {
    %c0_i32 = arith.constant 0 : i32
    %c0_i32_0 = arith.constant 0 : i32
    %c0_i32_1 = arith.constant 0 : i32
    return %c0_i32, %c0_i32_0 : i32, i32
  }
  func.func @transform_10(%arg0: i32) -> (i32, i32) {
    %c0_i32 = arith.constant 0 : i32
    %c0_i32_0 = arith.constant 0 : i32
    return %arg0, %c0_i32 : i32, i32
  }
  func.func @transform_11(%arg0: i32) -> (i32, i32) {
    %c0_i32 = arith.constant 0 : i32
    %c0_i32_0 = arith.constant 0 : i32
    return %arg0, %c0_i32 : i32, i32
  }
  func.func @transform_12(%arg0: i32) -> (i32, i32) {
    %c0_i32 = arith.constant 0 : i32
    %c0_i32_0 = arith.constant 0 : i32
    return %arg0, %c0_i32 : i32, i32
  }
}

</mosaic_0001>

<llo_original>
// kernel: tpu_custom_call.1
$region0: #{tpu_custom_call.1}
  #allocation0 [shape = 'u32[]', space=smem, size = 0x4, offset = 0x4, fixed_abs, tag = 'smem constant byte address 0x4 - core index']
  #allocation1 [shape = 'u32[144,128]{1,0:T(1,128)}', space=vmem, size = 0x12000, scoped, tag = 'internal scratch']
  %s0 = inlined_call_operand.vmem [shape: f32[2,784], index: 0, kind: input, shape index: {}]
  %s1 = inlined_call_operand.vmem [shape: f32[2,128], index: 1, kind: input, shape index: {}]
  %s2 = inlined_call_operand.vmem [shape: bf16[784,512], index: 2, kind: input, shape index: {}]
  %s3 = inlined_call_operand.vmem [shape: f32[1,512], index: 3, kind: input, shape index: {}]
  %s4 = inlined_call_operand.vmem [shape: bf16[512,256], index: 4, kind: input, shape index: {}]
  %s5 = inlined_call_operand.vmem [shape: f32[1,256], index: 5, kind: input, shape index: {}]
  %s6 = inlined_call_operand.vmem [shape: bf16[128,512], index: 6, kind: input, shape index: {}]
  %s7 = inlined_call_operand.vmem [shape: f32[1,512], index: 7, kind: input, shape index: {}]
  %s8 = inlined_call_operand.vmem [shape: bf16[512,784], index: 8, kind: input, shape index: {}]
  %s9 = inlined_call_operand.vmem [shape: f32[1,784], index: 9, kind: input, shape index: {}]
  %s10 = inlined_call_operand.hbm [shape: bf16[2,784], index: 10, kind: output, shape index: {0}]
  %s11 = inlined_call_operand.hbm [shape: f32[2,20], index: 11, kind: output, shape index: {1}]
  %s12 = inlined_call_operand.hbm [shape: f32[2,20], index: 12, kind: output, shape index: {2}]
  %13 = xla_tuple %s10, %s11, %s12
  %s14 = sld [smem:[#allocation0]]
  $region66: #{tpu_custom_call.1} parent=0
    _
  %s16 = ssub.s32 1, %s14
  %s17 = scalar_select 0, %s16, %s14
  $region1: #{tpu_custom_call.1} parent=0
    #allocation2 [shape = 'u8[3584]{0}', space=vmem, size = 0x1000, scoped, tag = 'output window, operand 0, single buffered']
    #allocation3 [shape = 's32[1]{0}', space=sflag, size = 0x4, scoped, tag = 'scoped memory for tpu_custom_call.1']
    #allocation4 [shape = 'u8[1024]{0}', space=vmem, size = 0x400, scoped, tag = 'output window, operand 1, single buffered']
    #allocation5 [shape = 's32[1]{0}', space=sflag, size = 0x4, scoped, tag = 'scoped memory for tpu_custom_call.1']
    #allocation6 [shape = 'u8[1024]{0}', space=vmem, size = 0x400, scoped, tag = 'output window, operand 2, single buffered']
    %18 = vsyncpa [#allocation3], 0
    %19 = vsyncpa [#allocation5], 0
    // Predicated region
    $region2: #{tpu_custom_call.1} parent=1 // pred_check
      _
    $region3: #{tpu_custom_call.1} parent=1 // pred_check_branch
      %21 = sbr.rel (0) target = $region5
    $region4: #{tpu_custom_call.1} parent=1 // pred_region
      _
    $region5: #{tpu_custom_call.1} parent=1 // pred_fallthru
      _
    // Predicated region
    $region6: #{tpu_custom_call.1} parent=1 // pred_check
      _
    $region7: #{tpu_custom_call.1} parent=1 // pred_check_branch
      %23 = sbr.rel (0) target = $region9
    $region8: #{tpu_custom_call.1} parent=1 // pred_region
      _
    $region9: #{tpu_custom_call.1} parent=1 // pred_fallthru
      _
    // Predicated region
    $region10: #{tpu_custom_call.1} parent=1 // pred_check
      _
    $region11: #{tpu_custom_call.1} parent=1 // pred_check_branch
      %25 = sbr.rel (0) target = $region13
    $region12: #{tpu_custom_call.1} parent=1 // pred_region
      _
    $region13: #{tpu_custom_call.1} parent=1 // pred_fallthru
      _
    // Predicated region
    $region14: #{tpu_custom_call.1} parent=1 // pred_check
      _
    $region15: #{tpu_custom_call.1} parent=1 // pred_check_branch
      %27 = sbr.rel (0) target = $region17
    $region16: #{tpu_custom_call.1} parent=1 // pred_region
      _
    $region17: #{tpu_custom_call.1} parent=1 // pred_fallthru
      _
    // Predicated region
    $region18: #{tpu_custom_call.1} parent=1 // pred_check
      _
    $region19: #{tpu_custom_call.1} parent=1 // pred_check_branch
      %29 = sbr.rel (0) target = $region21
    $region20: #{tpu_custom_call.1} parent=1 // pred_region
      _
    $region21: #{tpu_custom_call.1} parent=1 // pred_fallthru
      _
    // Predicated region
    $region22: #{tpu_custom_call.1} parent=1 // pred_check
      _
    $region23: #{tpu_custom_call.1} parent=1 // pred_check_branch
      %31 = sbr.rel (0) target = $region25
    $region24: #{tpu_custom_call.1} parent=1 // pred_region
      _
    $region25: #{tpu_custom_call.1} parent=1 // pred_fallthru
      _
    // Predicated region
    $region26: #{tpu_custom_call.1} parent=1 // pred_check
      _
    $region27: #{tpu_custom_call.1} parent=1 // pred_check_branch
      %33 = sbr.rel (0) target = $region29
    $region28: #{tpu_custom_call.1} parent=1 // pred_region
      _
    $region29: #{tpu_custom_call.1} parent=1 // pred_fallthru
      _
    // Predicated region
    $region30: #{tpu_custom_call.1} parent=1 // pred_check
      _
    $region31: #{tpu_custom_call.1} parent=1 // pred_check_branch
      %35 = sbr.rel (0) target = $region33
    $region32: #{tpu_custom_call.1} parent=1 // pred_region
      _
    $region33: #{tpu_custom_call.1} parent=1 // pred_fallthru
      _
    // Predicated region
    $region34: #{tpu_custom_call.1} parent=1 // pred_check
      _
    $region35: #{tpu_custom_call.1} parent=1 // pred_check_branch
      %37 = sbr.rel (0) target = $region37
    $region36: #{tpu_custom_call.1} parent=1 // pred_region
      _
    $region37: #{tpu_custom_call.1} parent=1 // pred_fallthru
      _
    // Predicated region
    $region38: #{tpu_custom_call.1} parent=1 // pred_check
      _
    $region39: #{tpu_custom_call.1} parent=1 // pred_check_branch
      %39 = sbr.rel (0) target = $region41
    $region40: #{tpu_custom_call.1} parent=1 // pred_region
      _
    $region41: #{tpu_custom_call.1} parent=1 // pred_fallthru
      _
    %v41 = vld [vmem:[%s0] sm:$0xff]
    %v42 = vld [vmem:[%s0 + $0x8] sm:$0x3f]
    %v45 = vcombine.high %v41, %v41
    %v47 = vunpack.c.l.s4 1983009808
    %v48 = vunpack.c.0.s8 %v47
    %v49 = vlaneseq
    %v50 = vshrl.u32 %v49, 7
    %v51 = vsub.s32 %v48, %v50
    %v52 = vrot.slane %v41, %v51
    %v54 = vunpack.c.l.s4 1983009808
    %v55 = vunpack.c.0.s8 %v54
    %v56 = vlaneseq
    %v57 = vshrl.u32 %v56, 7
    %v58 = vsub.s32 %v55, %v57
    %v59 = vrot.slane %v45, %v58
    %v60 = vcombine.high %v52, %v52
    %v61 = vcombine.high %v59, %v59
    %v62 = vcombine.high %v42, %v42
    %v64 = vunpack.c.l.s4 1983009808
    %v65 = vunpack.c.0.s8 %v64
    %v66 = vlaneseq
    %v67 = vshrl.u32 %v66, 7
    %v68 = vsub.s32 %v65, %v67
    %v69 = vrot.slane %v42, %v68
    %v71 = vunpack.c.l.s4 1983009808
    %v72 = vunpack.c.0.s8 %v71
    %v73 = vlaneseq
    %v74 = vshrl.u32 %v73, 7
    %v75 = vsub.s32 %v72, %v74
    %v76 = vrot.slane %v62, %v75
    %v77 = vcombine.high %v69, %v69
    %v85 = vpack.c.bf16 %v52, %v52
    %v86 = vpack.c.bf16 %v60, %v60
    %v87 = vpack.c.bf16 %v59, %v59
    %v88 = vpack.c.bf16 %v61, %v61
    %v89 = vpack.c.bf16 %v69, %v69
    %v90 = vpack.c.bf16 %v77, %v77
    %v91 = vpack.c.bf16 %v76, %v76
    %v92 = vld [vmem:[%s2] sm:$0xff]
    %v93 = vld [vmem:[%s2 + $0x8] sm:$0xff]
    %v94 = vld [vmem:[%s2 + $0x10] sm:$0xff]
    %v95 = vld [vmem:[%s2 + $0x18] sm:$0xff]
    %v96 = vld [vmem:[%s2 + $0x20] sm:$0xff]
    %v97 = vld [vmem:[%s2 + $0x28] sm:$0xff]
    %v98 = vld [vmem:[%s2 + $0x30] sm:$0xff]
    %v99 = vld [vmem:[%s2 + $0x38] sm:$0xff]
    %v100 = vld [vmem:[%s2 + $0x40] sm:$0xff]
    %v101 = vld [vmem:[%s2 + $0x48] sm:$0xff]
    %v102 = vld [vmem:[%s2 + $0x50] sm:$0xff]
    %v103 = vld [vmem:[%s2 + $0x58] sm:$0xff]
    %v104 = vld [vmem:[%s2 + $0x60] sm:$0xff]
    %v105 = vld [vmem:[%s2 + $0x68] sm:$0xff]
    %v106 = vld [vmem:[%s2 + $0x70] sm:$0xff]
    %v107 = vld [vmem:[%s2 + $0x78] sm:$0xff]
    %v108 = vld [vmem:[%s2 + $0x80] sm:$0xff]
    %v109 = vld [vmem:[%s2 + $0x88] sm:$0xff]
    %v110 = vld [vmem:[%s2 + $0x90] sm:$0xff]
    %v111 = vld [vmem:[%s2 + $0x98] sm:$0xff]
    %v112 = vld [vmem:[%s2 + $0xa0] sm:$0xff]
    %v113 = vld [vmem:[%s2 + $0xa8] sm:$0xff]
    %v114 = vld [vmem:[%s2 + $0xb0] sm:$0xff]
    %v115 = vld [vmem:[%s2 + $0xb8] sm:$0xff]
    %v116 = vld [vmem:[%s2 + $0xc0] sm:$0xff]
    %v117 = vld [vmem:[%s2 + $0xc8] sm:$0xff]
    %v118 = vld [vmem:[%s2 + $0xd0] sm:$0xff]
    %v119 = vld [vmem:[%s2 + $0xd8] sm:$0xff]
    %v120 = vld [vmem:[%s2 + $0xe0] sm:$0xff]
    %v121 = vld [vmem:[%s2 + $0xe8] sm:$0xff]
    %v122 = vld [vmem:[%s2 + $0xf0] sm:$0xff]
    %v123 = vld [vmem:[%s2 + $0xf8] sm:$0xff]
    %v124 = vld [vmem:[%s2 + $0x100] sm:$0xff]
    %v125 = vld [vmem:[%s2 + $0x108] sm:$0xff]
    %v126 = vld [vmem:[%s2 + $0x110] sm:$0xff]
    %v127 = vld [vmem:[%s2 + $0x118] sm:$0xff]
    %v128 = vld [vmem:[%s2 + $0x120] sm:$0xff]
    %v129 = vld [vmem:[%s2 + $0x128] sm:$0xff]
    %v130 = vld [vmem:[%s2 + $0x130] sm:$0xff]
    %v131 = vld [vmem:[%s2 + $0x138] sm:$0xff]
    %v132 = vld [vmem:[%s2 + $0x140] sm:$0xff]
    %v133 = vld [vmem:[%s2 + $0x148] sm:$0xff]
    %v134 = vld [vmem:[%s2 + $0x150] sm:$0xff]
    %v135 = vld [vmem:[%s2 + $0x158] sm:$0xff]
    %v136 = vld [vmem:[%s2 + $0x160] sm:$0xff]
    %v137 = vld [vmem:[%s2 + $0x168] sm:$0xff]
    %v138 = vld [vmem:[%s2 + $0x170] sm:$0xff]
    %v139 = vld [vmem:[%s2 + $0x178] sm:$0xff]
    %v140 = vld [vmem:[%s2 + $0x180] sm:$0xff]
    %v141 = vld [vmem:[%s2 + $0x188] sm:$0xff]
    %v142 = vld [vmem:[%s2 + $0x190] sm:$0xff]
    %v143 = vld [vmem:[%s2 + $0x198] sm:$0xff]
    %v144 = vld [vmem:[%s2 + $0x1a0] sm:$0xff]
    %v145 = vld [vmem:[%s2 + $0x1a8] sm:$0xff]
    %v146 = vld [vmem:[%s2 + $0x1b0] sm:$0xff]
    %v147 = vld [vmem:[%s2 + $0x1b8] sm:$0xff]
    %v148 = vld [vmem:[%s2 + $0x1c0] sm:$0xff]
    %v149 = vld [vmem:[%s2 + $0x1c8] sm:$0xff]
    %v150 = vld [vmem:[%s2 + $0x1d0] sm:$0xff]
    %v151 = vld [vmem:[%s2 + $0x1d8] sm:$0xff]
    %v152 = vld [vmem:[%s2 + $0x1e0] sm:$0xff]
    %v153 = vld [vmem:[%s2 + $0x1e8] sm:$0xff]
    %v154 = vld [vmem:[%s2 + $0x1f0] sm:$0xff]
    %v155 = vld [vmem:[%s2 + $0x1f8] sm:$0xff]
    %v156 = vld [vmem:[%s2 + $0x200] sm:$0xff]
    %v157 = vld [vmem:[%s2 + $0x208] sm:$0xff]
    %v158 = vld [vmem:[%s2 + $0x210] sm:$0xff]
    %v159 = vld [vmem:[%s2 + $0x218] sm:$0xff]
    %v160 = vld [vmem:[%s2 + $0x220] sm:$0xff]
    %v161 = vld [vmem:[%s2 + $0x228] sm:$0xff]
    %v162 = vld [vmem:[%s2 + $0x230] sm:$0xff]
    %v163 = vld [vmem:[%s2 + $0x238] sm:$0xff]
    %v164 = vld [vmem:[%s2 + $0x240] sm:$0xff]
    %v165 = vld [vmem:[%s2 + $0x248] sm:$0xff]
    %v166 = vld [vmem:[%s2 + $0x250] sm:$0xff]
    %v167 = vld [vmem:[%s2 + $0x258] sm:$0xff]
    %v168 = vld [vmem:[%s2 + $0x260] sm:$0xff]
    %v169 = vld [vmem:[%s2 + $0x268] sm:$0xff]
    %v170 = vld [vmem:[%s2 + $0x270] sm:$0xff]
    %v171 = vld [vmem:[%s2 + $0x278] sm:$0xff]
    %v172 = vld [vmem:[%s2 + $0x280] sm:$0xff]
    %v173 = vld [vmem:[%s2 + $0x288] sm:$0xff]
    %v174 = vld [vmem:[%s2 + $0x290] sm:$0xff]
    %v175 = vld [vmem:[%s2 + $0x298] sm:$0xff]
    %v176 = vld [vmem:[%s2 + $0x2a0] sm:$0xff]
    %v177 = vld [vmem:[%s2 + $0x2a8] sm:$0xff]
    %v178 = vld [vmem:[%s2 + $0x2b0] sm:$0xff]
    %v179 = vld [vmem:[%s2 + $0x2b8] sm:$0xff]
    %v180 = vld [vmem:[%s2 + $0x2c0] sm:$0xff]
    %v181 = vld [vmem:[%s2 + $0x2c8] sm:$0xff]
    %v182 = vld [vmem:[%s2 + $0x2d0] sm:$0xff]
    %v183 = vld [vmem:[%s2 + $0x2d8] sm:$0xff]
    %v184 = vld [vmem:[%s2 + $0x2e0] sm:$0xff]
    %v185 = vld [vmem:[%s2 + $0x2e8] sm:$0xff]
    %v186 = vld [vmem:[%s2 + $0x2f0] sm:$0xff]
    %v187 = vld [vmem:[%s2 + $0x2f8] sm:$0xff]
    %v188 = vld [vmem:[%s2 + $0x300] sm:$0xff]
    %v189 = vld [vmem:[%s2 + $0x308] sm:$0xff]
    %v190 = vld [vmem:[%s2 + $0x310] sm:$0xff]
    %v191 = vld [vmem:[%s2 + $0x318] sm:$0xff]
    %v192 = vld [vmem:[%s2 + $0x320] sm:$0xff]
    %v193 = vld [vmem:[%s2 + $0x328] sm:$0xff]
    %v194 = vld [vmem:[%s2 + $0x330] sm:$0xff]
    %v195 = vld [vmem:[%s2 + $0x338] sm:$0xff]
    %v196 = vld [vmem:[%s2 + $0x340] sm:$0xff]
    %v197 = vld [vmem:[%s2 + $0x348] sm:$0xff]
    %v198 = vld [vmem:[%s2 + $0x350] sm:$0xff]
    %v199 = vld [vmem:[%s2 + $0x358] sm:$0xff]
    %v200 = vld [vmem:[%s2 + $0x360] sm:$0xff]
    %v201 = vld [vmem:[%s2 + $0x368] sm:$0xff]
    %v202 = vld [vmem:[%s2 + $0x370] sm:$0xff]
    %v203 = vld [vmem:[%s2 + $0x378] sm:$0xff]
    %v204 = vld [vmem:[%s2 + $0x380] sm:$0xff]
    %v205 = vld [vmem:[%s2 + $0x388] sm:$0xff]
    %v206 = vld [vmem:[%s2 + $0x390] sm:$0xff]
    %v207 = vld [vmem:[%s2 + $0x398] sm:$0xff]
    %v208 = vld [vmem:[%s2 + $0x3a0] sm:$0xff]
    %v209 = vld [vmem:[%s2 + $0x3a8] sm:$0xff]
    %v210 = vld [vmem:[%s2 + $0x3b0] sm:$0xff]
    %v211 = vld [vmem:[%s2 + $0x3b8] sm:$0xff]
    %v212 = vld [vmem:[%s2 + $0x3c0] sm:$0xff]
    %v213 = vld [vmem:[%s2 + $0x3c8] sm:$0xff]
    %v214 = vld [vmem:[%s2 + $0x3d0] sm:$0xff]
    %v215 = vld [vmem:[%s2 + $0x3d8] sm:$0xff]
    %v216 = vld [vmem:[%s2 + $0x3e0] sm:$0xff]
    %v217 = vld [vmem:[%s2 + $0x3e8] sm:$0xff]
    %v218 = vld [vmem:[%s2 + $0x3f0] sm:$0xff]
    %v219 = vld [vmem:[%s2 + $0x3f8] sm:$0xff]
    %v220 = vld [vmem:[%s2 + $0x400] sm:$0xff]
    %v221 = vld [vmem:[%s2 + $0x408] sm:$0xff]
    %v222 = vld [vmem:[%s2 + $0x410] sm:$0xff]
    %v223 = vld [vmem:[%s2 + $0x418] sm:$0xff]
    %v224 = vld [vmem:[%s2 + $0x420] sm:$0xff]
    %v225 = vld [vmem:[%s2 + $0x428] sm:$0xff]
    %v226 = vld [vmem:[%s2 + $0x430] sm:$0xff]
    %v227 = vld [vmem:[%s2 + $0x438] sm:$0xff]
    %v228 = vld [vmem:[%s2 + $0x440] sm:$0xff]
    %v229 = vld [vmem:[%s2 + $0x448] sm:$0xff]
    %v230 = vld [vmem:[%s2 + $0x450] sm:$0xff]
    %v231 = vld [vmem:[%s2 + $0x458] sm:$0xff]
    %v232 = vld [vmem:[%s2 + $0x460] sm:$0xff]
    %v233 = vld [vmem:[%s2 + $0x468] sm:$0xff]
    %v234 = vld [vmem:[%s2 + $0x470] sm:$0xff]
    %v235 = vld [vmem:[%s2 + $0x478] sm:$0xff]
    %v236 = vld [vmem:[%s2 + $0x480] sm:$0xff]
    %v237 = vld [vmem:[%s2 + $0x488] sm:$0xff]
    %v238 = vld [vmem:[%s2 + $0x490] sm:$0xff]
    %v239 = vld [vmem:[%s2 + $0x498] sm:$0xff]
    %v240 = vld [vmem:[%s2 + $0x4a0] sm:$0xff]
    %v241 = vld [vmem:[%s2 + $0x4a8] sm:$0xff]
    %v242 = vld [vmem:[%s2 + $0x4b0] sm:$0xff]
    %v243 = vld [vmem:[%s2 + $0x4b8] sm:$0xff]
    %v244 = vld [vmem:[%s2 + $0x4c0] sm:$0xff]
    %v245 = vld [vmem:[%s2 + $0x4c8] sm:$0xff]
    %v246 = vld [vmem:[%s2 + $0x4d0] sm:$0xff]
    %v247 = vld [vmem:[%s2 + $0x4d8] sm:$0xff]
    %v248 = vld [vmem:[%s2 + $0x4e0] sm:$0xff]
    %v249 = vld [vmem:[%s2 + $0x4e8] sm:$0xff]
    %v250 = vld [vmem:[%s2 + $0x4f0] sm:$0xff]
    %v251 = vld [vmem:[%s2 + $0x4f8] sm:$0xff]
    %v252 = vld [vmem:[%s2 + $0x500] sm:$0xff]
    %v253 = vld [vmem:[%s2 + $0x508] sm:$0xff]
    %v254 = vld [vmem:[%s2 + $0x510] sm:$0xff]
    %v255 = vld [vmem:[%s2 + $0x518] sm:$0xff]
    %v256 = vld [vmem:[%s2 + $0x520] sm:$0xff]
    %v257 = vld [vmem:[%s2 + $0x528] sm:$0xff]
    %v258 = vld [vmem:[%s2 + $0x530] sm:$0xff]
    %v259 = vld [vmem:[%s2 + $0x538] sm:$0xff]
    %v260 = vld [vmem:[%s2 + $0x540] sm:$0xff]
    %v261 = vld [vmem:[%s2 + $0x548] sm:$0xff]
    %v262 = vld [vmem:[%s2 + $0x550] sm:$0xff]
    %v263 = vld [vmem:[%s2 + $0x558] sm:$0xff]
    %v264 = vld [vmem:[%s2 + $0x560] sm:$0xff]
    %v265 = vld [vmem:[%s2 + $0x568] sm:$0xff]
    %v266 = vld [vmem:[%s2 + $0x570] sm:$0xff]
    %v267 = vld [vmem:[%s2 + $0x578] sm:$0xff]
    %v268 = vld [vmem:[%s2 + $0x580] sm:$0xff]
    %v269 = vld [vmem:[%s2 + $0x588] sm:$0xff]
    %v270 = vld [vmem:[%s2 + $0x590] sm:$0xff]
    %v271 = vld [vmem:[%s2 + $0x598] sm:$0xff]
    %v272 = vld [vmem:[%s2 + $0x5a0] sm:$0xff]
    %v273 = vld [vmem:[%s2 + $0x5a8] sm:$0xff]
    %v274 = vld [vmem:[%s2 + $0x5b0] sm:$0xff]
    %v275 = vld [vmem:[%s2 + $0x5b8] sm:$0xff]
    %v276 = vld [vmem:[%s2 + $0x5c0] sm:$0xff]
    %v277 = vld [vmem:[%s2 + $0x5c8] sm:$0xff]
    %v278 = vld [vmem:[%s2 + $0x5d0] sm:$0xff]
    %v279 = vld [vmem:[%s2 + $0x5d8] sm:$0xff]
    %v280 = vld [vmem:[%s2 + $0x5e0] sm:$0xff]
    %v281 = vld [vmem:[%s2 + $0x5e8] sm:$0xff]
    %v282 = vld [vmem:[%s2 + $0x5f0] sm:$0xff]
    %v283 = vld [vmem:[%s2 + $0x5f8] sm:$0xff]
    %v284 = vld [vmem:[%s2 + $0x600] sm:$0xff]
    %v285 = vld [vmem:[%s2 + $0x608] sm:$0xff]
    %v286 = vld [vmem:[%s2 + $0x610] sm:$0xff]
    %v287 = vld [vmem:[%s2 + $0x618] sm:$0xff]
    %v288 = vld [vmem:[%s3] sm:$0xf]
    %v290 = vlaneseq
    %v291 = vshrl.u32 %v290, 7
    %v292 = vsub.s32 0, %v291
    %v293 = vrot.slane %v288, %v292
    %v294 = vlaneseq
    %v295 = vshrl.u32 %v294, 7
    %v296 = vsub.s32 1, %v295
    %v297 = vrot.slane %v288, %v296
    %v298 = vlaneseq
    %v299 = vshrl.u32 %v298, 7
    %v300 = vsub.s32 2, %v299
    %v301 = vrot.slane %v288, %v300
    %v302 = vlaneseq
    %v303 = vshrl.u32 %v302, 7
    %v304 = vsub.s32 3, %v303
    %v305 = vrot.slane %v288, %v304
    %v506 = vunpack.c.l.b16 %v92
    %v507 = vunpack.c.h.b16 %v92
    %v508 = vunpack.c.l.b16 %v93
    %v509 = vunpack.c.h.b16 %v93
    %v510 = vunpack.c.l.b16 %v94
    %v511 = vunpack.c.h.b16 %v94
    %v512 = vunpack.c.l.b16 %v95
    %v513 = vunpack.c.h.b16 %v95
    %v514 = vunpack.c.l.b16 %v96
    %v515 = vunpack.c.h.b16 %v96
    %v516 = vunpack.c.l.b16 %v97
    %v517 = vunpack.c.h.b16 %v97
    %v518 = vunpack.c.l.b16 %v98
    %v519 = vunpack.c.h.b16 %v98
    %v520 = vunpack.c.l.b16 %v99
    %v521 = vunpack.c.h.b16 %v99
    %v522 = vunpack.c.l.b16 %v100
    %v523 = vunpack.c.h.b16 %v100
    %v524 = vunpack.c.l.b16 %v101
    %v525 = vunpack.c.h.b16 %v101
    %v526 = vunpack.c.l.b16 %v102
    %v527 = vunpack.c.h.b16 %v102
    %v528 = vunpack.c.l.b16 %v103
    %v529 = vunpack.c.h.b16 %v103
    %v530 = vunpack.c.l.b16 %v104
    %v531 = vunpack.c.h.b16 %v104
    %v532 = vunpack.c.l.b16 %v105
    %v533 = vunpack.c.h.b16 %v105
    %v534 = vunpack.c.l.b16 %v106
    %v535 = vunpack.c.h.b16 %v106
    %v536 = vunpack.c.l.b16 %v107
    %v537 = vunpack.c.h.b16 %v107
    %v538 = vunpack.c.l.b16 %v108
    %v539 = vunpack.c.h.b16 %v108
    %v540 = vunpack.c.l.b16 %v109
    %v541 = vunpack.c.h.b16 %v109
    %v542 = vunpack.c.l.b16 %v110
    %v543 = vunpack.c.h.b16 %v110
    %v544 = vunpack.c.l.b16 %v111
    %v545 = vunpack.c.h.b16 %v111
    %v546 = vunpack.c.l.b16 %v112
    %v547 = vunpack.c.h.b16 %v112
    %v548 = vunpack.c.l.b16 %v113
    %v549 = vunpack.c.h.b16 %v113
    %v550 = vunpack.c.l.b16 %v114
    %v551 = vunpack.c.h.b16 %v114
    %v552 = vunpack.c.l.b16 %v115
    %v553 = vunpack.c.h.b16 %v115
    %v554 = vunpack.c.l.b16 %v116
    %v555 = vunpack.c.h.b16 %v116
    %v556 = vunpack.c.l.b16 %v117
    %v557 = vunpack.c.h.b16 %v117
    %v558 = vunpack.c.l.b16 %v118
    %v559 = vunpack.c.h.b16 %v118
    %v560 = vunpack.c.l.b16 %v119
    %v561 = vunpack.c.h.b16 %v119
    %v562 = vunpack.c.l.b16 %v120
    %v563 = vunpack.c.h.b16 %v120
    %v564 = vunpack.c.l.b16 %v121
    %v565 = vunpack.c.h.b16 %v121
    %v566 = vunpack.c.l.b16 %v122
    %v567 = vunpack.c.h.b16 %v122
    %v568 = vunpack.c.l.b16 %v123
    %v569 = vunpack.c.h.b16 %v123
    %v570 = vunpack.c.l.b16 %v124
    %v571 = vunpack.c.h.b16 %v124
    %v572 = vunpack.c.l.b16 %v125
    %v573 = vunpack.c.h.b16 %v125
    %v574 = vunpack.c.l.b16 %v126
    %v575 = vunpack.c.h.b16 %v126
    %v576 = vunpack.c.l.b16 %v127
    %v577 = vunpack.c.h.b16 %v127
    %v578 = vunpack.c.l.b16 %v128
    %v579 = vunpack.c.h.b16 %v128
    %v580 = vunpack.c.l.b16 %v129
    %v581 = vunpack.c.h.b16 %v129
    %v582 = vunpack.c.l.b16 %v130
    %v583 = vunpack.c.h.b16 %v130
    %v584 = vunpack.c.l.b16 %v131
    %v585 = vunpack.c.h.b16 %v131
    %v586 = vunpack.c.l.b16 %v132
    %v587 = vunpack.c.h.b16 %v132
    %v588 = vunpack.c.l.b16 %v133
    %v589 = vunpack.c.h.b16 %v133
    %v590 = vunpack.c.l.b16 %v134
    %v591 = vunpack.c.h.b16 %v134
    %v592 = vunpack.c.l.b16 %v135
    %v593 = vunpack.c.h.b16 %v135
    %v594 = vunpack.c.l.b16 %v136
    %v595 = vunpack.c.h.b16 %v136
    %v596 = vunpack.c.l.b16 %v137
    %v597 = vunpack.c.h.b16 %v137
    %v598 = vunpack.c.l.b16 %v138
    %v599 = vunpack.c.h.b16 %v138
    %v600 = vunpack.c.l.b16 %v139
    %v601 = vunpack.c.h.b16 %v139
    %v602 = vunpack.c.l.b16 %v140
    %v603 = vunpack.c.h.b16 %v140
    %v604 = vunpack.c.l.b16 %v141
    %v605 = vunpack.c.h.b16 %v141
    %v606 = vunpack.c.l.b16 %v142
    %v607 = vunpack.c.h.b16 %v142
    %v608 = vunpack.c.l.b16 %v143
    %v609 = vunpack.c.h.b16 %v143
    %v610 = vunpack.c.l.b16 %v144
    %v611 = vunpack.c.h.b16 %v144
    %v612 = vunpack.c.l.b16 %v145
    %v613 = vunpack.c.h.b16 %v145
    %v614 = vunpack.c.l.b16 %v146
    %v615 = vunpack.c.h.b16 %v146
    %v616 = vunpack.c.l.b16 %v147
    %v617 = vunpack.c.h.b16 %v147
    %v618 = vunpack.c.l.b16 %v148
    %v619 = vunpack.c.h.b16 %v148
    %v620 = vunpack.c.l.b16 %v149
    %v621 = vunpack.c.h.b16 %v149
    %v622 = vunpack.c.l.b16 %v150
    %v623 = vunpack.c.h.b16 %v150
    %v624 = vunpack.c.l.b16 %v151
    %v625 = vunpack.c.h.b16 %v151
    %v626 = vunpack.c.l.b16 %v152
    %v627 = vunpack.c.h.b16 %v152
    %v628 = vunpack.c.l.b16 %v153
    %v629 = vunpack.c.h.b16 %v153
    %v630 = vunpack.c.l.b16 %v154
    %v631 = vunpack.c.h.b16 %v154
    %v632 = vunpack.c.l.b16 %v155
    %v633 = vunpack.c.h.b16 %v155
    %v634 = vunpack.c.l.b16 %v156
    %v635 = vunpack.c.h.b16 %v156
    %v636 = vunpack.c.l.b16 %v157
    %v637 = vunpack.c.h.b16 %v157
    %v638 = vunpack.c.l.b16 %v158
    %v639 = vunpack.c.h.b16 %v158
    %v640 = vunpack.c.l.b16 %v159
    %v641 = vunpack.c.h.b16 %v159
    %v642 = vunpack.c.l.b16 %v160
    %v643 = vunpack.c.h.b16 %v160
    %v644 = vunpack.c.l.b16 %v161
    %v645 = vunpack.c.h.b16 %v161
    %v646 = vunpack.c.l.b16 %v162
    %v647 = vunpack.c.h.b16 %v162
    %v648 = vunpack.c.l.b16 %v163
    %v649 = vunpack.c.h.b16 %v163
    %v650 = vunpack.c.l.b16 %v164
    %v651 = vunpack.c.h.b16 %v164
    %v652 = vunpack.c.l.b16 %v165
    %v653 = vunpack.c.h.b16 %v165
    %v654 = vunpack.c.l.b16 %v166
    %v655 = vunpack.c.h.b16 %v166
    %v656 = vunpack.c.l.b16 %v167
    %v657 = vunpack.c.h.b16 %v167
    %v658 = vunpack.c.l.b16 %v168
    %v659 = vunpack.c.h.b16 %v168
    %v660 = vunpack.c.l.b16 %v169
    %v661 = vunpack.c.h.b16 %v169
    %v662 = vunpack.c.l.b16 %v170
    %v663 = vunpack.c.h.b16 %v170
    %v664 = vunpack.c.l.b16 %v171
    %v665 = vunpack.c.h.b16 %v171
    %v666 = vunpack.c.l.b16 %v172
    %v667 = vunpack.c.h.b16 %v172
    %v668 = vunpack.c.l.b16 %v173
    %v669 = vunpack.c.h.b16 %v173
    %v670 = vunpack.c.l.b16 %v174
    %v671 = vunpack.c.h.b16 %v174
    %v672 = vunpack.c.l.b16 %v175
    %v673 = vunpack.c.h.b16 %v175
    %v674 = vunpack.c.l.b16 %v176
    %v675 = vunpack.c.h.b16 %v176
    %v676 = vunpack.c.l.b16 %v177
    %v677 = vunpack.c.h.b16 %v177
    %v678 = vunpack.c.l.b16 %v178
    %v679 = vunpack.c.h.b16 %v178
    %v680 = vunpack.c.l.b16 %v179
    %v681 = vunpack.c.h.b16 %v179
    %v682 = vunpack.c.l.b16 %v180
    %v683 = vunpack.c.h.b16 %v180
    %v684 = vunpack.c.l.b16 %v181
    %v685 = vunpack.c.h.b16 %v181
    %v686 = vunpack.c.l.b16 %v182
    %v687 = vunpack.c.h.b16 %v182
    %v688 = vunpack.c.l.b16 %v183
    %v689 = vunpack.c.h.b16 %v183
    %v690 = vunpack.c.l.b16 %v184
    %v691 = vunpack.c.h.b16 %v184
    %v692 = vunpack.c.l.b16 %v185
    %v693 = vunpack.c.h.b16 %v185
    %v694 = vunpack.c.l.b16 %v186
    %v695 = vunpack.c.h.b16 %v186
    %v696 = vunpack.c.l.b16 %v187
    %v697 = vunpack.c.h.b16 %v187
    %v698 = vunpack.c.l.b16 %v188
    %v699 = vunpack.c.h.b16 %v188
    %v700 = vunpack.c.l.b16 %v189
    %v701 = vunpack.c.h.b16 %v189
    %v702 = vunpack.c.l.b16 %v190
    %v703 = vunpack.c.h.b16 %v190
    %v704 = vunpack.c.l.b16 %v191
    %v705 = vunpack.c.h.b16 %v191
    %v706 = vunpack.c.l.b16 %v192
    %v707 = vunpack.c.h.b16 %v192
    %v708 = vunpack.c.l.b16 %v193
    %v709 = vunpack.c.h.b16 %v193
    %v710 = vunpack.c.l.b16 %v194
    %v711 = vunpack.c.h.b16 %v194
    %v712 = vunpack.c.l.b16 %v195
    %v713 = vunpack.c.h.b16 %v195
    %v714 = vunpack.c.l.b16 %v196
    %v715 = vunpack.c.h.b16 %v196
    %v716 = vunpack.c.l.b16 %v197
    %v717 = vunpack.c.h.b16 %v197
    %v718 = vunpack.c.l.b16 %v198
    %v719 = vunpack.c.h.b16 %v198
    %v720 = vunpack.c.l.b16 %v199
    %v721 = vunpack.c.h.b16 %v199
    %v722 = vunpack.c.l.b16 %v200
    %v723 = vunpack.c.h.b16 %v200
    %v724 = vunpack.c.l.b16 %v201
    %v725 = vunpack.c.h.b16 %v201
    %v726 = vunpack.c.l.b16 %v202
    %v727 = vunpack.c.h.b16 %v202
    %v728 = vunpack.c.l.b16 %v203
    %v729 = vunpack.c.h.b16 %v203
    %v730 = vunpack.c.l.b16 %v204
    %v731 = vunpack.c.h.b16 %v204
    %v732 = vunpack.c.l.b16 %v205
    %v733 = vunpack.c.h.b16 %v205
    %v734 = vunpack.c.l.b16 %v206
    %v735 = vunpack.c.h.b16 %v206
    %v736 = vunpack.c.l.b16 %v207
    %v737 = vunpack.c.h.b16 %v207
    %v738 = vunpack.c.l.b16 %v208
    %v739 = vunpack.c.h.b16 %v208
    %v740 = vunpack.c.l.b16 %v209
    %v741 = vunpack.c.h.b16 %v209
    %v742 = vunpack.c.l.b16 %v210
    %v743 = vunpack.c.h.b16 %v210
    %v744 = vunpack.c.l.b16 %v211
    %v745 = vunpack.c.h.b16 %v211
    %v746 = vunpack.c.l.b16 %v212
    %v747 = vunpack.c.h.b16 %v212
    %v748 = vunpack.c.l.b16 %v213
    %v749 = vunpack.c.h.b16 %v213
    %v750 = vunpack.c.l.b16 %v214
    %v751 = vunpack.c.h.b16 %v214
    %v752 = vunpack.c.l.b16 %v215
    %v753 = vunpack.c.h.b16 %v215
    %v754 = vunpack.c.l.b16 %v216
    %v755 = vunpack.c.h.b16 %v216
    %v756 = vunpack.c.l.b16 %v217
    %v757 = vunpack.c.h.b16 %v217
    %v758 = vunpack.c.l.b16 %v218
    %v759 = vunpack.c.h.b16 %v218
    %v760 = vunpack.c.l.b16 %v219
    %v761 = vunpack.c.h.b16 %v219
    %v762 = vunpack.c.l.b16 %v220
    %v763 = vunpack.c.h.b16 %v220
    %v764 = vunpack.c.l.b16 %v221
    %v765 = vunpack.c.h.b16 %v221
    %v766 = vunpack.c.l.b16 %v222
    %v767 = vunpack.c.h.b16 %v222
    %v768 = vunpack.c.l.b16 %v223
    %v769 = vunpack.c.h.b16 %v223
    %v770 = vunpack.c.l.b16 %v224
    %v771 = vunpack.c.h.b16 %v224
    %v772 = vunpack.c.l.b16 %v225
    %v773 = vunpack.c.h.b16 %v225
    %v774 = vunpack.c.l.b16 %v226
    %v775 = vunpack.c.h.b16 %v226
    %v776 = vunpack.c.l.b16 %v227
    %v777 = vunpack.c.h.b16 %v227
    %v778 = vunpack.c.l.b16 %v228
    %v779 = vunpack.c.h.b16 %v228
    %v780 = vunpack.c.l.b16 %v229
    %v781 = vunpack.c.h.b16 %v229
    %v782 = vunpack.c.l.b16 %v230
    %v783 = vunpack.c.h.b16 %v230
    %v784 = vunpack.c.l.b16 %v231
    %v785 = vunpack.c.h.b16 %v231
    %v786 = vunpack.c.l.b16 %v232
    %v787 = vunpack.c.h.b16 %v232
    %v788 = vunpack.c.l.b16 %v233
    %v789 = vunpack.c.h.b16 %v233
    %v790 = vunpack.c.l.b16 %v234
    %v791 = vunpack.c.h.b16 %v234
    %v792 = vunpack.c.l.b16 %v235
    %v793 = vunpack.c.h.b16 %v235
    %v794 = vunpack.c.l.b16 %v236
    %v795 = vunpack.c.h.b16 %v236
    %v796 = vunpack.c.l.b16 %v237
    %v797 = vunpack.c.h.b16 %v237
    %v798 = vunpack.c.l.b16 %v238
    %v799 = vunpack.c.h.b16 %v238
    %v800 = vunpack.c.l.b16 %v239
    %v801 = vunpack.c.h.b16 %v239
    %v802 = vunpack.c.l.b16 %v240
    %v803 = vunpack.c.h.b16 %v240
    %v804 = vunpack.c.l.b16 %v241
    %v805 = vunpack.c.h.b16 %v241
    %v806 = vunpack.c.l.b16 %v242
    %v807 = vunpack.c.h.b16 %v242
    %v808 = vunpack.c.l.b16 %v243
    %v809 = vunpack.c.h.b16 %v243
    %v810 = vunpack.c.l.b16 %v244
    %v811 = vunpack.c.h.b16 %v244
    %v812 = vunpack.c.l.b16 %v245
    %v813 = vunpack.c.h.b16 %v245
    %v814 = vunpack.c.l.b16 %v246
    %v815 = vunpack.c.h.b16 %v246
    %v816 = vunpack.c.l.b16 %v247
    %v817 = vunpack.c.h.b16 %v247
    %v818 = vunpack.c.l.b16 %v248
    %v819 = vunpack.c.h.b16 %v248
    %v820 = vunpack.c.l.b16 %v249
    %v821 = vunpack.c.h.b16 %v249
    %v822 = vunpack.c.l.b16 %v250
    %v823 = vunpack.c.h.b16 %v250
    %v824 = vunpack.c.l.b16 %v251
    %v825 = vunpack.c.h.b16 %v251
    %v826 = vunpack.c.l.b16 %v252
    %v827 = vunpack.c.h.b16 %v252
    %v828 = vunpack.c.l.b16 %v253
    %v829 = vunpack.c.h.b16 %v253
    %v830 = vunpack.c.l.b16 %v254
    %v831 = vunpack.c.h.b16 %v254
    %v832 = vunpack.c.l.b16 %v255
    %v833 = vunpack.c.h.b16 %v255
    %v834 = vunpack.c.l.b16 %v256
    %v835 = vunpack.c.h.b16 %v256
    %v836 = vunpack.c.l.b16 %v257
    %v837 = vunpack.c.h.b16 %v257
    %v838 = vunpack.c.l.b16 %v258
    %v839 = vunpack.c.h.b16 %v258
    %v840 = vunpack.c.l.b16 %v259
    %v841 = vunpack.c.h.b16 %v259
    %v842 = vunpack.c.l.b16 %v260
    %v843 = vunpack.c.h.b16 %v260
    %v844 = vunpack.c.l.b16 %v261
    %v845 = vunpack.c.h.b16 %v261
    %v846 = vunpack.c.l.b16 %v262
    %v847 = vunpack.c.h.b16 %v262
    %v848 = vunpack.c.l.b16 %v263
    %v849 = vunpack.c.h.b16 %v263
    %v850 = vunpack.c.l.b16 %v264
    %v851 = vunpack.c.h.b16 %v264
    %v852 = vunpack.c.l.b16 %v265
    %v853 = vunpack.c.h.b16 %v265
    %v854 = vunpack.c.l.b16 %v266
    %v855 = vunpack.c.h.b16 %v266
    %v856 = vunpack.c.l.b16 %v267
    %v857 = vunpack.c.h.b16 %v267
    %v858 = vunpack.c.l.b16 %v268
    %v859 = vunpack.c.h.b16 %v268
    %v860 = vunpack.c.l.b16 %v269
    %v861 = vunpack.c.h.b16 %v269
    %v862 = vunpack.c.l.b16 %v270
    %v863 = vunpack.c.h.b16 %v270
    %v864 = vunpack.c.l.b16 %v271
    %v865 = vunpack.c.h.b16 %v271
    %v866 = vunpack.c.l.b16 %v272
    %v867 = vunpack.c.h.b16 %v272
    %v868 = vunpack.c.l.b16 %v273
    %v869 = vunpack.c.h.b16 %v273
    %v870 = vunpack.c.l.b16 %v274
    %v871 = vunpack.c.h.b16 %v274
    %v872 = vunpack.c.l.b16 %v275
    %v873 = vunpack.c.h.b16 %v275
    %v874 = vunpack.c.l.b16 %v276
    %v875 = vunpack.c.h.b16 %v276
    %v876 = vunpack.c.l.b16 %v277
    %v877 = vunpack.c.h.b16 %v277
    %v878 = vunpack.c.l.b16 %v278
    %v879 = vunpack.c.h.b16 %v278
    %v880 = vunpack.c.l.b16 %v279
    %v881 = vunpack.c.h.b16 %v279
    %v882 = vunpack.c.l.b16 %v280
    %v883 = vunpack.c.h.b16 %v280
    %v884 = vunpack.c.l.b16 %v281
    %v885 = vunpack.c.h.b16 %v281
    %v886 = vunpack.c.l.b16 %v282
    %v887 = vunpack.c.h.b16 %v282
    %v888 = vunpack.c.l.b16 %v283
    %v889 = vunpack.c.h.b16 %v283
    %v890 = vunpack.c.l.b16 %v284
    %v891 = vunpack.c.h.b16 %v284
    %v892 = vunpack.c.l.b16 %v285
    %v893 = vunpack.c.h.b16 %v285
    %v894 = vunpack.c.l.b16 %v286
    %v895 = vunpack.c.h.b16 %v286
    %v896 = vunpack.c.l.b16 %v287
    %v897 = vunpack.c.h.b16 %v287
    %v898 = vpack.c.b16 %v510, %v506
    %v899 = vpack.c.b16 %v511, %v507
    %v900 = vpack.c.b16 %v512, %v508
    %v901 = vpack.c.b16 %v513, %v509
    %v902 = vpack.c.b16 %v518, %v514
    %v903 = vpack.c.b16 %v519, %v515
    %v904 = vpack.c.b16 %v520, %v516
    %v905 = vpack.c.b16 %v521, %v517
    %v906 = vpack.c.b16 %v526, %v522
    %v907 = vpack.c.b16 %v527, %v523
    %v908 = vpack.c.b16 %v528, %v524
    %v909 = vpack.c.b16 %v529, %v525
    %v910 = vpack.c.b16 %v534, %v530
    %v911 = vpack.c.b16 %v535, %v531
    %v912 = vpack.c.b16 %v536, %v532
    %v913 = vpack.c.b16 %v537, %v533
    %v914 = vpack.c.b16 %v542, %v538
    %v915 = vpack.c.b16 %v543, %v539
    %v916 = vpack.c.b16 %v544, %v540
    %v917 = vpack.c.b16 %v545, %v541
    %v918 = vpack.c.b16 %v550, %v546
    %v919 = vpack.c.b16 %v551, %v547
    %v920 = vpack.c.b16 %v552, %v548
    %v921 = vpack.c.b16 %v553, %v549
    %v922 = vpack.c.b16 %v558, %v554
    %v923 = vpack.c.b16 %v559, %v555
    %v924 = vpack.c.b16 %v560, %v556
    %v925 = vpack.c.b16 %v561, %v557
    %v926 = vpack.c.b16 %v566, %v562
    %v927 = vpack.c.b16 %v567, %v563
    %v928 = vpack.c.b16 %v568, %v564
    %v929 = vpack.c.b16 %v569, %v565
    %v930 = vpack.c.b16 %v574, %v570
    %v931 = vpack.c.b16 %v575, %v571
    %v932 = vpack.c.b16 %v576, %v572
    %v933 = vpack.c.b16 %v577, %v573
    %v934 = vpack.c.b16 %v582, %v578
    %v935 = vpack.c.b16 %v583, %v579
    %v936 = vpack.c.b16 %v584, %v580
    %v937 = vpack.c.b16 %v585, %v581
    %v938 = vpack.c.b16 %v590, %v586
    %v939 = vpack.c.b16 %v591, %v587
    %v940 = vpack.c.b16 %v592, %v588
    %v941 = vpack.c.b16 %v593, %v589
    %v942 = vpack.c.b16 %v598, %v594
    %v943 = vpack.c.b16 %v599, %v595
    %v944 = vpack.c.b16 %v600, %v596
    %v945 = vpack.c.b16 %v601, %v597
    %v946 = vpack.c.b16 %v606, %v602
    %v947 = vpack.c.b16 %v607, %v603
    %v948 = vpack.c.b16 %v608, %v604
    %v949 = vpack.c.b16 %v609, %v605
    %v950 = vpack.c.b16 %v614, %v610
    %v951 = vpack.c.b16 %v615, %v611
    %v952 = vpack.c.b16 %v616, %v612
    %v953 = vpack.c.b16 %v617, %v613
    %v954 = vpack.c.b16 %v622, %v618
    %v955 = vpack.c.b16 %v623, %v619
    %v956 = vpack.c.b16 %v624, %v620
    %v957 = vpack.c.b16 %v625, %v621
    %v958 = vpack.c.b16 %v630, %v626
    %v959 = vpack.c.b16 %v631, %v627
    %v960 = vpack.c.b16 %v632, %v628
    %v961 = vpack.c.b16 %v633, %v629
    %v962 = vpack.c.b16 %v638, %v634
    %v963 = vpack.c.b16 %v639, %v635
    %v964 = vpack.c.b16 %v640, %v636
    %v965 = vpack.c.b16 %v641, %v637
    %v966 = vpack.c.b16 %v646, %v642
    %v967 = vpack.c.b16 %v647, %v643
    %v968 = vpack.c.b16 %v648, %v644
    %v969 = vpack.c.b16 %v649, %v645
    %v970 = vpack.c.b16 %v654, %v650
    %v971 = vpack.c.b16 %v655, %v651
    %v972 = vpack.c.b16 %v656, %v652
    %v973 = vpack.c.b16 %v657, %v653
    %v974 = vpack.c.b16 %v662, %v658
    %v975 = vpack.c.b16 %v663, %v659
    %v976 = vpack.c.b16 %v664, %v660
    %v977 = vpack.c.b16 %v665, %v661
    %v978 = vpack.c.b16 %v670, %v666
    %v979 = vpack.c.b16 %v671, %v667
    %v980 = vpack.c.b16 %v672, %v668
    %v981 = vpack.c.b16 %v673, %v669
    %v982 = vpack.c.b16 %v678, %v674
    %v983 = vpack.c.b16 %v679, %v675
    %v984 = vpack.c.b16 %v680, %v676
    %v985 = vpack.c.b16 %v681, %v677
    %v986 = vpack.c.b16 %v686, %v682
    %v987 = vpack.c.b16 %v687, %v683
    %v988 = vpack.c.b16 %v688, %v684
    %v989 = vpack.c.b16 %v689, %v685
    %v990 = vpack.c.b16 %v694, %v690
    %v991 = vpack.c.b16 %v695, %v691
    %v992 = vpack.c.b16 %v696, %v692
    %v993 = vpack.c.b16 %v697, %v693
    %v994 = vpack.c.b16 %v702, %v698
    %v995 = vpack.c.b16 %v703, %v699
    %v996 = vpack.c.b16 %v704, %v700
    %v997 = vpack.c.b16 %v705, %v701
    %v998 = vpack.c.b16 %v710, %v706
    %v999 = vpack.c.b16 %v711, %v707
    %v1000 = vpack.c.b16 %v712, %v708
    %v1001 = vpack.c.b16 %v713, %v709
    %v1002 = vpack.c.b16 %v718, %v714
    %v1003 = vpack.c.b16 %v719, %v715
    %v1004 = vpack.c.b16 %v720, %v716
    %v1005 = vpack.c.b16 %v721, %v717
    %v1006 = vpack.c.b16 %v726, %v722
    %v1007 = vpack.c.b16 %v727, %v723
    %v1008 = vpack.c.b16 %v728, %v724
    %v1009 = vpack.c.b16 %v729, %v725
    %v1010 = vpack.c.b16 %v734, %v730
    %v1011 = vpack.c.b16 %v735, %v731
    %v1012 = vpack.c.b16 %v736, %v732
    %v1013 = vpack.c.b16 %v737, %v733
    %v1014 = vpack.c.b16 %v742, %v738
    %v1015 = vpack.c.b16 %v743, %v739
    %v1016 = vpack.c.b16 %v744, %v740
    %v1017 = vpack.c.b16 %v745, %v741
    %v1018 = vpack.c.b16 %v750, %v746
    %v1019 = vpack.c.b16 %v751, %v747
    %v1020 = vpack.c.b16 %v752, %v748
    %v1021 = vpack.c.b16 %v753, %v749
    %v1022 = vpack.c.b16 %v758, %v754
    %v1023 = vpack.c.b16 %v759, %v755
    %v1024 = vpack.c.b16 %v760, %v756
    %v1025 = vpack.c.b16 %v761, %v757
    %v1026 = vpack.c.b16 %v766, %v762
    %v1027 = vpack.c.b16 %v767, %v763
    %v1028 = vpack.c.b16 %v768, %v764
    %v1029 = vpack.c.b16 %v769, %v765
    %v1030 = vpack.c.b16 %v774, %v770
    %v1031 = vpack.c.b16 %v775, %v771
    %v1032 = vpack.c.b16 %v776, %v772
    %v1033 = vpack.c.b16 %v777, %v773
    %v1034 = vpack.c.b16 %v782, %v778
    %v1035 = vpack.c.b16 %v783, %v779
    %v1036 = vpack.c.b16 %v784, %v780
    %v1037 = vpack.c.b16 %v785, %v781
    %v1038 = vpack.c.b16 %v790, %v786
    %v1039 = vpack.c.b16 %v791, %v787
    %v1040 = vpack.c.b16 %v792, %v788
    %v1041 = vpack.c.b16 %v793, %v789
    %v1042 = vpack.c.b16 %v798, %v794
    %v1043 = vpack.c.b16 %v799, %v795
    %v1044 = vpack.c.b16 %v800, %v796
    %v1045 = vpack.c.b16 %v801, %v797
    %v1046 = vpack.c.b16 %v806, %v802
    %v1047 = vpack.c.b16 %v807, %v803
    %v1048 = vpack.c.b16 %v808, %v804
    %v1049 = vpack.c.b16 %v809, %v805
    %v1050 = vpack.c.b16 %v814, %v810
    %v1051 = vpack.c.b16 %v815, %v811
    %v1052 = vpack.c.b16 %v816, %v812
    %v1053 = vpack.c.b16 %v817, %v813
    %v1054 = vpack.c.b16 %v822, %v818
    %v1055 = vpack.c.b16 %v823, %v819
    %v1056 = vpack.c.b16 %v824, %v820
    %v1057 = vpack.c.b16 %v825, %v821
    %v1058 = vpack.c.b16 %v830, %v826
    %v1059 = vpack.c.b16 %v831, %v827
    %v1060 = vpack.c.b16 %v832, %v828
    %v1061 = vpack.c.b16 %v833, %v829
    %v1062 = vpack.c.b16 %v838, %v834
    %v1063 = vpack.c.b16 %v839, %v835
    %v1064 = vpack.c.b16 %v840, %v836
    %v1065 = vpack.c.b16 %v841, %v837
    %v1066 = vpack.c.b16 %v846, %v842
    %v1067 = vpack.c.b16 %v847, %v843
    %v1068 = vpack.c.b16 %v848, %v844
    %v1069 = vpack.c.b16 %v849, %v845
    %v1070 = vpack.c.b16 %v854, %v850
    %v1071 = vpack.c.b16 %v855, %v851
    %v1072 = vpack.c.b16 %v856, %v852
    %v1073 = vpack.c.b16 %v857, %v853
    %v1074 = vpack.c.b16 %v862, %v858
    %v1075 = vpack.c.b16 %v863, %v859
    %v1076 = vpack.c.b16 %v864, %v860
    %v1077 = vpack.c.b16 %v865, %v861
    %v1078 = vpack.c.b16 %v870, %v866
    %v1079 = vpack.c.b16 %v871, %v867
    %v1080 = vpack.c.b16 %v872, %v868
    %v1081 = vpack.c.b16 %v873, %v869
    %v1082 = vpack.c.b16 %v878, %v874
    %v1083 = vpack.c.b16 %v879, %v875
    %v1084 = vpack.c.b16 %v880, %v876
    %v1085 = vpack.c.b16 %v881, %v877
    %v1086 = vpack.c.b16 %v886, %v882
    %v1087 = vpack.c.b16 %v887, %v883
    %v1088 = vpack.c.b16 %v888, %v884
    %v1089 = vpack.c.b16 %v889, %v885
    %v1090 = vpack.c.b16 %v894, %v890
    %v1091 = vpack.c.b16 %v895, %v891
    %v1092 = vpack.c.b16 %v896, %v892
    %v1093 = vpack.c.b16 %v897, %v893
    %vm1290 = vcmask 130048
    %v1292 = vsel %vm1290, %v91, 0
    %1294 = vmatprep.subr.bf16.mxu0 %v927
    %1295 = vmatpush1.bf16.msra.mxu0 %v926
    %1296 = vmatprep.subr.bf16.mxu0 %v923
    %1297 = vmatpush1.bf16.msra.mxu0 %v922
    %1298 = vmatprep.subr.bf16.mxu0 %v919
    %1299 = vmatpush1.bf16.msra.mxu0 %v918
    %1300 = vmatprep.subr.bf16.mxu0 %v915
    %1301 = vmatpush1.bf16.msra.mxu0 %v914
    %1302 = vmatprep.subr.bf16.mxu0 %v911
    %1303 = vmatpush1.bf16.msra.mxu0 %v910
    %1304 = vmatprep.subr.bf16.mxu0 %v907
    %1305 = vmatpush1.bf16.msra.mxu0 %v906
    %1306 = vmatprep.subr.bf16.mxu0 %v903
    %1307 = vmatpush1.bf16.msra.mxu0 %v902
    %1308 = vmatprep.subr.bf16.mxu0 %v899
    %1309 = vmatpush1.bf16.msra.mxu0 %v898
    %1310 = vmatprep.subr.bf16.mxu0 %v959
    %1311 = vmatpush2.bf16.msra.mxu0 %v958
    %1312 = vmatprep.subr.bf16.mxu0 %v955
    %1313 = vmatpush2.bf16.msra.mxu0 %v954
    %1314 = vmatprep.subr.bf16.mxu0 %v951
    %1315 = vmatpush2.bf16.msra.mxu0 %v950
    %1316 = vmatprep.subr.bf16.mxu0 %v947
    %1317 = vmatpush2.bf16.msra.mxu0 %v946
    %1318 = vmatprep.subr.bf16.mxu0 %v943
    %1319 = vmatpush2.bf16.msra.mxu0 %v942
    %1320 = vmatprep.subr.bf16.mxu0 %v939
    %1321 = vmatpush2.bf16.msra.mxu0 %v938
    %1322 = vmatprep.subr.bf16.mxu0 %v935
    %1323 = vmatpush2.bf16.msra.mxu0 %v934
    %1324 = vmatprep.subr.bf16.mxu0 %v931
    %1325 = vmatpush2.bf16.msra.mxu0 %v930
    %1326 = vmatprep.mubr.bf16.mxu0 %v86
    %1327 = vmatmul.mubr.bf16.gmra.mxu0 %v85
    %v1328 = vpop.f32.mrf.mxu0
    %v1329 = vadd.f32 %v293, %v1328
    %v1330 = vpop.f32.mrf.mxu0
    %v1331 = vadd.f32 %v297, %v1330
    %v1332 = vpop.f32.mrf.mxu0
    %v1333 = vpop.f32.mrf.mxu0
    %1334 = vdwg.mxu0
    %1335 = vmatprep.subr.bf16.mxu0 %v991
    %1336 = vmatpush1.bf16.msra.mxu0 %v990
    %1337 = vmatprep.subr.bf16.mxu0 %v987
    %1338 = vmatpush1.bf16.msra.mxu0 %v986
    %1339 = vmatprep.subr.bf16.mxu0 %v983
    %1340 = vmatpush1.bf16.msra.mxu0 %v982
    %1341 = vmatprep.subr.bf16.mxu0 %v979
    %1342 = vmatpush1.bf16.msra.mxu0 %v978
    %1343 = vmatprep.subr.bf16.mxu0 %v975
    %1344 = vmatpush1.bf16.msra.mxu0 %v974
    %1345 = vmatprep.subr.bf16.mxu0 %v971
    %1346 = vmatpush1.bf16.msra.mxu0 %v970
    %1347 = vmatprep.subr.bf16.mxu0 %v967
    %1348 = vmatpush1.bf16.msra.mxu0 %v966
    %1349 = vmatprep.subr.bf16.mxu0 %v963
    %1350 = vmatpush1.bf16.msra.mxu0 %v962
    %1351 = vmatprep.subr.bf16.mxu0 %v1023
    %1352 = vmatpush2.bf16.msra.mxu0 %v1022
    %1353 = vmatprep.subr.bf16.mxu0 %v1019
    %1354 = vmatpush2.bf16.msra.mxu0 %v1018
    %1355 = vmatprep.subr.bf16.mxu0 %v1015
    %1356 = vmatpush2.bf16.msra.mxu0 %v1014
    %1357 = vmatprep.subr.bf16.mxu0 %v1011
    %1358 = vmatpush2.bf16.msra.mxu0 %v1010
    %1359 = vmatprep.subr.bf16.mxu0 %v1007
    %1360 = vmatpush2.bf16.msra.mxu0 %v1006
    %1361 = vmatprep.subr.bf16.mxu0 %v1003
    %1362 = vmatpush2.bf16.msra.mxu0 %v1002
    %1363 = vmatprep.subr.bf16.mxu0 %v999
    %1364 = vmatpush2.bf16.msra.mxu0 %v998
    %1365 = vmatprep.subr.bf16.mxu0 %v995
    %1366 = vmatpush2.bf16.msra.mxu0 %v994
    %1367 = vmatprep.mubr.bf16.mxu0 %v88
    %1368 = vmatmul.mubr.bf16.gmra.mxu0 %v87
    %v1369 = vpop.f32.mrf.mxu0
    %v1370 = vadd.f32 %v1329, %v1369
    %v1371 = vpop.f32.mrf.mxu0
    %v1372 = vadd.f32 %v1331, %v1371
    %v1373 = vpop.f32.mrf.mxu0
    %v1374 = vpop.f32.mrf.mxu0
    %1375 = vdwg.mxu0
    %1376 = vmatprep.subr.bf16.mxu0 %v1055
    %1377 = vmatpush1.bf16.msra.mxu0 %v1054
    %1378 = vmatprep.subr.bf16.mxu0 %v1051
    %1379 = vmatpush1.bf16.msra.mxu0 %v1050
    %1380 = vmatprep.subr.bf16.mxu0 %v1047
    %1381 = vmatpush1.bf16.msra.mxu0 %v1046
    %1382 = vmatprep.subr.bf16.mxu0 %v1043
    %1383 = vmatpush1.bf16.msra.mxu0 %v1042
    %1384 = vmatprep.subr.bf16.mxu0 %v1039
    %1385 = vmatpush1.bf16.msra.mxu0 %v1038
    %1386 = vmatprep.subr.bf16.mxu0 %v1035
    %1387 = vmatpush1.bf16.msra.mxu0 %v1034
    %1388 = vmatprep.subr.bf16.mxu0 %v1031
    %1389 = vmatpush1.bf16.msra.mxu0 %v1030
    %1390 = vmatprep.subr.bf16.mxu0 %v1027
    %1391 = vmatpush1.bf16.msra.mxu0 %v1026
    %1392 = vmatprep.subr.bf16.mxu0 %v1087
    %1393 = vmatpush2.bf16.msra.mxu0 %v1086
    %1394 = vmatprep.subr.bf16.mxu0 %v1083
    %1395 = vmatpush2.bf16.msra.mxu0 %v1082
    %1396 = vmatprep.subr.bf16.mxu0 %v1079
    %1397 = vmatpush2.bf16.msra.mxu0 %v1078
    %1398 = vmatprep.subr.bf16.mxu0 %v1075
    %1399 = vmatpush2.bf16.msra.mxu0 %v1074
    %1400 = vmatprep.subr.bf16.mxu0 %v1071
    %1401 = vmatpush2.bf16.msra.mxu0 %v1070
    %1402 = vmatprep.subr.bf16.mxu0 %v1067
    %1403 = vmatpush2.bf16.msra.mxu0 %v1066
    %1404 = vmatprep.subr.bf16.mxu0 %v1063
    %1405 = vmatpush2.bf16.msra.mxu0 %v1062
    %1406 = vmatprep.subr.bf16.mxu0 %v1059
    %1407 = vmatpush2.bf16.msra.mxu0 %v1058
    %1408 = vmatprep.mubr.bf16.mxu0 %v90
    %1409 = vmatmul.mubr.bf16.gmra.mxu0 %v89
    %v1410 = vpop.f32.mrf.mxu0
    %v1411 = vadd.f32 %v1370, %v1410
    %v1412 = vpop.f32.mrf.mxu0
    %v1413 = vadd.f32 %v1372, %v1412
    %v1414 = vpop.f32.mrf.mxu0
    %v1415 = vpop.f32.mrf.mxu0
    %1416 = vdwg.mxu0
    %1417 = vmatprep.subr.bf16.mxu0 0
    %1418 = vmatpush1.bf16.msra.mxu0 0
    %1419 = vmatprep.subr.bf16.mxu0 0
    %1420 = vmatpush1.bf16.msra.mxu0 0
    %1421 = vmatprep.subr.bf16.mxu0 0
    %1422 = vmatpush1.bf16.msra.mxu0 0
    %1423 = vmatprep.subr.bf16.mxu0 0
    %1424 = vmatpush1.bf16.msra.mxu0 0
    %1425 = vmatprep.subr.bf16.mxu0 0
    %1426 = vmatpush1.bf16.msra.mxu0 0
    %1427 = vmatprep.subr.bf16.mxu0 0
    %1428 = vmatpush1.bf16.msra.mxu0 0
    %1429 = vmatprep.subr.bf16.mxu0 0
    %1430 = vmatpush1.bf16.msra.mxu0 0
    %1431 = vmatprep.subr.bf16.mxu0 %v1091
    %1432 = vmatpush1.bf16.msra.mxu0 %v1090
    %1433 = vmatprep.subr.bf16.mxu0 0
    %1434 = vmatpush2.bf16.msra.mxu0 0
    %1435 = vmatprep.subr.bf16.mxu0 0
    %1436 = vmatpush2.bf16.msra.mxu0 0
    %1437 = vmatprep.subr.bf16.mxu0 0
    %1438 = vmatpush2.bf16.msra.mxu0 0
    %1439 = vmatprep.subr.bf16.mxu0 0
    %1440 = vmatpush2.bf16.msra.mxu0 0
    %1441 = vmatprep.subr.bf16.mxu0 0
    %1442 = vmatpush2.bf16.msra.mxu0 0
    %1443 = vmatprep.subr.bf16.mxu0 0
    %1444 = vmatpush2.bf16.msra.mxu0 0
    %1445 = vmatprep.subr.bf16.mxu0 0
    %1446 = vmatpush2.bf16.msra.mxu0 0
    %1447 = vmatprep.subr.bf16.mxu0 0
    %1448 = vmatpush2.bf16.msra.mxu0 0
    %1449 = vmatprep.mubr.bf16.mxu0 0
    %1450 = vmatmul.mubr.bf16.gmra.mxu0 %v1292
    %v1451 = vpop.f32.mrf.mxu0
    %v1452 = vadd.f32 %v1411, %v1451
    %v1453 = vpop.f32.mrf.mxu0
    %v1454 = vadd.f32 %v1413, %v1453
    %v1455 = vpop.f32.mrf.mxu0
    %v1456 = vpop.f32.mrf.mxu0
    %1457 = vdwg.mxu0
    %1458 = vmatprep.subr.bf16.mxu0 %v929
    %1459 = vmatpush1.bf16.msra.mxu0 %v928
    %1460 = vmatprep.subr.bf16.mxu0 %v925
    %1461 = vmatpush1.bf16.msra.mxu0 %v924
    %1462 = vmatprep.subr.bf16.mxu0 %v921
    %1463 = vmatpush1.bf16.msra.mxu0 %v920
    %1464 = vmatprep.subr.bf16.mxu0 %v917
    %1465 = vmatpush1.bf16.msra.mxu0 %v916
    %1466 = vmatprep.subr.bf16.mxu0 %v913
    %1467 = vmatpush1.bf16.msra.mxu0 %v912
    %1468 = vmatprep.subr.bf16.mxu0 %v909
    %1469 = vmatpush1.bf16.msra.mxu0 %v908
    %1470 = vmatprep.subr.bf16.mxu0 %v905
    %1471 = vmatpush1.bf16.msra.mxu0 %v904
    %1472 = vmatprep.subr.bf16.mxu0 %v901
    %1473 = vmatpush1.bf16.msra.mxu0 %v900
    %1474 = vmatprep.subr.bf16.mxu0 %v961
    %1475 = vmatpush2.bf16.msra.mxu0 %v960
    %1476 = vmatprep.subr.bf16.mxu0 %v957
    %1477 = vmatpush2.bf16.msra.mxu0 %v956
    %1478 = vmatprep.subr.bf16.mxu0 %v953
    %1479 = vmatpush2.bf16.msra.mxu0 %v952
    %1480 = vmatprep.subr.bf16.mxu0 %v949
    %1481 = vmatpush2.bf16.msra.mxu0 %v948
    %1482 = vmatprep.subr.bf16.mxu0 %v945
    %1483 = vmatpush2.bf16.msra.mxu0 %v944
    %1484 = vmatprep.subr.bf16.mxu0 %v941
    %1485 = vmatpush2.bf16.msra.mxu0 %v940
    %1486 = vmatprep.subr.bf16.mxu0 %v937
    %1487 = vmatpush2.bf16.msra.mxu0 %v936
    %1488 = vmatprep.subr.bf16.mxu0 %v933
    %1489 = vmatpush2.bf16.msra.mxu0 %v932
    %1490 = vmatprep.mubr.bf16.mxu0 %v86
    %1491 = vmatmul.mubr.bf16.gmra.mxu0 %v85
    %v1492 = vpop.f32.mrf.mxu0
    %v1493 = vadd.f32 %v301, %v1492
    %v1494 = vpop.f32.mrf.mxu0
    %v1495 = vadd.f32 %v305, %v1494
    %v1496 = vpop.f32.mrf.mxu0
    %v1497 = vpop.f32.mrf.mxu0
    %1498 = vdwg.mxu0
    %1499 = vmatprep.subr.bf16.mxu0 %v993
    %1500 = vmatpush1.bf16.msra.mxu0 %v992
    %1501 = vmatprep.subr.bf16.mxu0 %v989
    %1502 = vmatpush1.bf16.msra.mxu0 %v988
    %1503 = vmatprep.subr.bf16.mxu0 %v985
    %1504 = vmatpush1.bf16.msra.mxu0 %v984
    %1505 = vmatprep.subr.bf16.mxu0 %v981
    %1506 = vmatpush1.bf16.msra.mxu0 %v980
    %1507 = vmatprep.subr.bf16.mxu0 %v977
    %1508 = vmatpush1.bf16.msra.mxu0 %v976
    %1509 = vmatprep.subr.bf16.mxu0 %v973
    %1510 = vmatpush1.bf16.msra.mxu0 %v972
    %1511 = vmatprep.subr.bf16.mxu0 %v969
    %1512 = vmatpush1.bf16.msra.mxu0 %v968
    %1513 = vmatprep.subr.bf16.mxu0 %v965
    %1514 = vmatpush1.bf16.msra.mxu0 %v964
    %1515 = vmatprep.subr.bf16.mxu0 %v1025
    %1516 = vmatpush2.bf16.msra.mxu0 %v1024
    %1517 = vmatprep.subr.bf16.mxu0 %v1021
    %1518 = vmatpush2.bf16.msra.mxu0 %v1020
    %1519 = vmatprep.subr.bf16.mxu0 %v1017
    %1520 = vmatpush2.bf16.msra.mxu0 %v1016
    %1521 = vmatprep.subr.bf16.mxu0 %v1013
    %1522 = vmatpush2.bf16.msra.mxu0 %v1012
    %1523 = vmatprep.subr.bf16.mxu0 %v1009
    %1524 = vmatpush2.bf16.msra.mxu0 %v1008
    %1525 = vmatprep.subr.bf16.mxu0 %v1005
    %1526 = vmatpush2.bf16.msra.mxu0 %v1004
    %1527 = vmatprep.subr.bf16.mxu0 %v1001
    %1528 = vmatpush2.bf16.msra.mxu0 %v1000
    %1529 = vmatprep.subr.bf16.mxu0 %v997
    %1530 = vmatpush2.bf16.msra.mxu0 %v996
    %1531 = vmatprep.mubr.bf16.mxu0 %v88
    %1532 = vmatmul.mubr.bf16.gmra.mxu0 %v87
    %v1533 = vpop.f32.mrf.mxu0
    %v1534 = vadd.f32 %v1493, %v1533
    %v1535 = vpop.f32.mrf.mxu0
    %v1536 = vadd.f32 %v1495, %v1535
    %v1537 = vpop.f32.mrf.mxu0
    %v1538 = vpop.f32.mrf.mxu0
    %1539 = vdwg.mxu0
    %1540 = vmatprep.subr.bf16.mxu0 %v1057
    %1541 = vmatpush1.bf16.msra.mxu0 %v1056
    %1542 = vmatprep.subr.bf16.mxu0 %v1053
    %1543 = vmatpush1.bf16.msra.mxu0 %v1052
    %1544 = vmatprep.subr.bf16.mxu0 %v1049
    %1545 = vmatpush1.bf16.msra.mxu0 %v1048
    %1546 = vmatprep.subr.bf16.mxu0 %v1045
    %1547 = vmatpush1.bf16.msra.mxu0 %v1044
    %1548 = vmatprep.subr.bf16.mxu0 %v1041
    %1549 = vmatpush1.bf16.msra.mxu0 %v1040
    %1550 = vmatprep.subr.bf16.mxu0 %v1037
    %1551 = vmatpush1.bf16.msra.mxu0 %v1036
    %1552 = vmatprep.subr.bf16.mxu0 %v1033
    %1553 = vmatpush1.bf16.msra.mxu0 %v1032
    %1554 = vmatprep.subr.bf16.mxu0 %v1029
    %1555 = vmatpush1.bf16.msra.mxu0 %v1028
    %1556 = vmatprep.subr.bf16.mxu0 %v1089
    %1557 = vmatpush2.bf16.msra.mxu0 %v1088
    %1558 = vmatprep.subr.bf16.mxu0 %v1085
    %1559 = vmatpush2.bf16.msra.mxu0 %v1084
    %1560 = vmatprep.subr.bf16.mxu0 %v1081
    %1561 = vmatpush2.bf16.msra.mxu0 %v1080
    %1562 = vmatprep.subr.bf16.mxu0 %v1077
    %1563 = vmatpush2.bf16.msra.mxu0 %v1076
    %1564 = vmatprep.subr.bf16.mxu0 %v1073
    %1565 = vmatpush2.bf16.msra.mxu0 %v1072
    %1566 = vmatprep.subr.bf16.mxu0 %v1069
    %1567 = vmatpush2.bf16.msra.mxu0 %v1068
    %1568 = vmatprep.subr.bf16.mxu0 %v1065
    %1569 = vmatpush2.bf16.msra.mxu0 %v1064
    %1570 = vmatprep.subr.bf16.mxu0 %v1061
    %1571 = vmatpush2.bf16.msra.mxu0 %v1060
    %1572 = vmatprep.mubr.bf16.mxu0 %v90
    %1573 = vmatmul.mubr.bf16.gmra.mxu0 %v89
    %v1574 = vpop.f32.mrf.mxu0
    %v1575 = vadd.f32 %v1534, %v1574
    %v1576 = vpop.f32.mrf.mxu0
    %v1577 = vadd.f32 %v1536, %v1576
    %v1578 = vpop.f32.mrf.mxu0
    %v1579 = vpop.f32.mrf.mxu0
    %1580 = vdwg.mxu0
    %1581 = vmatprep.subr.bf16.mxu0 0
    %1582 = vmatpush1.bf16.msra.mxu0 0
    %1583 = vmatprep.subr.bf16.mxu0 0
    %1584 = vmatpush1.bf16.msra.mxu0 0
    %1585 = vmatprep.subr.bf16.mxu0 0
    %1586 = vmatpush1.bf16.msra.mxu0 0
    %1587 = vmatprep.subr.bf16.mxu0 0
    %1588 = vmatpush1.bf16.msra.mxu0 0
    %1589 = vmatprep.subr.bf16.mxu0 0
    %1590 = vmatpush1.bf16.msra.mxu0 0
    %1591 = vmatprep.subr.bf16.mxu0 0
    %1592 = vmatpush1.bf16.msra.mxu0 0
    %1593 = vmatprep.subr.bf16.mxu0 0
    %1594 = vmatpush1.bf16.msra.mxu0 0
    %1595 = vmatprep.subr.bf16.mxu0 %v1093
    %1596 = vmatpush1.bf16.msra.mxu0 %v1092
    %1597 = vmatprep.subr.bf16.mxu0 0
    %1598 = vmatpush2.bf16.msra.mxu0 0
    %1599 = vmatprep.subr.bf16.mxu0 0
    %1600 = vmatpush2.bf16.msra.mxu0 0
    %1601 = vmatprep.subr.bf16.mxu0 0
    %1602 = vmatpush2.bf16.msra.mxu0 0
    %1603 = vmatprep.subr.bf16.mxu0 0
    %1604 = vmatpush2.bf16.msra.mxu0 0
    %1605 = vmatprep.subr.bf16.mxu0 0
    %1606 = vmatpush2.bf16.msra.mxu0 0
    %1607 = vmatprep.subr.bf16.mxu0 0
    %1608 = vmatpush2.bf16.msra.mxu0 0
    %1609 = vmatprep.subr.bf16.mxu0 0
    %1610 = vmatpush2.bf16.msra.mxu0 0
    %1611 = vmatprep.subr.bf16.mxu0 0
    %1612 = vmatpush2.bf16.msra.mxu0 0
    %1613 = vmatprep.mubr.bf16.mxu0 0
    %1614 = vmatmul.mubr.bf16.gmra.mxu0 %v1292
    %v1615 = vpop.f32.mrf.mxu0
    %v1616 = vadd.f32 %v1575, %v1615
    %v1617 = vpop.f32.mrf.mxu0
    %v1618 = vadd.f32 %v1577, %v1617
    %v1619 = vpop.f32.mrf.mxu0
    %v1620 = vpop.f32.mrf.mxu0
    %1621 = vdwg.mxu0
    %v1622 = vmax.f32 %v1452, 0.0
    %v1623 = vmax.f32 %v1454, 0.0
    %v1624 = vmax.f32 %v1616, 0.0
    %v1625 = vmax.f32 %v1618, 0.0
    %v1626 = vpack.c.bf16 %v1622, %v1622
    %v1627 = vpack.c.bf16 %v1623, %v1623
    %v1628 = vpack.c.bf16 %v1624, %v1624
    %v1629 = vpack.c.bf16 %v1625, %v1625
    %v1630 = vld [vmem:[%s4] sm:$0xff]
    %v1631 = vld [vmem:[%s4 + $0x8] sm:$0xff]
    %v1632 = vld [vmem:[%s4 + $0x10] sm:$0xff]
    %v1633 = vld [vmem:[%s4 + $0x18] sm:$0xff]
    %v1634 = vld [vmem:[%s4 + $0x20] sm:$0xff]
    %v1635 = vld [vmem:[%s4 + $0x28] sm:$0xff]
    %v1636 = vld [vmem:[%s4 + $0x30] sm:$0xff]
    %v1637 = vld [vmem:[%s4 + $0x38] sm:$0xff]
    %v1638 = vld [vmem:[%s4 + $0x40] sm:$0xff]
    %v1639 = vld [vmem:[%s4 + $0x48] sm:$0xff]
    %v1640 = vld [vmem:[%s4 + $0x50] sm:$0xff]
    %v1641 = vld [vmem:[%s4 + $0x58] sm:$0xff]
    %v1642 = vld [vmem:[%s4 + $0x60] sm:$0xff]
    %v1643 = vld [vmem:[%s4 + $0x68] sm:$0xff]
    %v1644 = vld [vmem:[%s4 + $0x70] sm:$0xff]
    %v1645 = vld [vmem:[%s4 + $0x78] sm:$0xff]
    %v1646 = vld [vmem:[%s4 + $0x80] sm:$0xff]
    %v1647 = vld [vmem:[%s4 + $0x88] sm:$0xff]
    %v1648 = vld [vmem:[%s4 + $0x90] sm:$0xff]
    %v1649 = vld [vmem:[%s4 + $0x98] sm:$0xff]
    %v1650 = vld [vmem:[%s4 + $0xa0] sm:$0xff]
    %v1651 = vld [vmem:[%s4 + $0xa8] sm:$0xff]
    %v1652 = vld [vmem:[%s4 + $0xb0] sm:$0xff]
    %v1653 = vld [vmem:[%s4 + $0xb8] sm:$0xff]
    %v1654 = vld [vmem:[%s4 + $0xc0] sm:$0xff]
    %v1655 = vld [vmem:[%s4 + $0xc8] sm:$0xff]
    %v1656 = vld [vmem:[%s4 + $0xd0] sm:$0xff]
    %v1657 = vld [vmem:[%s4 + $0xd8] sm:$0xff]
    %v1658 = vld [vmem:[%s4 + $0xe0] sm:$0xff]
    %v1659 = vld [vmem:[%s4 + $0xe8] sm:$0xff]
    %v1660 = vld [vmem:[%s4 + $0xf0] sm:$0xff]
    %v1661 = vld [vmem:[%s4 + $0xf8] sm:$0xff]
    %v1662 = vld [vmem:[%s4 + $0x100] sm:$0xff]
    %v1663 = vld [vmem:[%s4 + $0x108] sm:$0xff]
    %v1664 = vld [vmem:[%s4 + $0x110] sm:$0xff]
    %v1665 = vld [vmem:[%s4 + $0x118] sm:$0xff]
    %v1666 = vld [vmem:[%s4 + $0x120] sm:$0xff]
    %v1667 = vld [vmem:[%s4 + $0x128] sm:$0xff]
    %v1668 = vld [vmem:[%s4 + $0x130] sm:$0xff]
    %v1669 = vld [vmem:[%s4 + $0x138] sm:$0xff]
    %v1670 = vld [vmem:[%s4 + $0x140] sm:$0xff]
    %v1671 = vld [vmem:[%s4 + $0x148] sm:$0xff]
    %v1672 = vld [vmem:[%s4 + $0x150] sm:$0xff]
    %v1673 = vld [vmem:[%s4 + $0x158] sm:$0xff]
    %v1674 = vld [vmem:[%s4 + $0x160] sm:$0xff]
    %v1675 = vld [vmem:[%s4 + $0x168] sm:$0xff]
    %v1676 = vld [vmem:[%s4 + $0x170] sm:$0xff]
    %v1677 = vld [vmem:[%s4 + $0x178] sm:$0xff]
    %v1678 = vld [vmem:[%s4 + $0x180] sm:$0xff]
    %v1679 = vld [vmem:[%s4 + $0x188] sm:$0xff]
    %v1680 = vld [vmem:[%s4 + $0x190] sm:$0xff]
    %v1681 = vld [vmem:[%s4 + $0x198] sm:$0xff]
    %v1682 = vld [vmem:[%s4 + $0x1a0] sm:$0xff]
    %v1683 = vld [vmem:[%s4 + $0x1a8] sm:$0xff]
    %v1684 = vld [vmem:[%s4 + $0x1b0] sm:$0xff]
    %v1685 = vld [vmem:[%s4 + $0x1b8] sm:$0xff]
    %v1686 = vld [vmem:[%s4 + $0x1c0] sm:$0xff]
    %v1687 = vld [vmem:[%s4 + $0x1c8] sm:$0xff]
    %v1688 = vld [vmem:[%s4 + $0x1d0] sm:$0xff]
    %v1689 = vld [vmem:[%s4 + $0x1d8] sm:$0xff]
    %v1690 = vld [vmem:[%s4 + $0x1e0] sm:$0xff]
    %v1691 = vld [vmem:[%s4 + $0x1e8] sm:$0xff]
    %v1692 = vld [vmem:[%s4 + $0x1f0] sm:$0xff]
    %v1693 = vld [vmem:[%s4 + $0x1f8] sm:$0xff]
    %v1694 = vld [vmem:[%s5] sm:$0x3]
    %v1696 = vlaneseq
    %v1697 = vshrl.u32 %v1696, 7
    %v1698 = vsub.s32 0, %v1697
    %v1699 = vrot.slane %v1694, %v1698
    %v1700 = vlaneseq
    %v1701 = vshrl.u32 %v1700, 7
    %v1702 = vsub.s32 1, %v1701
    %v1703 = vrot.slane %v1694, %v1702
    %v1770 = vunpack.c.l.b16 %v1630
    %v1771 = vunpack.c.h.b16 %v1630
    %v1772 = vunpack.c.l.b16 %v1631
    %v1773 = vunpack.c.h.b16 %v1631
    %v1774 = vunpack.c.l.b16 %v1632
    %v1775 = vunpack.c.h.b16 %v1632
    %v1776 = vunpack.c.l.b16 %v1633
    %v1777 = vunpack.c.h.b16 %v1633
    %v1778 = vunpack.c.l.b16 %v1634
    %v1779 = vunpack.c.h.b16 %v1634
    %v1780 = vunpack.c.l.b16 %v1635
    %v1781 = vunpack.c.h.b16 %v1635
    %v1782 = vunpack.c.l.b16 %v1636
    %v1783 = vunpack.c.h.b16 %v1636
    %v1784 = vunpack.c.l.b16 %v1637
    %v1785 = vunpack.c.h.b16 %v1637
    %v1786 = vunpack.c.l.b16 %v1638
    %v1787 = vunpack.c.h.b16 %v1638
    %v1788 = vunpack.c.l.b16 %v1639
    %v1789 = vunpack.c.h.b16 %v1639
    %v1790 = vunpack.c.l.b16 %v1640
    %v1791 = vunpack.c.h.b16 %v1640
    %v1792 = vunpack.c.l.b16 %v1641
    %v1793 = vunpack.c.h.b16 %v1641
    %v1794 = vunpack.c.l.b16 %v1642
    %v1795 = vunpack.c.h.b16 %v1642
    %v1796 = vunpack.c.l.b16 %v1643
    %v1797 = vunpack.c.h.b16 %v1643
    %v1798 = vunpack.c.l.b16 %v1644
    %v1799 = vunpack.c.h.b16 %v1644
    %v1800 = vunpack.c.l.b16 %v1645
    %v1801 = vunpack.c.h.b16 %v1645
    %v1802 = vunpack.c.l.b16 %v1646
    %v1803 = vunpack.c.h.b16 %v1646
    %v1804 = vunpack.c.l.b16 %v1647
    %v1805 = vunpack.c.h.b16 %v1647
    %v1806 = vunpack.c.l.b16 %v1648
    %v1807 = vunpack.c.h.b16 %v1648
    %v1808 = vunpack.c.l.b16 %v1649
    %v1809 = vunpack.c.h.b16 %v1649
    %v1810 = vunpack.c.l.b16 %v1650
    %v1811 = vunpack.c.h.b16 %v1650
    %v1812 = vunpack.c.l.b16 %v1651
    %v1813 = vunpack.c.h.b16 %v1651
    %v1814 = vunpack.c.l.b16 %v1652
    %v1815 = vunpack.c.h.b16 %v1652
    %v1816 = vunpack.c.l.b16 %v1653
    %v1817 = vunpack.c.h.b16 %v1653
    %v1818 = vunpack.c.l.b16 %v1654
    %v1819 = vunpack.c.h.b16 %v1654
    %v1820 = vunpack.c.l.b16 %v1655
    %v1821 = vunpack.c.h.b16 %v1655
    %v1822 = vunpack.c.l.b16 %v1656
    %v1823 = vunpack.c.h.b16 %v1656
    %v1824 = vunpack.c.l.b16 %v1657
    %v1825 = vunpack.c.h.b16 %v1657
    %v1826 = vunpack.c.l.b16 %v1658
    %v1827 = vunpack.c.h.b16 %v1658
    %v1828 = vunpack.c.l.b16 %v1659
    %v1829 = vunpack.c.h.b16 %v1659
    %v1830 = vunpack.c.l.b16 %v1660
    %v1831 = vunpack.c.h.b16 %v1660
    %v1832 = vunpack.c.l.b16 %v1661
    %v1833 = vunpack.c.h.b16 %v1661
    %v1834 = vunpack.c.l.b16 %v1662
    %v1835 = vunpack.c.h.b16 %v1662
    %v1836 = vunpack.c.l.b16 %v1663
    %v1837 = vunpack.c.h.b16 %v1663
    %v1838 = vunpack.c.l.b16 %v1664
    %v1839 = vunpack.c.h.b16 %v1664
    %v1840 = vunpack.c.l.b16 %v1665
    %v1841 = vunpack.c.h.b16 %v1665
    %v1842 = vunpack.c.l.b16 %v1666
    %v1843 = vunpack.c.h.b16 %v1666
    %v1844 = vunpack.c.l.b16 %v1667
    %v1845 = vunpack.c.h.b16 %v1667
    %v1846 = vunpack.c.l.b16 %v1668
    %v1847 = vunpack.c.h.b16 %v1668
    %v1848 = vunpack.c.l.b16 %v1669
    %v1849 = vunpack.c.h.b16 %v1669
    %v1850 = vunpack.c.l.b16 %v1670
    %v1851 = vunpack.c.h.b16 %v1670
    %v1852 = vunpack.c.l.b16 %v1671
    %v1853 = vunpack.c.h.b16 %v1671
    %v1854 = vunpack.c.l.b16 %v1672
    %v1855 = vunpack.c.h.b16 %v1672
    %v1856 = vunpack.c.l.b16 %v1673
    %v1857 = vunpack.c.h.b16 %v1673
    %v1858 = vunpack.c.l.b16 %v1674
    %v1859 = vunpack.c.h.b16 %v1674
    %v1860 = vunpack.c.l.b16 %v1675
    %v1861 = vunpack.c.h.b16 %v1675
    %v1862 = vunpack.c.l.b16 %v1676
    %v1863 = vunpack.c.h.b16 %v1676
    %v1864 = vunpack.c.l.b16 %v1677
    %v1865 = vunpack.c.h.b16 %v1677
    %v1866 = vunpack.c.l.b16 %v1678
    %v1867 = vunpack.c.h.b16 %v1678
    %v1868 = vunpack.c.l.b16 %v1679
    %v1869 = vunpack.c.h.b16 %v1679
    %v1870 = vunpack.c.l.b16 %v1680
    %v1871 = vunpack.c.h.b16 %v1680
    %v1872 = vunpack.c.l.b16 %v1681
    %v1873 = vunpack.c.h.b16 %v1681
    %v1874 = vunpack.c.l.b16 %v1682
    %v1875 = vunpack.c.h.b16 %v1682
    %v1876 = vunpack.c.l.b16 %v1683
    %v1877 = vunpack.c.h.b16 %v1683
    %v1878 = vunpack.c.l.b16 %v1684
    %v1879 = vunpack.c.h.b16 %v1684
    %v1880 = vunpack.c.l.b16 %v1685
    %v1881 = vunpack.c.h.b16 %v1685
    %v1882 = vunpack.c.l.b16 %v1686
    %v1883 = vunpack.c.h.b16 %v1686
    %v1884 = vunpack.c.l.b16 %v1687
    %v1885 = vunpack.c.h.b16 %v1687
    %v1886 = vunpack.c.l.b16 %v1688
    %v1887 = vunpack.c.h.b16 %v1688
    %v1888 = vunpack.c.l.b16 %v1689
    %v1889 = vunpack.c.h.b16 %v1689
    %v1890 = vunpack.c.l.b16 %v1690
    %v1891 = vunpack.c.h.b16 %v1690
    %v1892 = vunpack.c.l.b16 %v1691
    %v1893 = vunpack.c.h.b16 %v1691
    %v1894 = vunpack.c.l.b16 %v1692
    %v1895 = vunpack.c.h.b16 %v1692
    %v1896 = vunpack.c.l.b16 %v1693
    %v1897 = vunpack.c.h.b16 %v1693
    %v1898 = vpack.c.b16 %v1772, %v1770
    %v1899 = vpack.c.b16 %v1773, %v1771
    %v1900 = vpack.c.b16 %v1776, %v1774
    %v1901 = vpack.c.b16 %v1777, %v1775
    %v1902 = vpack.c.b16 %v1780, %v1778
    %v1903 = vpack.c.b16 %v1781, %v1779
    %v1904 = vpack.c.b16 %v1784, %v1782
    %v1905 = vpack.c.b16 %v1785, %v1783
    %v1906 = vpack.c.b16 %v1788, %v1786
    %v1907 = vpack.c.b16 %v1789, %v1787
    %v1908 = vpack.c.b16 %v1792, %v1790
    %v1909 = vpack.c.b16 %v1793, %v1791
    %v1910 = vpack.c.b16 %v1796, %v1794
    %v1911 = vpack.c.b16 %v1797, %v1795
    %v1912 = vpack.c.b16 %v1800, %v1798
    %v1913 = vpack.c.b16 %v1801, %v1799
    %v1914 = vpack.c.b16 %v1804, %v1802
    %v1915 = vpack.c.b16 %v1805, %v1803
    %v1916 = vpack.c.b16 %v1808, %v1806
    %v1917 = vpack.c.b16 %v1809, %v1807
    %v1918 = vpack.c.b16 %v1812, %v1810
    %v1919 = vpack.c.b16 %v1813, %v1811
    %v1920 = vpack.c.b16 %v1816, %v1814
    %v1921 = vpack.c.b16 %v1817, %v1815
    %v1922 = vpack.c.b16 %v1820, %v1818
    %v1923 = vpack.c.b16 %v1821, %v1819
    %v1924 = vpack.c.b16 %v1824, %v1822
    %v1925 = vpack.c.b16 %v1825, %v1823
    %v1926 = vpack.c.b16 %v1828, %v1826
    %v1927 = vpack.c.b16 %v1829, %v1827
    %v1928 = vpack.c.b16 %v1832, %v1830
    %v1929 = vpack.c.b16 %v1833, %v1831
    %v1930 = vpack.c.b16 %v1836, %v1834
    %v1931 = vpack.c.b16 %v1837, %v1835
    %v1932 = vpack.c.b16 %v1840, %v1838
    %v1933 = vpack.c.b16 %v1841, %v1839
    %v1934 = vpack.c.b16 %v1844, %v1842
    %v1935 = vpack.c.b16 %v1845, %v1843
    %v1936 = vpack.c.b16 %v1848, %v1846
    %v1937 = vpack.c.b16 %v1849, %v1847
    %v1938 = vpack.c.b16 %v1852, %v1850
    %v1939 = vpack.c.b16 %v1853, %v1851
    %v1940 = vpack.c.b16 %v1856, %v1854
    %v1941 = vpack.c.b16 %v1857, %v1855
    %v1942 = vpack.c.b16 %v1860, %v1858
    %v1943 = vpack.c.b16 %v1861, %v1859
    %v1944 = vpack.c.b16 %v1864, %v1862
    %v1945 = vpack.c.b16 %v1865, %v1863
    %v1946 = vpack.c.b16 %v1868, %v1866
    %v1947 = vpack.c.b16 %v1869, %v1867
    %v1948 = vpack.c.b16 %v1872, %v1870
    %v1949 = vpack.c.b16 %v1873, %v1871
    %v1950 = vpack.c.b16 %v1876, %v1874
    %v1951 = vpack.c.b16 %v1877, %v1875
    %v1952 = vpack.c.b16 %v1880, %v1878
    %v1953 = vpack.c.b16 %v1881, %v1879
    %v1954 = vpack.c.b16 %v1884, %v1882
    %v1955 = vpack.c.b16 %v1885, %v1883
    %v1956 = vpack.c.b16 %v1888, %v1886
    %v1957 = vpack.c.b16 %v1889, %v1887
    %v1958 = vpack.c.b16 %v1892, %v1890
    %v1959 = vpack.c.b16 %v1893, %v1891
    %v1960 = vpack.c.b16 %v1896, %v1894
    %v1961 = vpack.c.b16 %v1897, %v1895
    %2026 = vmatprep.subr.bf16.mxu0 %v1913
    %2027 = vmatpush1.bf16.msra.mxu0 %v1912
    %2028 = vmatprep.subr.bf16.mxu0 %v1911
    %2029 = vmatpush1.bf16.msra.mxu0 %v1910
    %2030 = vmatprep.subr.bf16.mxu0 %v1909
    %2031 = vmatpush1.bf16.msra.mxu0 %v1908
    %2032 = vmatprep.subr.bf16.mxu0 %v1907
    %2033 = vmatpush1.bf16.msra.mxu0 %v1906
    %2034 = vmatprep.subr.bf16.mxu0 %v1905
    %2035 = vmatpush1.bf16.msra.mxu0 %v1904
    %2036 = vmatprep.subr.bf16.mxu0 %v1903
    %2037 = vmatpush1.bf16.msra.mxu0 %v1902
    %2038 = vmatprep.subr.bf16.mxu0 %v1901
    %2039 = vmatpush1.bf16.msra.mxu0 %v1900
    %2040 = vmatprep.subr.bf16.mxu0 %v1899
    %2041 = vmatpush1.bf16.msra.mxu0 %v1898
    %2042 = vmatprep.subr.bf16.mxu0 %v1929
    %2043 = vmatpush2.bf16.msra.mxu0 %v1928
    %2044 = vmatprep.subr.bf16.mxu0 %v1927
    %2045 = vmatpush2.bf16.msra.mxu0 %v1926
    %2046 = vmatprep.subr.bf16.mxu0 %v1925
    %2047 = vmatpush2.bf16.msra.mxu0 %v1924
    %2048 = vmatprep.subr.bf16.mxu0 %v1923
    %2049 = vmatpush2.bf16.msra.mxu0 %v1922
    %2050 = vmatprep.subr.bf16.mxu0 %v1921
    %2051 = vmatpush2.bf16.msra.mxu0 %v1920
    %2052 = vmatprep.subr.bf16.mxu0 %v1919
    %2053 = vmatpush2.bf16.msra.mxu0 %v1918
    %2054 = vmatprep.subr.bf16.mxu0 %v1917
    %2055 = vmatpush2.bf16.msra.mxu0 %v1916
    %2056 = vmatprep.subr.bf16.mxu0 %v1915
    %2057 = vmatpush2.bf16.msra.mxu0 %v1914
    %2058 = vmatprep.mubr.bf16.mxu0 %v1627
    %2059 = vmatmul.mubr.bf16.gmra.mxu0 %v1626
    %v2060 = vpop.f32.mrf.mxu0
    %v2061 = vadd.f32 %v1699, %v2060
    %v2062 = vpop.f32.mrf.mxu0
    %v2063 = vadd.f32 %v1703, %v2062
    %v2064 = vpop.f32.mrf.mxu0
    %v2065 = vpop.f32.mrf.mxu0
    %2066 = vdwg.mxu0
    %2067 = vmatprep.subr.bf16.mxu0 %v1945
    %2068 = vmatpush1.bf16.msra.mxu0 %v1944
    %2069 = vmatprep.subr.bf16.mxu0 %v1943
    %2070 = vmatpush1.bf16.msra.mxu0 %v1942
    %2071 = vmatprep.subr.bf16.mxu0 %v1941
    %2072 = vmatpush1.bf16.msra.mxu0 %v1940
    %2073 = vmatprep.subr.bf16.mxu0 %v1939
    %2074 = vmatpush1.bf16.msra.mxu0 %v1938
    %2075 = vmatprep.subr.bf16.mxu0 %v1937
    %2076 = vmatpush1.bf16.msra.mxu0 %v1936
    %2077 = vmatprep.subr.bf16.mxu0 %v1935
    %2078 = vmatpush1.bf16.msra.mxu0 %v1934
    %2079 = vmatprep.subr.bf16.mxu0 %v1933
    %2080 = vmatpush1.bf16.msra.mxu0 %v1932
    %2081 = vmatprep.subr.bf16.mxu0 %v1931
    %2082 = vmatpush1.bf16.msra.mxu0 %v1930
    %2083 = vmatprep.subr.bf16.mxu0 %v1961
    %2084 = vmatpush2.bf16.msra.mxu0 %v1960
    %2085 = vmatprep.subr.bf16.mxu0 %v1959
    %2086 = vmatpush2.bf16.msra.mxu0 %v1958
    %2087 = vmatprep.subr.bf16.mxu0 %v1957
    %2088 = vmatpush2.bf16.msra.mxu0 %v1956
    %2089 = vmatprep.subr.bf16.mxu0 %v1955
    %2090 = vmatpush2.bf16.msra.mxu0 %v1954
    %2091 = vmatprep.subr.bf16.mxu0 %v1953
    %2092 = vmatpush2.bf16.msra.mxu0 %v1952
    %2093 = vmatprep.subr.bf16.mxu0 %v1951
    %2094 = vmatpush2.bf16.msra.mxu0 %v1950
    %2095 = vmatprep.subr.bf16.mxu0 %v1949
    %2096 = vmatpush2.bf16.msra.mxu0 %v1948
    %2097 = vmatprep.subr.bf16.mxu0 %v1947
    %2098 = vmatpush2.bf16.msra.mxu0 %v1946
    %2099 = vmatprep.mubr.bf16.mxu0 %v1629
    %2100 = vmatmul.mubr.bf16.gmra.mxu0 %v1628
    %v2101 = vpop.f32.mrf.mxu0
    %v2102 = vadd.f32 %v2061, %v2101
    %v2103 = vpop.f32.mrf.mxu0
    %v2104 = vadd.f32 %v2063, %v2103
    %v2105 = vpop.f32.mrf.mxu0
    %v2106 = vpop.f32.mrf.mxu0
    %2107 = vdwg.mxu0
    %vm2108 = vcmask 156672
    %2109 = vst.msk [vmem:[#allocation4] sm:$0x3] %vm2108, %v2102
    %2110 = vst.msk [vmem:[#allocation6] sm:$0x3] %vm2108, %v2104
    %v2111 = vmul.f32 %v2104, 0.5
    %v2112 = vmul.f32 %v2111, 1.442695
    %v2113 = vpow.pop %v2112
    %v2114 = vld [vmem:[%s1] sm:$0x3]
    %v2115 = vmul.f32 %v2114, %v2113
    %v2116 = vadd.f32 %v2102, %v2115
    %v2117 = vpack.c.bf16 %v2116, %v2116
    %v2118 = vld [vmem:[%s6] sm:$0xff]
    %v2119 = vld [vmem:[%s6 + $0x8] sm:$0xff]
    %v2120 = vld [vmem:[%s6 + $0x10] sm:$0xff]
    %v2121 = vld [vmem:[%s6 + $0x18] sm:$0xff]
    %v2122 = vld [vmem:[%s6 + $0x20] sm:$0xff]
    %v2123 = vld [vmem:[%s6 + $0x28] sm:$0xff]
    %v2124 = vld [vmem:[%s6 + $0x30] sm:$0xff]
    %v2125 = vld [vmem:[%s6 + $0x38] sm:$0xff]
    %v2126 = vld [vmem:[%s6 + $0x40] sm:$0xff]
    %v2127 = vld [vmem:[%s6 + $0x48] sm:$0xff]
    %v2128 = vld [vmem:[%s6 + $0x50] sm:$0xff]
    %v2129 = vld [vmem:[%s6 + $0x58] sm:$0xff]
    %v2130 = vld [vmem:[%s6 + $0x60] sm:$0xff]
    %v2131 = vld [vmem:[%s6 + $0x68] sm:$0xff]
    %v2132 = vld [vmem:[%s6 + $0x70] sm:$0xff]
    %v2133 = vld [vmem:[%s6 + $0x78] sm:$0xff]
    %v2134 = vld [vmem:[%s6 + $0x80] sm:$0xff]
    %v2135 = vld [vmem:[%s6 + $0x88] sm:$0xff]
    %v2136 = vld [vmem:[%s6 + $0x90] sm:$0xff]
    %v2137 = vld [vmem:[%s6 + $0x98] sm:$0xff]
    %v2138 = vld [vmem:[%s6 + $0xa0] sm:$0xff]
    %v2139 = vld [vmem:[%s6 + $0xa8] sm:$0xff]
    %v2140 = vld [vmem:[%s6 + $0xb0] sm:$0xff]
    %v2141 = vld [vmem:[%s6 + $0xb8] sm:$0xff]
    %v2142 = vld [vmem:[%s6 + $0xc0] sm:$0xff]
    %v2143 = vld [vmem:[%s6 + $0xc8] sm:$0xff]
    %v2144 = vld [vmem:[%s6 + $0xd0] sm:$0xff]
    %v2145 = vld [vmem:[%s6 + $0xd8] sm:$0xff]
    %v2146 = vld [vmem:[%s6 + $0xe0] sm:$0xff]
    %v2147 = vld [vmem:[%s6 + $0xe8] sm:$0xff]
    %v2148 = vld [vmem:[%s6 + $0xf0] sm:$0xff]
    %v2149 = vld [vmem:[%s6 + $0xf8] sm:$0xff]
    %v2150 = vld [vmem:[%s7] sm:$0xf]
    %v2152 = vlaneseq
    %v2153 = vshrl.u32 %v2152, 7
    %v2154 = vsub.s32 0, %v2153
    %v2155 = vrot.slane %v2150, %v2154
    %v2156 = vlaneseq
    %v2157 = vshrl.u32 %v2156, 7
    %v2158 = vsub.s32 1, %v2157
    %v2159 = vrot.slane %v2150, %v2158
    %v2160 = vlaneseq
    %v2161 = vshrl.u32 %v2160, 7
    %v2162 = vsub.s32 2, %v2161
    %v2163 = vrot.slane %v2150, %v2162
    %v2164 = vlaneseq
    %v2165 = vshrl.u32 %v2164, 7
    %v2166 = vsub.s32 3, %v2165
    %v2167 = vrot.slane %v2150, %v2166
    %v2204 = vunpack.c.l.b16 %v2118
    %v2205 = vunpack.c.h.b16 %v2118
    %v2206 = vunpack.c.l.b16 %v2119
    %v2207 = vunpack.c.h.b16 %v2119
    %v2208 = vunpack.c.l.b16 %v2120
    %v2209 = vunpack.c.h.b16 %v2120
    %v2210 = vunpack.c.l.b16 %v2121
    %v2211 = vunpack.c.h.b16 %v2121
    %v2212 = vunpack.c.l.b16 %v2122
    %v2213 = vunpack.c.h.b16 %v2122
    %v2214 = vunpack.c.l.b16 %v2123
    %v2215 = vunpack.c.h.b16 %v2123
    %v2216 = vunpack.c.l.b16 %v2124
    %v2217 = vunpack.c.h.b16 %v2124
    %v2218 = vunpack.c.l.b16 %v2125
    %v2219 = vunpack.c.h.b16 %v2125
    %v2220 = vunpack.c.l.b16 %v2126
    %v2221 = vunpack.c.h.b16 %v2126
    %v2222 = vunpack.c.l.b16 %v2127
    %v2223 = vunpack.c.h.b16 %v2127
    %v2224 = vunpack.c.l.b16 %v2128
    %v2225 = vunpack.c.h.b16 %v2128
    %v2226 = vunpack.c.l.b16 %v2129
    %v2227 = vunpack.c.h.b16 %v2129
    %v2228 = vunpack.c.l.b16 %v2130
    %v2229 = vunpack.c.h.b16 %v2130
    %v2230 = vunpack.c.l.b16 %v2131
    %v2231 = vunpack.c.h.b16 %v2131
    %v2232 = vunpack.c.l.b16 %v2132
    %v2233 = vunpack.c.h.b16 %v2132
    %v2234 = vunpack.c.l.b16 %v2133
    %v2235 = vunpack.c.h.b16 %v2133
    %v2236 = vunpack.c.l.b16 %v2134
    %v2237 = vunpack.c.h.b16 %v2134
    %v2238 = vunpack.c.l.b16 %v2135
    %v2239 = vunpack.c.h.b16 %v2135
    %v2240 = vunpack.c.l.b16 %v2136
    %v2241 = vunpack.c.h.b16 %v2136
    %v2242 = vunpack.c.l.b16 %v2137
    %v2243 = vunpack.c.h.b16 %v2137
    %v2244 = vunpack.c.l.b16 %v2138
    %v2245 = vunpack.c.h.b16 %v2138
    %v2246 = vunpack.c.l.b16 %v2139
    %v2247 = vunpack.c.h.b16 %v2139
    %v2248 = vunpack.c.l.b16 %v2140
    %v2249 = vunpack.c.h.b16 %v2140
    %v2250 = vunpack.c.l.b16 %v2141
    %v2251 = vunpack.c.h.b16 %v2141
    %v2252 = vunpack.c.l.b16 %v2142
    %v2253 = vunpack.c.h.b16 %v2142
    %v2254 = vunpack.c.l.b16 %v2143
    %v2255 = vunpack.c.h.b16 %v2143
    %v2256 = vunpack.c.l.b16 %v2144
    %v2257 = vunpack.c.h.b16 %v2144
    %v2258 = vunpack.c.l.b16 %v2145
    %v2259 = vunpack.c.h.b16 %v2145
    %v2260 = vunpack.c.l.b16 %v2146
    %v2261 = vunpack.c.h.b16 %v2146
    %v2262 = vunpack.c.l.b16 %v2147
    %v2263 = vunpack.c.h.b16 %v2147
    %v2264 = vunpack.c.l.b16 %v2148
    %v2265 = vunpack.c.h.b16 %v2148
    %v2266 = vunpack.c.l.b16 %v2149
    %v2267 = vunpack.c.h.b16 %v2149
    %v2268 = vpack.c.b16 %v2208, %v2204
    %v2269 = vpack.c.b16 %v2209, %v2205
    %v2270 = vpack.c.b16 %v2210, %v2206
    %v2271 = vpack.c.b16 %v2211, %v2207
    %v2272 = vpack.c.b16 %v2216, %v2212
    %v2273 = vpack.c.b16 %v2217, %v2213
    %v2274 = vpack.c.b16 %v2218, %v2214
    %v2275 = vpack.c.b16 %v2219, %v2215
    %v2276 = vpack.c.b16 %v2224, %v2220
    %v2277 = vpack.c.b16 %v2225, %v2221
    %v2278 = vpack.c.b16 %v2226, %v2222
    %v2279 = vpack.c.b16 %v2227, %v2223
    %v2280 = vpack.c.b16 %v2232, %v2228
    %v2281 = vpack.c.b16 %v2233, %v2229
    %v2282 = vpack.c.b16 %v2234, %v2230
    %v2283 = vpack.c.b16 %v2235, %v2231
    %v2284 = vpack.c.b16 %v2240, %v2236
    %v2285 = vpack.c.b16 %v2241, %v2237
    %v2286 = vpack.c.b16 %v2242, %v2238
    %v2287 = vpack.c.b16 %v2243, %v2239
    %v2288 = vpack.c.b16 %v2248, %v2244
    %v2289 = vpack.c.b16 %v2249, %v2245
    %v2290 = vpack.c.b16 %v2250, %v2246
    %v2291 = vpack.c.b16 %v2251, %v2247
    %v2292 = vpack.c.b16 %v2256, %v2252
    %v2293 = vpack.c.b16 %v2257, %v2253
    %v2294 = vpack.c.b16 %v2258, %v2254
    %v2295 = vpack.c.b16 %v2259, %v2255
    %v2296 = vpack.c.b16 %v2264, %v2260
    %v2297 = vpack.c.b16 %v2265, %v2261
    %v2298 = vpack.c.b16 %v2266, %v2262
    %v2299 = vpack.c.b16 %v2267, %v2263
    %2332 = vmatprep.subr.bf16.mxu0 %v2297
    %2333 = vmatpush1.bf16.msra.mxu0 %v2296
    %2334 = vmatprep.subr.bf16.mxu0 %v2293
    %2335 = vmatpush1.bf16.msra.mxu0 %v2292
    %2336 = vmatprep.subr.bf16.mxu0 %v2289
    %2337 = vmatpush1.bf16.msra.mxu0 %v2288
    %2338 = vmatprep.subr.bf16.mxu0 %v2285
    %2339 = vmatpush1.bf16.msra.mxu0 %v2284
    %2340 = vmatprep.subr.bf16.mxu0 %v2281
    %2341 = vmatpush1.bf16.msra.mxu0 %v2280
    %2342 = vmatprep.subr.bf16.mxu0 %v2277
    %2343 = vmatpush1.bf16.msra.mxu0 %v2276
    %2344 = vmatprep.subr.bf16.mxu0 %v2273
    %2345 = vmatpush1.bf16.msra.mxu0 %v2272
    %2346 = vmatprep.subr.bf16.mxu0 %v2269
    %2347 = vmatpush1.bf16.msra.mxu0 %v2268
    %2348 = vmatprep.subr.bf16.mxu0 0
    %2349 = vmatpush2.bf16.msra.mxu0 0
    %2350 = vmatprep.subr.bf16.mxu0 0
    %2351 = vmatpush2.bf16.msra.mxu0 0
    %2352 = vmatprep.subr.bf16.mxu0 0
    %2353 = vmatpush2.bf16.msra.mxu0 0
    %2354 = vmatprep.subr.bf16.mxu0 0
    %2355 = vmatpush2.bf16.msra.mxu0 0
    %2356 = vmatprep.subr.bf16.mxu0 0
    %2357 = vmatpush2.bf16.msra.mxu0 0
    %2358 = vmatprep.subr.bf16.mxu0 0
    %2359 = vmatpush2.bf16.msra.mxu0 0
    %2360 = vmatprep.subr.bf16.mxu0 0
    %2361 = vmatpush2.bf16.msra.mxu0 0
    %2362 = vmatprep.subr.bf16.mxu0 0
    %2363 = vmatpush2.bf16.msra.mxu0 0
    %2364 = vmatprep.mubr.bf16.mxu0 0
    %2365 = vmatmul.mubr.bf16.gmra.mxu0 %v2117
    %v2366 = vpop.f32.mrf.mxu0
    %v2367 = vadd.f32 %v2155, %v2366
    %v2368 = vpop.f32.mrf.mxu0
    %v2369 = vadd.f32 %v2159, %v2368
    %v2370 = vpop.f32.mrf.mxu0
    %v2371 = vpop.f32.mrf.mxu0
    %2372 = vdwg.mxu0
    %2373 = vmatprep.subr.bf16.mxu0 %v2299
    %2374 = vmatpush1.bf16.msra.mxu0 %v2298
    %2375 = vmatprep.subr.bf16.mxu0 %v2295
    %2376 = vmatpush1.bf16.msra.mxu0 %v2294
    %2377 = vmatprep.subr.bf16.mxu0 %v2291
    %2378 = vmatpush1.bf16.msra.mxu0 %v2290
    %2379 = vmatprep.subr.bf16.mxu0 %v2287
    %2380 = vmatpush1.bf16.msra.mxu0 %v2286
    %2381 = vmatprep.subr.bf16.mxu0 %v2283
    %2382 = vmatpush1.bf16.msra.mxu0 %v2282
    %2383 = vmatprep.subr.bf16.mxu0 %v2279
    %2384 = vmatpush1.bf16.msra.mxu0 %v2278
    %2385 = vmatprep.subr.bf16.mxu0 %v2275
    %2386 = vmatpush1.bf16.msra.mxu0 %v2274
    %2387 = vmatprep.subr.bf16.mxu0 %v2271
    %2388 = vmatpush1.bf16.msra.mxu0 %v2270
    %2389 = vmatprep.subr.bf16.mxu0 0
    %2390 = vmatpush2.bf16.msra.mxu0 0
    %2391 = vmatprep.subr.bf16.mxu0 0
    %2392 = vmatpush2.bf16.msra.mxu0 0
    %2393 = vmatprep.subr.bf16.mxu0 0
    %2394 = vmatpush2.bf16.msra.mxu0 0
    %2395 = vmatprep.subr.bf16.mxu0 0
    %2396 = vmatpush2.bf16.msra.mxu0 0
    %2397 = vmatprep.subr.bf16.mxu0 0
    %2398 = vmatpush2.bf16.msra.mxu0 0
    %2399 = vmatprep.subr.bf16.mxu0 0
    %2400 = vmatpush2.bf16.msra.mxu0 0
    %2401 = vmatprep.subr.bf16.mxu0 0
    %2402 = vmatpush2.bf16.msra.mxu0 0
    %2403 = vmatprep.subr.bf16.mxu0 0
    %2404 = vmatpush2.bf16.msra.mxu0 0
    %2405 = vmatprep.mubr.bf16.mxu0 0
    %2406 = vmatmul.mubr.bf16.gmra.mxu0 %v2117
    %v2407 = vpop.f32.mrf.mxu0
    %v2408 = vadd.f32 %v2163, %v2407
    %v2409 = vpop.f32.mrf.mxu0
    %v2410 = vadd.f32 %v2167, %v2409
    %v2411 = vpop.f32.mrf.mxu0
    %v2412 = vpop.f32.mrf.mxu0
    %2413 = vdwg.mxu0
    %v2414 = vmax.f32 %v2367, 0.0
    %v2415 = vmax.f32 %v2369, 0.0
    %v2416 = vmax.f32 %v2408, 0.0
    %v2417 = vmax.f32 %v2410, 0.0
    %v2418 = vpack.c.bf16 %v2414, %v2414
    %v2419 = vpack.c.bf16 %v2415, %v2415
    %v2420 = vpack.c.bf16 %v2416, %v2416
    %v2421 = vpack.c.bf16 %v2417, %v2417
    %v2422 = vld [vmem:[%s8] sm:$0xff]
    %v2423 = vld [vmem:[%s8 + $0x8] sm:$0xff]
    %v2424 = vld [vmem:[%s8 + $0x10] sm:$0xff]
    %v2425 = vld [vmem:[%s8 + $0x18] sm:$0xf]
    %v2426 = vld [vmem:[%s8 + $0x1c] sm:$0xff]
    %v2427 = vld [vmem:[%s8 + $0x24] sm:$0xff]
    %v2428 = vld [vmem:[%s8 + $0x2c] sm:$0xff]
    %v2429 = vld [vmem:[%s8 + $0x34] sm:$0xf]
    %v2430 = vld [vmem:[%s8 + $0x38] sm:$0xff]
    %v2431 = vld [vmem:[%s8 + $0x40] sm:$0xff]
    %v2432 = vld [vmem:[%s8 + $0x48] sm:$0xff]
    %v2433 = vld [vmem:[%s8 + $0x50] sm:$0xf]
    %v2434 = vld [vmem:[%s8 + $0x54] sm:$0xff]
    %v2435 = vld [vmem:[%s8 + $0x5c] sm:$0xff]
    %v2436 = vld [vmem:[%s8 + $0x64] sm:$0xff]
    %v2437 = vld [vmem:[%s8 + $0x6c] sm:$0xf]
    %v2438 = vld [vmem:[%s8 + $0x70] sm:$0xff]
    %v2439 = vld [vmem:[%s8 + $0x78] sm:$0xff]
    %v2440 = vld [vmem:[%s8 + $0x80] sm:$0xff]
    %v2441 = vld [vmem:[%s8 + $0x88] sm:$0xf]
    %v2442 = vld [vmem:[%s8 + $0x8c] sm:$0xff]
    %v2443 = vld [vmem:[%s8 + $0x94] sm:$0xff]
    %v2444 = vld [vmem:[%s8 + $0x9c] sm:$0xff]
    %v2445 = vld [vmem:[%s8 + $0xa4] sm:$0xf]
    %v2446 = vld [vmem:[%s8 + $0xa8] sm:$0xff]
    %v2447 = vld [vmem:[%s8 + $0xb0] sm:$0xff]
    %v2448 = vld [vmem:[%s8 + $0xb8] sm:$0xff]
    %v2449 = vld [vmem:[%s8 + $0xc0] sm:$0xf]
    %v2450 = vld [vmem:[%s8 + $0xc4] sm:$0xff]
    %v2451 = vld [vmem:[%s8 + $0xcc] sm:$0xff]
    %v2452 = vld [vmem:[%s8 + $0xd4] sm:$0xff]
    %v2453 = vld [vmem:[%s8 + $0xdc] sm:$0xf]
    %v2454 = vld [vmem:[%s8 + $0xe0] sm:$0xff]
    %v2455 = vld [vmem:[%s8 + $0xe8] sm:$0xff]
    %v2456 = vld [vmem:[%s8 + $0xf0] sm:$0xff]
    %v2457 = vld [vmem:[%s8 + $0xf8] sm:$0xf]
    %v2458 = vld [vmem:[%s8 + $0xfc] sm:$0xff]
    %v2459 = vld [vmem:[%s8 + $0x104] sm:$0xff]
    %v2460 = vld [vmem:[%s8 + $0x10c] sm:$0xff]
    %v2461 = vld [vmem:[%s8 + $0x114] sm:$0xf]
    %v2462 = vld [vmem:[%s8 + $0x118] sm:$0xff]
    %v2463 = vld [vmem:[%s8 + $0x120] sm:$0xff]
    %v2464 = vld [vmem:[%s8 + $0x128] sm:$0xff]
    %v2465 = vld [vmem:[%s8 + $0x130] sm:$0xf]
    %v2466 = vld [vmem:[%s8 + $0x134] sm:$0xff]
    %v2467 = vld [vmem:[%s8 + $0x13c] sm:$0xff]
    %v2468 = vld [vmem:[%s8 + $0x144] sm:$0xff]
    %v2469 = vld [vmem:[%s8 + $0x14c] sm:$0xf]
    %v2470 = vld [vmem:[%s8 + $0x150] sm:$0xff]
    %v2471 = vld [vmem:[%s8 + $0x158] sm:$0xff]
    %v2472 = vld [vmem:[%s8 + $0x160] sm:$0xff]
    %v2473 = vld [vmem:[%s8 + $0x168] sm:$0xf]
    %v2474 = vld [vmem:[%s8 + $0x16c] sm:$0xff]
    %v2475 = vld [vmem:[%s8 + $0x174] sm:$0xff]
    %v2476 = vld [vmem:[%s8 + $0x17c] sm:$0xff]
    %v2477 = vld [vmem:[%s8 + $0x184] sm:$0xf]
    %v2478 = vld [vmem:[%s8 + $0x188] sm:$0xff]
    %v2479 = vld [vmem:[%s8 + $0x190] sm:$0xff]
    %v2480 = vld [vmem:[%s8 + $0x198] sm:$0xff]
    %v2481 = vld [vmem:[%s8 + $0x1a0] sm:$0xf]
    %v2482 = vld [vmem:[%s8 + $0x1a4] sm:$0xff]
    %v2483 = vld [vmem:[%s8 + $0x1ac] sm:$0xff]
    %v2484 = vld [vmem:[%s8 + $0x1b4] sm:$0xff]
    %v2485 = vld [vmem:[%s8 + $0x1bc] sm:$0xf]
    %v2486 = vld [vmem:[%s8 + $0x1c0] sm:$0xff]
    %v2487 = vld [vmem:[%s8 + $0x1c8] sm:$0xff]
    %v2488 = vld [vmem:[%s8 + $0x1d0] sm:$0xff]
    %v2489 = vld [vmem:[%s8 + $0x1d8] sm:$0xf]
    %v2490 = vld [vmem:[%s8 + $0x1dc] sm:$0xff]
    %v2491 = vld [vmem:[%s8 + $0x1e4] sm:$0xff]
    %v2492 = vld [vmem:[%s8 + $0x1ec] sm:$0xff]
    %v2493 = vld [vmem:[%s8 + $0x1f4] sm:$0xf]
    %v2494 = vld [vmem:[%s8 + $0x1f8] sm:$0xff]
    %v2495 = vld [vmem:[%s8 + $0x200] sm:$0xff]
    %v2496 = vld [vmem:[%s8 + $0x208] sm:$0xff]
    %v2497 = vld [vmem:[%s8 + $0x210] sm:$0xf]
    %v2498 = vld [vmem:[%s8 + $0x214] sm:$0xff]
    %v2499 = vld [vmem:[%s8 + $0x21c] sm:$0xff]
    %v2500 = vld [vmem:[%s8 + $0x224] sm:$0xff]
    %v2501 = vld [vmem:[%s8 + $0x22c] sm:$0xf]
    %v2502 = vld [vmem:[%s8 + $0x230] sm:$0xff]
    %v2503 = vld [vmem:[%s8 + $0x238] sm:$0xff]
    %v2504 = vld [vmem:[%s8 + $0x240] sm:$0xff]
    %v2505 = vld [vmem:[%s8 + $0x248] sm:$0xf]
    %v2506 = vld [vmem:[%s8 + $0x24c] sm:$0xff]
    %v2507 = vld [vmem:[%s8 + $0x254] sm:$0xff]
    %v2508 = vld [vmem:[%s8 + $0x25c] sm:$0xff]
    %v2509 = vld [vmem:[%s8 + $0x264] sm:$0xf]
    %v2510 = vld [vmem:[%s8 + $0x268] sm:$0xff]
    %v2511 = vld [vmem:[%s8 + $0x270] sm:$0xff]
    %v2512 = vld [vmem:[%s8 + $0x278] sm:$0xff]
    %v2513 = vld [vmem:[%s8 + $0x280] sm:$0xf]
    %v2514 = vld [vmem:[%s8 + $0x284] sm:$0xff]
    %v2515 = vld [vmem:[%s8 + $0x28c] sm:$0xff]
    %v2516 = vld [vmem:[%s8 + $0x294] sm:$0xff]
    %v2517 = vld [vmem:[%s8 + $0x29c] sm:$0xf]
    %v2518 = vld [vmem:[%s8 + $0x2a0] sm:$0xff]
    %v2519 = vld [vmem:[%s8 + $0x2a8] sm:$0xff]
    %v2520 = vld [vmem:[%s8 + $0x2b0] sm:$0xff]
    %v2521 = vld [vmem:[%s8 + $0x2b8] sm:$0xf]
    %v2522 = vld [vmem:[%s8 + $0x2bc] sm:$0xff]
    %v2523 = vld [vmem:[%s8 + $0x2c4] sm:$0xff]
    %v2524 = vld [vmem:[%s8 + $0x2cc] sm:$0xff]
    %v2525 = vld [vmem:[%s8 + $0x2d4] sm:$0xf]
    %v2526 = vld [vmem:[%s8 + $0x2d8] sm:$0xff]
    %v2527 = vld [vmem:[%s8 + $0x2e0] sm:$0xff]
    %v2528 = vld [vmem:[%s8 + $0x2e8] sm:$0xff]
    %v2529 = vld [vmem:[%s8 + $0x2f0] sm:$0xf]
    %v2530 = vld [vmem:[%s8 + $0x2f4] sm:$0xff]
    %v2531 = vld [vmem:[%s8 + $0x2fc] sm:$0xff]
    %v2532 = vld [vmem:[%s8 + $0x304] sm:$0xff]
    %v2533 = vld [vmem:[%s8 + $0x30c] sm:$0xf]
    %v2534 = vld [vmem:[%s8 + $0x310] sm:$0xff]
    %v2535 = vld [vmem:[%s8 + $0x318] sm:$0xff]
    %v2536 = vld [vmem:[%s8 + $0x320] sm:$0xff]
    %v2537 = vld [vmem:[%s8 + $0x328] sm:$0xf]
    %v2538 = vld [vmem:[%s8 + $0x32c] sm:$0xff]
    %v2539 = vld [vmem:[%s8 + $0x334] sm:$0xff]
    %v2540 = vld [vmem:[%s8 + $0x33c] sm:$0xff]
    %v2541 = vld [vmem:[%s8 + $0x344] sm:$0xf]
    %v2542 = vld [vmem:[%s8 + $0x348] sm:$0xff]
    %v2543 = vld [vmem:[%s8 + $0x350] sm:$0xff]
    %v2544 = vld [vmem:[%s8 + $0x358] sm:$0xff]
    %v2545 = vld [vmem:[%s8 + $0x360] sm:$0xf]
    %v2546 = vld [vmem:[%s8 + $0x364] sm:$0xff]
    %v2547 = vld [vmem:[%s8 + $0x36c] sm:$0xff]
    %v2548 = vld [vmem:[%s8 + $0x374] sm:$0xff]
    %v2549 = vld [vmem:[%s8 + $0x37c] sm:$0xf]
    %v2550 = vld [vmem:[%s8 + $0x380] sm:$0xff]
    %v2551 = vld [vmem:[%s8 + $0x388] sm:$0xff]
    %v2552 = vld [vmem:[%s8 + $0x390] sm:$0xff]
    %v2553 = vld [vmem:[%s8 + $0x398] sm:$0xf]
    %v2554 = vld [vmem:[%s8 + $0x39c] sm:$0xff]
    %v2555 = vld [vmem:[%s8 + $0x3a4] sm:$0xff]
    %v2556 = vld [vmem:[%s8 + $0x3ac] sm:$0xff]
    %v2557 = vld [vmem:[%s8 + $0x3b4] sm:$0xf]
    %v2558 = vld [vmem:[%s8 + $0x3b8] sm:$0xff]
    %v2559 = vld [vmem:[%s8 + $0x3c0] sm:$0xff]
    %v2560 = vld [vmem:[%s8 + $0x3c8] sm:$0xff]
    %v2561 = vld [vmem:[%s8 + $0x3d0] sm:$0xf]
    %v2562 = vld [vmem:[%s8 + $0x3d4] sm:$0xff]
    %v2563 = vld [vmem:[%s8 + $0x3dc] sm:$0xff]
    %v2564 = vld [vmem:[%s8 + $0x3e4] sm:$0xff]
    %v2565 = vld [vmem:[%s8 + $0x3ec] sm:$0xf]
    %v2566 = vld [vmem:[%s8 + $0x3f0] sm:$0xff]
    %v2567 = vld [vmem:[%s8 + $0x3f8] sm:$0xff]
    %v2568 = vld [vmem:[%s8 + $0x400] sm:$0xff]
    %v2569 = vld [vmem:[%s8 + $0x408] sm:$0xf]
    %v2570 = vld [vmem:[%s8 + $0x40c] sm:$0xff]
    %v2571 = vld [vmem:[%s8 + $0x414] sm:$0xff]
    %v2572 = vld [vmem:[%s8 + $0x41c] sm:$0xff]
    %v2573 = vld [vmem:[%s8 + $0x424] sm:$0xf]
    %v2574 = vld [vmem:[%s8 + $0x428] sm:$0xff]
    %v2575 = vld [vmem:[%s8 + $0x430] sm:$0xff]
    %v2576 = vld [vmem:[%s8 + $0x438] sm:$0xff]
    %v2577 = vld [vmem:[%s8 + $0x440] sm:$0xf]
    %v2578 = vld [vmem:[%s8 + $0x444] sm:$0xff]
    %v2579 = vld [vmem:[%s8 + $0x44c] sm:$0xff]
    %v2580 = vld [vmem:[%s8 + $0x454] sm:$0xff]
    %v2581 = vld [vmem:[%s8 + $0x45c] sm:$0xf]
    %v2582 = vld [vmem:[%s8 + $0x460] sm:$0xff]
    %v2583 = vld [vmem:[%s8 + $0x468] sm:$0xff]
    %v2584 = vld [vmem:[%s8 + $0x470] sm:$0xff]
    %v2585 = vld [vmem:[%s8 + $0x478] sm:$0xf]
    %v2586 = vld [vmem:[%s8 + $0x47c] sm:$0xff]
    %v2587 = vld [vmem:[%s8 + $0x484] sm:$0xff]
    %v2588 = vld [vmem:[%s8 + $0x48c] sm:$0xff]
    %v2589 = vld [vmem:[%s8 + $0x494] sm:$0xf]
    %v2590 = vld [vmem:[%s8 + $0x498] sm:$0xff]
    %v2591 = vld [vmem:[%s8 + $0x4a0] sm:$0xff]
    %v2592 = vld [vmem:[%s8 + $0x4a8] sm:$0xff]
    %v2593 = vld [vmem:[%s8 + $0x4b0] sm:$0xf]
    %v2594 = vld [vmem:[%s8 + $0x4b4] sm:$0xff]
    %v2595 = vld [vmem:[%s8 + $0x4bc] sm:$0xff]
    %v2596 = vld [vmem:[%s8 + $0x4c4] sm:$0xff]
    %v2597 = vld [vmem:[%s8 + $0x4cc] sm:$0xf]
    %v2598 = vld [vmem:[%s8 + $0x4d0] sm:$0xff]
    %v2599 = vld [vmem:[%s8 + $0x4d8] sm:$0xff]
    %v2600 = vld [vmem:[%s8 + $0x4e0] sm:$0xff]
    %v2601 = vld [vmem:[%s8 + $0x4e8] sm:$0xf]
    %v2602 = vld [vmem:[%s8 + $0x4ec] sm:$0xff]
    %v2603 = vld [vmem:[%s8 + $0x4f4] sm:$0xff]
    %v2604 = vld [vmem:[%s8 + $0x4fc] sm:$0xff]
    %v2605 = vld [vmem:[%s8 + $0x504] sm:$0xf]
    %v2606 = vld [vmem:[%s8 + $0x508] sm:$0xff]
    %v2607 = vld [vmem:[%s8 + $0x510] sm:$0xff]
    %v2608 = vld [vmem:[%s8 + $0x518] sm:$0xff]
    %v2609 = vld [vmem:[%s8 + $0x520] sm:$0xf]
    %v2610 = vld [vmem:[%s8 + $0x524] sm:$0xff]
    %v2611 = vld [vmem:[%s8 + $0x52c] sm:$0xff]
    %v2612 = vld [vmem:[%s8 + $0x534] sm:$0xff]
    %v2613 = vld [vmem:[%s8 + $0x53c] sm:$0xf]
    %v2614 = vld [vmem:[%s8 + $0x540] sm:$0xff]
    %v2615 = vld [vmem:[%s8 + $0x548] sm:$0xff]
    %v2616 = vld [vmem:[%s8 + $0x550] sm:$0xff]
    %v2617 = vld [vmem:[%s8 + $0x558] sm:$0xf]
    %v2618 = vld [vmem:[%s8 + $0x55c] sm:$0xff]
    %v2619 = vld [vmem:[%s8 + $0x564] sm:$0xff]
    %v2620 = vld [vmem:[%s8 + $0x56c] sm:$0xff]
    %v2621 = vld [vmem:[%s8 + $0x574] sm:$0xf]
    %v2622 = vld [vmem:[%s8 + $0x578] sm:$0xff]
    %v2623 = vld [vmem:[%s8 + $0x580] sm:$0xff]
    %v2624 = vld [vmem:[%s8 + $0x588] sm:$0xff]
    %v2625 = vld [vmem:[%s8 + $0x590] sm:$0xf]
    %v2626 = vld [vmem:[%s8 + $0x594] sm:$0xff]
    %v2627 = vld [vmem:[%s8 + $0x59c] sm:$0xff]
    %v2628 = vld [vmem:[%s8 + $0x5a4] sm:$0xff]
    %v2629 = vld [vmem:[%s8 + $0x5ac] sm:$0xf]
    %v2630 = vld [vmem:[%s8 + $0x5b0] sm:$0xff]
    %v2631 = vld [vmem:[%s8 + $0x5b8] sm:$0xff]
    %v2632 = vld [vmem:[%s8 + $0x5c0] sm:$0xff]
    %v2633 = vld [vmem:[%s8 + $0x5c8] sm:$0xf]
    %v2634 = vld [vmem:[%s8 + $0x5cc] sm:$0xff]
    %v2635 = vld [vmem:[%s8 + $0x5d4] sm:$0xff]
    %v2636 = vld [vmem:[%s8 + $0x5dc] sm:$0xff]
    %v2637 = vld [vmem:[%s8 + $0x5e4] sm:$0xf]
    %v2638 = vld [vmem:[%s8 + $0x5e8] sm:$0xff]
    %v2639 = vld [vmem:[%s8 + $0x5f0] sm:$0xff]
    %v2640 = vld [vmem:[%s8 + $0x5f8] sm:$0xff]
    %v2641 = vld [vmem:[%s8 + $0x600] sm:$0xf]
    %v2642 = vld [vmem:[%s8 + $0x604] sm:$0xff]
    %v2643 = vld [vmem:[%s8 + $0x60c] sm:$0xff]
    %v2644 = vld [vmem:[%s8 + $0x614] sm:$0xff]
    %v2645 = vld [vmem:[%s8 + $0x61c] sm:$0xf]
    %v2646 = vld [vmem:[%s8 + $0x620] sm:$0xff]
    %v2647 = vld [vmem:[%s8 + $0x628] sm:$0xff]
    %v2648 = vld [vmem:[%s8 + $0x630] sm:$0xff]
    %v2649 = vld [vmem:[%s8 + $0x638] sm:$0xf]
    %v2650 = vld [vmem:[%s8 + $0x63c] sm:$0xff]
    %v2651 = vld [vmem:[%s8 + $0x644] sm:$0xff]
    %v2652 = vld [vmem:[%s8 + $0x64c] sm:$0xff]
    %v2653 = vld [vmem:[%s8 + $0x654] sm:$0xf]
    %v2654 = vld [vmem:[%s8 + $0x658] sm:$0xff]
    %v2655 = vld [vmem:[%s8 + $0x660] sm:$0xff]
    %v2656 = vld [vmem:[%s8 + $0x668] sm:$0xff]
    %v2657 = vld [vmem:[%s8 + $0x670] sm:$0xf]
    %v2658 = vld [vmem:[%s8 + $0x674] sm:$0xff]
    %v2659 = vld [vmem:[%s8 + $0x67c] sm:$0xff]
    %v2660 = vld [vmem:[%s8 + $0x684] sm:$0xff]
    %v2661 = vld [vmem:[%s8 + $0x68c] sm:$0xf]
    %v2662 = vld [vmem:[%s8 + $0x690] sm:$0xff]
    %v2663 = vld [vmem:[%s8 + $0x698] sm:$0xff]
    %v2664 = vld [vmem:[%s8 + $0x6a0] sm:$0xff]
    %v2665 = vld [vmem:[%s8 + $0x6a8] sm:$0xf]
    %v2666 = vld [vmem:[%s8 + $0x6ac] sm:$0xff]
    %v2667 = vld [vmem:[%s8 + $0x6b4] sm:$0xff]
    %v2668 = vld [vmem:[%s8 + $0x6bc] sm:$0xff]
    %v2669 = vld [vmem:[%s8 + $0x6c4] sm:$0xf]
    %v2670 = vld [vmem:[%s8 + $0x6c8] sm:$0xff]
    %v2671 = vld [vmem:[%s8 + $0x6d0] sm:$0xff]
    %v2672 = vld [vmem:[%s8 + $0x6d8] sm:$0xff]
    %v2673 = vld [vmem:[%s8 + $0x6e0] sm:$0xf]
    %v2674 = vld [vmem:[%s8 + $0x6e4] sm:$0xff]
    %v2675 = vld [vmem:[%s8 + $0x6ec] sm:$0xff]
    %v2676 = vld [vmem:[%s8 + $0x6f4] sm:$0xff]
    %v2677 = vld [vmem:[%s8 + $0x6fc] sm:$0xf]
    %v2678 = vld [vmem:[%s9] sm:$0x7f]
    %v2680 = vlaneseq
    %v2681 = vshrl.u32 %v2680, 7
    %v2682 = vsub.s32 0, %v2681
    %v2683 = vrot.slane %v2678, %v2682
    %v2684 = vlaneseq
    %v2685 = vshrl.u32 %v2684, 7
    %v2686 = vsub.s32 1, %v2685
    %v2687 = vrot.slane %v2678, %v2686
    %v2688 = vlaneseq
    %v2689 = vshrl.u32 %v2688, 7
    %v2690 = vsub.s32 2, %v2689
    %v2691 = vrot.slane %v2678, %v2690
    %v2692 = vlaneseq
    %v2693 = vshrl.u32 %v2692, 7
    %v2694 = vsub.s32 3, %v2693
    %v2695 = vrot.slane %v2678, %v2694
    %v2696 = vlaneseq
    %v2697 = vshrl.u32 %v2696, 7
    %v2698 = vsub.s32 4, %v2697
    %v2699 = vrot.slane %v2678, %v2698
    %v2700 = vlaneseq
    %v2701 = vshrl.u32 %v2700, 7
    %v2702 = vsub.s32 5, %v2701
    %v2703 = vrot.slane %v2678, %v2702
    %v2704 = vlaneseq
    %v2705 = vshrl.u32 %v2704, 7
    %v2706 = vsub.s32 6, %v2705
    %v2707 = vrot.slane %v2678, %v2706
    %v2971 = vunpack.c.l.b16 %v2422
    %v2972 = vunpack.c.h.b16 %v2422
    %v2973 = vunpack.c.l.b16 %v2423
    %v2974 = vunpack.c.h.b16 %v2423
    %v2975 = vunpack.c.l.b16 %v2424
    %v2976 = vunpack.c.h.b16 %v2424
    %v2977 = vunpack.c.l.b16 %v2425
    %v2978 = vunpack.c.l.b16 %v2426
    %v2979 = vunpack.c.h.b16 %v2426
    %v2980 = vunpack.c.l.b16 %v2427
    %v2981 = vunpack.c.h.b16 %v2427
    %v2982 = vunpack.c.l.b16 %v2428
    %v2983 = vunpack.c.h.b16 %v2428
    %v2984 = vunpack.c.l.b16 %v2429
    %v2985 = vunpack.c.l.b16 %v2430
    %v2986 = vunpack.c.h.b16 %v2430
    %v2987 = vunpack.c.l.b16 %v2431
    %v2988 = vunpack.c.h.b16 %v2431
    %v2989 = vunpack.c.l.b16 %v2432
    %v2990 = vunpack.c.h.b16 %v2432
    %v2991 = vunpack.c.l.b16 %v2433
    %v2992 = vunpack.c.l.b16 %v2434
    %v2993 = vunpack.c.h.b16 %v2434
    %v2994 = vunpack.c.l.b16 %v2435
    %v2995 = vunpack.c.h.b16 %v2435
    %v2996 = vunpack.c.l.b16 %v2436
    %v2997 = vunpack.c.h.b16 %v2436
    %v2998 = vunpack.c.l.b16 %v2437
    %v2999 = vunpack.c.l.b16 %v2438
    %v3000 = vunpack.c.h.b16 %v2438
    %v3001 = vunpack.c.l.b16 %v2439
    %v3002 = vunpack.c.h.b16 %v2439
    %v3003 = vunpack.c.l.b16 %v2440
    %v3004 = vunpack.c.h.b16 %v2440
    %v3005 = vunpack.c.l.b16 %v2441
    %v3006 = vunpack.c.l.b16 %v2442
    %v3007 = vunpack.c.h.b16 %v2442
    %v3008 = vunpack.c.l.b16 %v2443
    %v3009 = vunpack.c.h.b16 %v2443
    %v3010 = vunpack.c.l.b16 %v2444
    %v3011 = vunpack.c.h.b16 %v2444
    %v3012 = vunpack.c.l.b16 %v2445
    %v3013 = vunpack.c.l.b16 %v2446
    %v3014 = vunpack.c.h.b16 %v2446
    %v3015 = vunpack.c.l.b16 %v2447
    %v3016 = vunpack.c.h.b16 %v2447
    %v3017 = vunpack.c.l.b16 %v2448
    %v3018 = vunpack.c.h.b16 %v2448
    %v3019 = vunpack.c.l.b16 %v2449
    %v3020 = vunpack.c.l.b16 %v2450
    %v3021 = vunpack.c.h.b16 %v2450
    %v3022 = vunpack.c.l.b16 %v2451
    %v3023 = vunpack.c.h.b16 %v2451
    %v3024 = vunpack.c.l.b16 %v2452
    %v3025 = vunpack.c.h.b16 %v2452
    %v3026 = vunpack.c.l.b16 %v2453
    %v3027 = vunpack.c.l.b16 %v2454
    %v3028 = vunpack.c.h.b16 %v2454
    %v3029 = vunpack.c.l.b16 %v2455
    %v3030 = vunpack.c.h.b16 %v2455
    %v3031 = vunpack.c.l.b16 %v2456
    %v3032 = vunpack.c.h.b16 %v2456
    %v3033 = vunpack.c.l.b16 %v2457
    %v3034 = vunpack.c.l.b16 %v2458
    %v3035 = vunpack.c.h.b16 %v2458
    %v3036 = vunpack.c.l.b16 %v2459
    %v3037 = vunpack.c.h.b16 %v2459
    %v3038 = vunpack.c.l.b16 %v2460
    %v3039 = vunpack.c.h.b16 %v2460
    %v3040 = vunpack.c.l.b16 %v2461
    %v3041 = vunpack.c.l.b16 %v2462
    %v3042 = vunpack.c.h.b16 %v2462
    %v3043 = vunpack.c.l.b16 %v2463
    %v3044 = vunpack.c.h.b16 %v2463
    %v3045 = vunpack.c.l.b16 %v2464
    %v3046 = vunpack.c.h.b16 %v2464
    %v3047 = vunpack.c.l.b16 %v2465
    %v3048 = vunpack.c.l.b16 %v2466
    %v3049 = vunpack.c.h.b16 %v2466
    %v3050 = vunpack.c.l.b16 %v2467
    %v3051 = vunpack.c.h.b16 %v2467
    %v3052 = vunpack.c.l.b16 %v2468
    %v3053 = vunpack.c.h.b16 %v2468
    %v3054 = vunpack.c.l.b16 %v2469
    %v3055 = vunpack.c.l.b16 %v2470
    %v3056 = vunpack.c.h.b16 %v2470
    %v3057 = vunpack.c.l.b16 %v2471
    %v3058 = vunpack.c.h.b16 %v2471
    %v3059 = vunpack.c.l.b16 %v2472
    %v3060 = vunpack.c.h.b16 %v2472
    %v3061 = vunpack.c.l.b16 %v2473
    %v3062 = vunpack.c.l.b16 %v2474
    %v3063 = vunpack.c.h.b16 %v2474
    %v3064 = vunpack.c.l.b16 %v2475
    %v3065 = vunpack.c.h.b16 %v2475
    %v3066 = vunpack.c.l.b16 %v2476
    %v3067 = vunpack.c.h.b16 %v2476
    %v3068 = vunpack.c.l.b16 %v2477
    %v3069 = vunpack.c.l.b16 %v2478
    %v3070 = vunpack.c.h.b16 %v2478
    %v3071 = vunpack.c.l.b16 %v2479
    %v3072 = vunpack.c.h.b16 %v2479
    %v3073 = vunpack.c.l.b16 %v2480
    %v3074 = vunpack.c.h.b16 %v2480
    %v3075 = vunpack.c.l.b16 %v2481
    %v3076 = vunpack.c.l.b16 %v2482
    %v3077 = vunpack.c.h.b16 %v2482
    %v3078 = vunpack.c.l.b16 %v2483
    %v3079 = vunpack.c.h.b16 %v2483
    %v3080 = vunpack.c.l.b16 %v2484
    %v3081 = vunpack.c.h.b16 %v2484
    %v3082 = vunpack.c.l.b16 %v2485
    %v3083 = vunpack.c.l.b16 %v2486
    %v3084 = vunpack.c.h.b16 %v2486
    %v3085 = vunpack.c.l.b16 %v2487
    %v3086 = vunpack.c.h.b16 %v2487
    %v3087 = vunpack.c.l.b16 %v2488
    %v3088 = vunpack.c.h.b16 %v2488
    %v3089 = vunpack.c.l.b16 %v2489
    %v3090 = vunpack.c.l.b16 %v2490
    %v3091 = vunpack.c.h.b16 %v2490
    %v3092 = vunpack.c.l.b16 %v2491
    %v3093 = vunpack.c.h.b16 %v2491
    %v3094 = vunpack.c.l.b16 %v2492
    %v3095 = vunpack.c.h.b16 %v2492
    %v3096 = vunpack.c.l.b16 %v2493
    %v3097 = vunpack.c.l.b16 %v2494
    %v3098 = vunpack.c.h.b16 %v2494
    %v3099 = vunpack.c.l.b16 %v2495
    %v3100 = vunpack.c.h.b16 %v2495
    %v3101 = vunpack.c.l.b16 %v2496
    %v3102 = vunpack.c.h.b16 %v2496
    %v3103 = vunpack.c.l.b16 %v2497
    %v3104 = vunpack.c.l.b16 %v2498
    %v3105 = vunpack.c.h.b16 %v2498
    %v3106 = vunpack.c.l.b16 %v2499
    %v3107 = vunpack.c.h.b16 %v2499
    %v3108 = vunpack.c.l.b16 %v2500
    %v3109 = vunpack.c.h.b16 %v2500
    %v3110 = vunpack.c.l.b16 %v2501
    %v3111 = vunpack.c.l.b16 %v2502
    %v3112 = vunpack.c.h.b16 %v2502
    %v3113 = vunpack.c.l.b16 %v2503
    %v3114 = vunpack.c.h.b16 %v2503
    %v3115 = vunpack.c.l.b16 %v2504
    %v3116 = vunpack.c.h.b16 %v2504
    %v3117 = vunpack.c.l.b16 %v2505
    %v3118 = vunpack.c.l.b16 %v2506
    %v3119 = vunpack.c.h.b16 %v2506
    %v3120 = vunpack.c.l.b16 %v2507
    %v3121 = vunpack.c.h.b16 %v2507
    %v3122 = vunpack.c.l.b16 %v2508
    %v3123 = vunpack.c.h.b16 %v2508
    %v3124 = vunpack.c.l.b16 %v2509
    %v3125 = vunpack.c.l.b16 %v2510
    %v3126 = vunpack.c.h.b16 %v2510
    %v3127 = vunpack.c.l.b16 %v2511
    %v3128 = vunpack.c.h.b16 %v2511
    %v3129 = vunpack.c.l.b16 %v2512
    %v3130 = vunpack.c.h.b16 %v2512
    %v3131 = vunpack.c.l.b16 %v2513
    %v3132 = vunpack.c.l.b16 %v2514
    %v3133 = vunpack.c.h.b16 %v2514
    %v3134 = vunpack.c.l.b16 %v2515
    %v3135 = vunpack.c.h.b16 %v2515
    %v3136 = vunpack.c.l.b16 %v2516
    %v3137 = vunpack.c.h.b16 %v2516
    %v3138 = vunpack.c.l.b16 %v2517
    %v3139 = vunpack.c.l.b16 %v2518
    %v3140 = vunpack.c.h.b16 %v2518
    %v3141 = vunpack.c.l.b16 %v2519
    %v3142 = vunpack.c.h.b16 %v2519
    %v3143 = vunpack.c.l.b16 %v2520
    %v3144 = vunpack.c.h.b16 %v2520
    %v3145 = vunpack.c.l.b16 %v2521
    %v3146 = vunpack.c.l.b16 %v2522
    %v3147 = vunpack.c.h.b16 %v2522
    %v3148 = vunpack.c.l.b16 %v2523
    %v3149 = vunpack.c.h.b16 %v2523
    %v3150 = vunpack.c.l.b16 %v2524
    %v3151 = vunpack.c.h.b16 %v2524
    %v3152 = vunpack.c.l.b16 %v2525
    %v3153 = vunpack.c.l.b16 %v2526
    %v3154 = vunpack.c.h.b16 %v2526
    %v3155 = vunpack.c.l.b16 %v2527
    %v3156 = vunpack.c.h.b16 %v2527
    %v3157 = vunpack.c.l.b16 %v2528
    %v3158 = vunpack.c.h.b16 %v2528
    %v3159 = vunpack.c.l.b16 %v2529
    %v3160 = vunpack.c.l.b16 %v2530
    %v3161 = vunpack.c.h.b16 %v2530
    %v3162 = vunpack.c.l.b16 %v2531
    %v3163 = vunpack.c.h.b16 %v2531
    %v3164 = vunpack.c.l.b16 %v2532
    %v3165 = vunpack.c.h.b16 %v2532
    %v3166 = vunpack.c.l.b16 %v2533
    %v3167 = vunpack.c.l.b16 %v2534
    %v3168 = vunpack.c.h.b16 %v2534
    %v3169 = vunpack.c.l.b16 %v2535
    %v3170 = vunpack.c.h.b16 %v2535
    %v3171 = vunpack.c.l.b16 %v2536
    %v3172 = vunpack.c.h.b16 %v2536
    %v3173 = vunpack.c.l.b16 %v2537
    %v3174 = vunpack.c.l.b16 %v2538
    %v3175 = vunpack.c.h.b16 %v2538
    %v3176 = vunpack.c.l.b16 %v2539
    %v3177 = vunpack.c.h.b16 %v2539
    %v3178 = vunpack.c.l.b16 %v2540
    %v3179 = vunpack.c.h.b16 %v2540
    %v3180 = vunpack.c.l.b16 %v2541
    %v3181 = vunpack.c.l.b16 %v2542
    %v3182 = vunpack.c.h.b16 %v2542
    %v3183 = vunpack.c.l.b16 %v2543
    %v3184 = vunpack.c.h.b16 %v2543
    %v3185 = vunpack.c.l.b16 %v2544
    %v3186 = vunpack.c.h.b16 %v2544
    %v3187 = vunpack.c.l.b16 %v2545
    %v3188 = vunpack.c.l.b16 %v2546
    %v3189 = vunpack.c.h.b16 %v2546
    %v3190 = vunpack.c.l.b16 %v2547
    %v3191 = vunpack.c.h.b16 %v2547
    %v3192 = vunpack.c.l.b16 %v2548
    %v3193 = vunpack.c.h.b16 %v2548
    %v3194 = vunpack.c.l.b16 %v2549
    %v3195 = vunpack.c.l.b16 %v2550
    %v3196 = vunpack.c.h.b16 %v2550
    %v3197 = vunpack.c.l.b16 %v2551
    %v3198 = vunpack.c.h.b16 %v2551
    %v3199 = vunpack.c.l.b16 %v2552
    %v3200 = vunpack.c.h.b16 %v2552
    %v3201 = vunpack.c.l.b16 %v2553
    %v3202 = vunpack.c.l.b16 %v2554
    %v3203 = vunpack.c.h.b16 %v2554
    %v3204 = vunpack.c.l.b16 %v2555
    %v3205 = vunpack.c.h.b16 %v2555
    %v3206 = vunpack.c.l.b16 %v2556
    %v3207 = vunpack.c.h.b16 %v2556
    %v3208 = vunpack.c.l.b16 %v2557
    %v3209 = vunpack.c.l.b16 %v2558
    %v3210 = vunpack.c.h.b16 %v2558
    %v3211 = vunpack.c.l.b16 %v2559
    %v3212 = vunpack.c.h.b16 %v2559
    %v3213 = vunpack.c.l.b16 %v2560
    %v3214 = vunpack.c.h.b16 %v2560
    %v3215 = vunpack.c.l.b16 %v2561
    %v3216 = vunpack.c.l.b16 %v2562
    %v3217 = vunpack.c.h.b16 %v2562
    %v3218 = vunpack.c.l.b16 %v2563
    %v3219 = vunpack.c.h.b16 %v2563
    %v3220 = vunpack.c.l.b16 %v2564
    %v3221 = vunpack.c.h.b16 %v2564
    %v3222 = vunpack.c.l.b16 %v2565
    %v3223 = vunpack.c.l.b16 %v2566
    %v3224 = vunpack.c.h.b16 %v2566
    %v3225 = vunpack.c.l.b16 %v2567
    %v3226 = vunpack.c.h.b16 %v2567
    %v3227 = vunpack.c.l.b16 %v2568
    %v3228 = vunpack.c.h.b16 %v2568
    %v3229 = vunpack.c.l.b16 %v2569
    %v3230 = vunpack.c.l.b16 %v2570
    %v3231 = vunpack.c.h.b16 %v2570
    %v3232 = vunpack.c.l.b16 %v2571
    %v3233 = vunpack.c.h.b16 %v2571
    %v3234 = vunpack.c.l.b16 %v2572
    %v3235 = vunpack.c.h.b16 %v2572
    %v3236 = vunpack.c.l.b16 %v2573
    %v3237 = vunpack.c.l.b16 %v2574
    %v3238 = vunpack.c.h.b16 %v2574
    %v3239 = vunpack.c.l.b16 %v2575
    %v3240 = vunpack.c.h.b16 %v2575
    %v3241 = vunpack.c.l.b16 %v2576
    %v3242 = vunpack.c.h.b16 %v2576
    %v3243 = vunpack.c.l.b16 %v2577
    %v3244 = vunpack.c.l.b16 %v2578
    %v3245 = vunpack.c.h.b16 %v2578
    %v3246 = vunpack.c.l.b16 %v2579
    %v3247 = vunpack.c.h.b16 %v2579
    %v3248 = vunpack.c.l.b16 %v2580
    %v3249 = vunpack.c.h.b16 %v2580
    %v3250 = vunpack.c.l.b16 %v2581
    %v3251 = vunpack.c.l.b16 %v2582
    %v3252 = vunpack.c.h.b16 %v2582
    %v3253 = vunpack.c.l.b16 %v2583
    %v3254 = vunpack.c.h.b16 %v2583
    %v3255 = vunpack.c.l.b16 %v2584
    %v3256 = vunpack.c.h.b16 %v2584
    %v3257 = vunpack.c.l.b16 %v2585
    %v3258 = vunpack.c.l.b16 %v2586
    %v3259 = vunpack.c.h.b16 %v2586
    %v3260 = vunpack.c.l.b16 %v2587
    %v3261 = vunpack.c.h.b16 %v2587
    %v3262 = vunpack.c.l.b16 %v2588
    %v3263 = vunpack.c.h.b16 %v2588
    %v3264 = vunpack.c.l.b16 %v2589
    %v3265 = vunpack.c.l.b16 %v2590
    %v3266 = vunpack.c.h.b16 %v2590
    %v3267 = vunpack.c.l.b16 %v2591
    %v3268 = vunpack.c.h.b16 %v2591
    %v3269 = vunpack.c.l.b16 %v2592
    %v3270 = vunpack.c.h.b16 %v2592
    %v3271 = vunpack.c.l.b16 %v2593
    %v3272 = vunpack.c.l.b16 %v2594
    %v3273 = vunpack.c.h.b16 %v2594
    %v3274 = vunpack.c.l.b16 %v2595
    %v3275 = vunpack.c.h.b16 %v2595
    %v3276 = vunpack.c.l.b16 %v2596
    %v3277 = vunpack.c.h.b16 %v2596
    %v3278 = vunpack.c.l.b16 %v2597
    %v3279 = vunpack.c.l.b16 %v2598
    %v3280 = vunpack.c.h.b16 %v2598
    %v3281 = vunpack.c.l.b16 %v2599
    %v3282 = vunpack.c.h.b16 %v2599
    %v3283 = vunpack.c.l.b16 %v2600
    %v3284 = vunpack.c.h.b16 %v2600
    %v3285 = vunpack.c.l.b16 %v2601
    %v3286 = vunpack.c.l.b16 %v2602
    %v3287 = vunpack.c.h.b16 %v2602
    %v3288 = vunpack.c.l.b16 %v2603
    %v3289 = vunpack.c.h.b16 %v2603
    %v3290 = vunpack.c.l.b16 %v2604
    %v3291 = vunpack.c.h.b16 %v2604
    %v3292 = vunpack.c.l.b16 %v2605
    %v3293 = vunpack.c.l.b16 %v2606
    %v3294 = vunpack.c.h.b16 %v2606
    %v3295 = vunpack.c.l.b16 %v2607
    %v3296 = vunpack.c.h.b16 %v2607
    %v3297 = vunpack.c.l.b16 %v2608
    %v3298 = vunpack.c.h.b16 %v2608
    %v3299 = vunpack.c.l.b16 %v2609
    %v3300 = vunpack.c.l.b16 %v2610
    %v3301 = vunpack.c.h.b16 %v2610
    %v3302 = vunpack.c.l.b16 %v2611
    %v3303 = vunpack.c.h.b16 %v2611
    %v3304 = vunpack.c.l.b16 %v2612
    %v3305 = vunpack.c.h.b16 %v2612
    %v3306 = vunpack.c.l.b16 %v2613
    %v3307 = vunpack.c.l.b16 %v2614
    %v3308 = vunpack.c.h.b16 %v2614
    %v3309 = vunpack.c.l.b16 %v2615
    %v3310 = vunpack.c.h.b16 %v2615
    %v3311 = vunpack.c.l.b16 %v2616
    %v3312 = vunpack.c.h.b16 %v2616
    %v3313 = vunpack.c.l.b16 %v2617
    %v3314 = vunpack.c.l.b16 %v2618
    %v3315 = vunpack.c.h.b16 %v2618
    %v3316 = vunpack.c.l.b16 %v2619
    %v3317 = vunpack.c.h.b16 %v2619
    %v3318 = vunpack.c.l.b16 %v2620
    %v3319 = vunpack.c.h.b16 %v2620
    %v3320 = vunpack.c.l.b16 %v2621
    %v3321 = vunpack.c.l.b16 %v2622
    %v3322 = vunpack.c.h.b16 %v2622
    %v3323 = vunpack.c.l.b16 %v2623
    %v3324 = vunpack.c.h.b16 %v2623
    %v3325 = vunpack.c.l.b16 %v2624
    %v3326 = vunpack.c.h.b16 %v2624
    %v3327 = vunpack.c.l.b16 %v2625
    %v3328 = vunpack.c.l.b16 %v2626
    %v3329 = vunpack.c.h.b16 %v2626
    %v3330 = vunpack.c.l.b16 %v2627
    %v3331 = vunpack.c.h.b16 %v2627
    %v3332 = vunpack.c.l.b16 %v2628
    %v3333 = vunpack.c.h.b16 %v2628
    %v3334 = vunpack.c.l.b16 %v2629
    %v3335 = vunpack.c.l.b16 %v2630
    %v3336 = vunpack.c.h.b16 %v2630
    %v3337 = vunpack.c.l.b16 %v2631
    %v3338 = vunpack.c.h.b16 %v2631
    %v3339 = vunpack.c.l.b16 %v2632
    %v3340 = vunpack.c.h.b16 %v2632
    %v3341 = vunpack.c.l.b16 %v2633
    %v3342 = vunpack.c.l.b16 %v2634
    %v3343 = vunpack.c.h.b16 %v2634
    %v3344 = vunpack.c.l.b16 %v2635
    %v3345 = vunpack.c.h.b16 %v2635
    %v3346 = vunpack.c.l.b16 %v2636
    %v3347 = vunpack.c.h.b16 %v2636
    %v3348 = vunpack.c.l.b16 %v2637
    %v3349 = vunpack.c.l.b16 %v2638
    %v3350 = vunpack.c.h.b16 %v2638
    %v3351 = vunpack.c.l.b16 %v2639
    %v3352 = vunpack.c.h.b16 %v2639
    %v3353 = vunpack.c.l.b16 %v2640
    %v3354 = vunpack.c.h.b16 %v2640
    %v3355 = vunpack.c.l.b16 %v2641
    %v3356 = vunpack.c.l.b16 %v2642
    %v3357 = vunpack.c.h.b16 %v2642
    %v3358 = vunpack.c.l.b16 %v2643
    %v3359 = vunpack.c.h.b16 %v2643
    %v3360 = vunpack.c.l.b16 %v2644
    %v3361 = vunpack.c.h.b16 %v2644
    %v3362 = vunpack.c.l.b16 %v2645
    %v3363 = vunpack.c.l.b16 %v2646
    %v3364 = vunpack.c.h.b16 %v2646
    %v3365 = vunpack.c.l.b16 %v2647
    %v3366 = vunpack.c.h.b16 %v2647
    %v3367 = vunpack.c.l.b16 %v2648
    %v3368 = vunpack.c.h.b16 %v2648
    %v3369 = vunpack.c.l.b16 %v2649
    %v3370 = vunpack.c.l.b16 %v2650
    %v3371 = vunpack.c.h.b16 %v2650
    %v3372 = vunpack.c.l.b16 %v2651
    %v3373 = vunpack.c.h.b16 %v2651
    %v3374 = vunpack.c.l.b16 %v2652
    %v3375 = vunpack.c.h.b16 %v2652
    %v3376 = vunpack.c.l.b16 %v2653
    %v3377 = vunpack.c.l.b16 %v2654
    %v3378 = vunpack.c.h.b16 %v2654
    %v3379 = vunpack.c.l.b16 %v2655
    %v3380 = vunpack.c.h.b16 %v2655
    %v3381 = vunpack.c.l.b16 %v2656
    %v3382 = vunpack.c.h.b16 %v2656
    %v3383 = vunpack.c.l.b16 %v2657
    %v3384 = vunpack.c.l.b16 %v2658
    %v3385 = vunpack.c.h.b16 %v2658
    %v3386 = vunpack.c.l.b16 %v2659
    %v3387 = vunpack.c.h.b16 %v2659
    %v3388 = vunpack.c.l.b16 %v2660
    %v3389 = vunpack.c.h.b16 %v2660
    %v3390 = vunpack.c.l.b16 %v2661
    %v3391 = vunpack.c.l.b16 %v2662
    %v3392 = vunpack.c.h.b16 %v2662
    %v3393 = vunpack.c.l.b16 %v2663
    %v3394 = vunpack.c.h.b16 %v2663
    %v3395 = vunpack.c.l.b16 %v2664
    %v3396 = vunpack.c.h.b16 %v2664
    %v3397 = vunpack.c.l.b16 %v2665
    %v3398 = vunpack.c.l.b16 %v2666
    %v3399 = vunpack.c.h.b16 %v2666
    %v3400 = vunpack.c.l.b16 %v2667
    %v3401 = vunpack.c.h.b16 %v2667
    %v3402 = vunpack.c.l.b16 %v2668
    %v3403 = vunpack.c.h.b16 %v2668
    %v3404 = vunpack.c.l.b16 %v2669
    %v3405 = vunpack.c.l.b16 %v2670
    %v3406 = vunpack.c.h.b16 %v2670
    %v3407 = vunpack.c.l.b16 %v2671
    %v3408 = vunpack.c.h.b16 %v2671
    %v3409 = vunpack.c.l.b16 %v2672
    %v3410 = vunpack.c.h.b16 %v2672
    %v3411 = vunpack.c.l.b16 %v2673
    %v3412 = vunpack.c.l.b16 %v2674
    %v3413 = vunpack.c.h.b16 %v2674
    %v3414 = vunpack.c.l.b16 %v2675
    %v3415 = vunpack.c.h.b16 %v2675
    %v3416 = vunpack.c.l.b16 %v2676
    %v3417 = vunpack.c.h.b16 %v2676
    %v3418 = vunpack.c.l.b16 %v2677
    %v3419 = vpack.c.b16 %v2978, %v2971
    %v3420 = vpack.c.b16 %v2979, %v2972
    %v3421 = vpack.c.b16 %v2980, %v2973
    %v3422 = vpack.c.b16 %v2981, %v2974
    %v3423 = vpack.c.b16 %v2982, %v2975
    %v3424 = vpack.c.b16 %v2983, %v2976
    %v3425 = vpack.c.b16 %v2984, %v2977
    %v3426 = vpack.c.b16 %v2992, %v2985
    %v3427 = vpack.c.b16 %v2993, %v2986
    %v3428 = vpack.c.b16 %v2994, %v2987
    %v3429 = vpack.c.b16 %v2995, %v2988
    %v3430 = vpack.c.b16 %v2996, %v2989
    %v3431 = vpack.c.b16 %v2997, %v2990
    %v3432 = vpack.c.b16 %v2998, %v2991
    %v3433 = vpack.c.b16 %v3006, %v2999
    %v3434 = vpack.c.b16 %v3007, %v3000
    %v3435 = vpack.c.b16 %v3008, %v3001
    %v3436 = vpack.c.b16 %v3009, %v3002
    %v3437 = vpack.c.b16 %v3010, %v3003
    %v3438 = vpack.c.b16 %v3011, %v3004
    %v3439 = vpack.c.b16 %v3012, %v3005
    %v3440 = vpack.c.b16 %v3020, %v3013
    %v3441 = vpack.c.b16 %v3021, %v3014
    %v3442 = vpack.c.b16 %v3022, %v3015
    %v3443 = vpack.c.b16 %v3023, %v3016
    %v3444 = vpack.c.b16 %v3024, %v3017
    %v3445 = vpack.c.b16 %v3025, %v3018
    %v3446 = vpack.c.b16 %v3026, %v3019
    %v3447 = vpack.c.b16 %v3034, %v3027
    %v3448 = vpack.c.b16 %v3035, %v3028
    %v3449 = vpack.c.b16 %v3036, %v3029
    %v3450 = vpack.c.b16 %v3037, %v3030
    %v3451 = vpack.c.b16 %v3038, %v3031
    %v3452 = vpack.c.b16 %v3039, %v3032
    %v3453 = vpack.c.b16 %v3040, %v3033
    %v3454 = vpack.c.b16 %v3048, %v3041
    %v3455 = vpack.c.b16 %v3049, %v3042
    %v3456 = vpack.c.b16 %v3050, %v3043
    %v3457 = vpack.c.b16 %v3051, %v3044
    %v3458 = vpack.c.b16 %v3052, %v3045
    %v3459 = vpack.c.b16 %v3053, %v3046
    %v3460 = vpack.c.b16 %v3054, %v3047
    %v3461 = vpack.c.b16 %v3062, %v3055
    %v3462 = vpack.c.b16 %v3063, %v3056
    %v3463 = vpack.c.b16 %v3064, %v3057
    %v3464 = vpack.c.b16 %v3065, %v3058
    %v3465 = vpack.c.b16 %v3066, %v3059
    %v3466 = vpack.c.b16 %v3067, %v3060
    %v3467 = vpack.c.b16 %v3068, %v3061
    %v3468 = vpack.c.b16 %v3076, %v3069
    %v3469 = vpack.c.b16 %v3077, %v3070
    %v3470 = vpack.c.b16 %v3078, %v3071
    %v3471 = vpack.c.b16 %v3079, %v3072
    %v3472 = vpack.c.b16 %v3080, %v3073
    %v3473 = vpack.c.b16 %v3081, %v3074
    %v3474 = vpack.c.b16 %v3082, %v3075
    %v3475 = vpack.c.b16 %v3090, %v3083
    %v3476 = vpack.c.b16 %v3091, %v3084
    %v3477 = vpack.c.b16 %v3092, %v3085
    %v3478 = vpack.c.b16 %v3093, %v3086
    %v3479 = vpack.c.b16 %v3094, %v3087
    %v3480 = vpack.c.b16 %v3095, %v3088
    %v3481 = vpack.c.b16 %v3096, %v3089
    %v3482 = vpack.c.b16 %v3104, %v3097
    %v3483 = vpack.c.b16 %v3105, %v3098
    %v3484 = vpack.c.b16 %v3106, %v3099
    %v3485 = vpack.c.b16 %v3107, %v3100
    %v3486 = vpack.c.b16 %v3108, %v3101
    %v3487 = vpack.c.b16 %v3109, %v3102
    %v3488 = vpack.c.b16 %v3110, %v3103
    %v3489 = vpack.c.b16 %v3118, %v3111
    %v3490 = vpack.c.b16 %v3119, %v3112
    %v3491 = vpack.c.b16 %v3120, %v3113
    %v3492 = vpack.c.b16 %v3121, %v3114
    %v3493 = vpack.c.b16 %v3122, %v3115
    %v3494 = vpack.c.b16 %v3123, %v3116
    %v3495 = vpack.c.b16 %v3124, %v3117
    %v3496 = vpack.c.b16 %v3132, %v3125
    %v3497 = vpack.c.b16 %v3133, %v3126
    %v3498 = vpack.c.b16 %v3134, %v3127
    %v3499 = vpack.c.b16 %v3135, %v3128
    %v3500 = vpack.c.b16 %v3136, %v3129
    %v3501 = vpack.c.b16 %v3137, %v3130
    %v3502 = vpack.c.b16 %v3138, %v3131
    %v3503 = vpack.c.b16 %v3146, %v3139
    %v3504 = vpack.c.b16 %v3147, %v3140
    %v3505 = vpack.c.b16 %v3148, %v3141
    %v3506 = vpack.c.b16 %v3149, %v3142
    %v3507 = vpack.c.b16 %v3150, %v3143
    %v3508 = vpack.c.b16 %v3151, %v3144
    %v3509 = vpack.c.b16 %v3152, %v3145
    %v3510 = vpack.c.b16 %v3160, %v3153
    %v3511 = vpack.c.b16 %v3161, %v3154
    %v3512 = vpack.c.b16 %v3162, %v3155
    %v3513 = vpack.c.b16 %v3163, %v3156
    %v3514 = vpack.c.b16 %v3164, %v3157
    %v3515 = vpack.c.b16 %v3165, %v3158
    %v3516 = vpack.c.b16 %v3166, %v3159
    %v3517 = vpack.c.b16 %v3174, %v3167
    %v3518 = vpack.c.b16 %v3175, %v3168
    %v3519 = vpack.c.b16 %v3176, %v3169
    %v3520 = vpack.c.b16 %v3177, %v3170
    %v3521 = vpack.c.b16 %v3178, %v3171
    %v3522 = vpack.c.b16 %v3179, %v3172
    %v3523 = vpack.c.b16 %v3180, %v3173
    %v3524 = vpack.c.b16 %v3188, %v3181
    %v3525 = vpack.c.b16 %v3189, %v3182
    %v3526 = vpack.c.b16 %v3190, %v3183
    %v3527 = vpack.c.b16 %v3191, %v3184
    %v3528 = vpack.c.b16 %v3192, %v3185
    %v3529 = vpack.c.b16 %v3193, %v3186
    %v3530 = vpack.c.b16 %v3194, %v3187
    %v3531 = vpack.c.b16 %v3202, %v3195
    %v3532 = vpack.c.b16 %v3203, %v3196
    %v3533 = vpack.c.b16 %v3204, %v3197
    %v3534 = vpack.c.b16 %v3205, %v3198
    %v3535 = vpack.c.b16 %v3206, %v3199
    %v3536 = vpack.c.b16 %v3207, %v3200
    %v3537 = vpack.c.b16 %v3208, %v3201
    %v3538 = vpack.c.b16 %v3216, %v3209
    %v3539 = vpack.c.b16 %v3217, %v3210
    %v3540 = vpack.c.b16 %v3218, %v3211
    %v3541 = vpack.c.b16 %v3219, %v3212
    %v3542 = vpack.c.b16 %v3220, %v3213
    %v3543 = vpack.c.b16 %v3221, %v3214
    %v3544 = vpack.c.b16 %v3222, %v3215
    %v3545 = vpack.c.b16 %v3230, %v3223
    %v3546 = vpack.c.b16 %v3231, %v3224
    %v3547 = vpack.c.b16 %v3232, %v3225
    %v3548 = vpack.c.b16 %v3233, %v3226
    %v3549 = vpack.c.b16 %v3234, %v3227
    %v3550 = vpack.c.b16 %v3235, %v3228
    %v3551 = vpack.c.b16 %v3236, %v3229
    %v3552 = vpack.c.b16 %v3244, %v3237
    %v3553 = vpack.c.b16 %v3245, %v3238
    %v3554 = vpack.c.b16 %v3246, %v3239
    %v3555 = vpack.c.b16 %v3247, %v3240
    %v3556 = vpack.c.b16 %v3248, %v3241
    %v3557 = vpack.c.b16 %v3249, %v3242
    %v3558 = vpack.c.b16 %v3250, %v3243
    %v3559 = vpack.c.b16 %v3258, %v3251
    %v3560 = vpack.c.b16 %v3259, %v3252
    %v3561 = vpack.c.b16 %v3260, %v3253
    %v3562 = vpack.c.b16 %v3261, %v3254
    %v3563 = vpack.c.b16 %v3262, %v3255
    %v3564 = vpack.c.b16 %v3263, %v3256
    %v3565 = vpack.c.b16 %v3264, %v3257
    %v3566 = vpack.c.b16 %v3272, %v3265
    %v3567 = vpack.c.b16 %v3273, %v3266
    %v3568 = vpack.c.b16 %v3274, %v3267
    %v3569 = vpack.c.b16 %v3275, %v3268
    %v3570 = vpack.c.b16 %v3276, %v3269
    %v3571 = vpack.c.b16 %v3277, %v3270
    %v3572 = vpack.c.b16 %v3278, %v3271
    %v3573 = vpack.c.b16 %v3286, %v3279
    %v3574 = vpack.c.b16 %v3287, %v3280
    %v3575 = vpack.c.b16 %v3288, %v3281
    %v3576 = vpack.c.b16 %v3289, %v3282
    %v3577 = vpack.c.b16 %v3290, %v3283
    %v3578 = vpack.c.b16 %v3291, %v3284
    %v3579 = vpack.c.b16 %v3292, %v3285
    %v3580 = vpack.c.b16 %v3300, %v3293
    %v3581 = vpack.c.b16 %v3301, %v3294
    %v3582 = vpack.c.b16 %v3302, %v3295
    %v3583 = vpack.c.b16 %v3303, %v3296
    %v3584 = vpack.c.b16 %v3304, %v3297
    %v3585 = vpack.c.b16 %v3305, %v3298
    %v3586 = vpack.c.b16 %v3306, %v3299
    %v3587 = vpack.c.b16 %v3314, %v3307
    %v3588 = vpack.c.b16 %v3315, %v3308
    %v3589 = vpack.c.b16 %v3316, %v3309
    %v3590 = vpack.c.b16 %v3317, %v3310
    %v3591 = vpack.c.b16 %v3318, %v3311
    %v3592 = vpack.c.b16 %v3319, %v3312
    %v3593 = vpack.c.b16 %v3320, %v3313
    %v3594 = vpack.c.b16 %v3328, %v3321
    %v3595 = vpack.c.b16 %v3329, %v3322
    %v3596 = vpack.c.b16 %v3330, %v3323
    %v3597 = vpack.c.b16 %v3331, %v3324
    %v3598 = vpack.c.b16 %v3332, %v3325
    %v3599 = vpack.c.b16 %v3333, %v3326
    %v3600 = vpack.c.b16 %v3334, %v3327
    %v3601 = vpack.c.b16 %v3342, %v3335
    %v3602 = vpack.c.b16 %v3343, %v3336
    %v3603 = vpack.c.b16 %v3344, %v3337
    %v3604 = vpack.c.b16 %v3345, %v3338
    %v3605 = vpack.c.b16 %v3346, %v3339
    %v3606 = vpack.c.b16 %v3347, %v3340
    %v3607 = vpack.c.b16 %v3348, %v3341
    %v3608 = vpack.c.b16 %v3356, %v3349
    %v3609 = vpack.c.b16 %v3357, %v3350
    %v3610 = vpack.c.b16 %v3358, %v3351
    %v3611 = vpack.c.b16 %v3359, %v3352
    %v3612 = vpack.c.b16 %v3360, %v3353
    %v3613 = vpack.c.b16 %v3361, %v3354
    %v3614 = vpack.c.b16 %v3362, %v3355
    %v3615 = vpack.c.b16 %v3370, %v3363
    %v3616 = vpack.c.b16 %v3371, %v3364
    %v3617 = vpack.c.b16 %v3372, %v3365
    %v3618 = vpack.c.b16 %v3373, %v3366
    %v3619 = vpack.c.b16 %v3374, %v3367
    %v3620 = vpack.c.b16 %v3375, %v3368
    %v3621 = vpack.c.b16 %v3376, %v3369
    %v3622 = vpack.c.b16 %v3384, %v3377
    %v3623 = vpack.c.b16 %v3385, %v3378
    %v3624 = vpack.c.b16 %v3386, %v3379
    %v3625 = vpack.c.b16 %v3387, %v3380
    %v3626 = vpack.c.b16 %v3388, %v3381
    %v3627 = vpack.c.b16 %v3389, %v3382
    %v3628 = vpack.c.b16 %v3390, %v3383
    %v3629 = vpack.c.b16 %v3398, %v3391
    %v3630 = vpack.c.b16 %v3399, %v3392
    %v3631 = vpack.c.b16 %v3400, %v3393
    %v3632 = vpack.c.b16 %v3401, %v3394
    %v3633 = vpack.c.b16 %v3402, %v3395
    %v3634 = vpack.c.b16 %v3403, %v3396
    %v3635 = vpack.c.b16 %v3404, %v3397
    %v3636 = vpack.c.b16 %v3412, %v3405
    %v3637 = vpack.c.b16 %v3413, %v3406
    %v3638 = vpack.c.b16 %v3414, %v3407
    %v3639 = vpack.c.b16 %v3415, %v3408
    %v3640 = vpack.c.b16 %v3416, %v3409
    %v3641 = vpack.c.b16 %v3417, %v3410
    %v3642 = vpack.c.b16 %v3418, %v3411
    %3867 = vmatprep.subr.bf16.mxu0 %v3469
    %3868 = vmatpush1.bf16.msra.mxu0 %v3468
    %3869 = vmatprep.subr.bf16.mxu0 %v3462
    %3870 = vmatpush1.bf16.msra.mxu0 %v3461
    %3871 = vmatprep.subr.bf16.mxu0 %v3455
    %3872 = vmatpush1.bf16.msra.mxu0 %v3454
    %3873 = vmatprep.subr.bf16.mxu0 %v3448
    %3874 = vmatpush1.bf16.msra.mxu0 %v3447
    %3875 = vmatprep.subr.bf16.mxu0 %v3441
    %3876 = vmatpush1.bf16.msra.mxu0 %v3440
    %3877 = vmatprep.subr.bf16.mxu0 %v3434
    %3878 = vmatpush1.bf16.msra.mxu0 %v3433
    %3879 = vmatprep.subr.bf16.mxu0 %v3427
    %3880 = vmatpush1.bf16.msra.mxu0 %v3426
    %3881 = vmatprep.subr.bf16.mxu0 %v3420
    %3882 = vmatpush1.bf16.msra.mxu0 %v3419
    %3883 = vmatprep.subr.bf16.mxu0 %v3525
    %3884 = vmatpush2.bf16.msra.mxu0 %v3524
    %3885 = vmatprep.subr.bf16.mxu0 %v3518
    %3886 = vmatpush2.bf16.msra.mxu0 %v3517
    %3887 = vmatprep.subr.bf16.mxu0 %v3511
    %3888 = vmatpush2.bf16.msra.mxu0 %v3510
    %3889 = vmatprep.subr.bf16.mxu0 %v3504
    %3890 = vmatpush2.bf16.msra.mxu0 %v3503
    %3891 = vmatprep.subr.bf16.mxu0 %v3497
    %3892 = vmatpush2.bf16.msra.mxu0 %v3496
    %3893 = vmatprep.subr.bf16.mxu0 %v3490
    %3894 = vmatpush2.bf16.msra.mxu0 %v3489
    %3895 = vmatprep.subr.bf16.mxu0 %v3483
    %3896 = vmatpush2.bf16.msra.mxu0 %v3482
    %3897 = vmatprep.subr.bf16.mxu0 %v3476
    %3898 = vmatpush2.bf16.msra.mxu0 %v3475
    %3899 = vmatprep.mubr.bf16.mxu0 %v2419
    %3900 = vmatmul.mubr.bf16.gmra.mxu0 %v2418
    %v3901 = vpop.f32.mrf.mxu0
    %v3902 = vadd.f32 %v2683, %v3901
    %v3903 = vpop.f32.mrf.mxu0
    %v3904 = vadd.f32 %v2687, %v3903
    %v3905 = vpop.f32.mrf.mxu0
    %v3906 = vpop.f32.mrf.mxu0
    %3907 = vdwg.mxu0
    %3908 = vmatprep.subr.bf16.mxu0 %v3581
    %3909 = vmatpush1.bf16.msra.mxu0 %v3580
    %3910 = vmatprep.subr.bf16.mxu0 %v3574
    %3911 = vmatpush1.bf16.msra.mxu0 %v3573
    %3912 = vmatprep.subr.bf16.mxu0 %v3567
    %3913 = vmatpush1.bf16.msra.mxu0 %v3566
    %3914 = vmatprep.subr.bf16.mxu0 %v3560
    %3915 = vmatpush1.bf16.msra.mxu0 %v3559
    %3916 = vmatprep.subr.bf16.mxu0 %v3553
    %3917 = vmatpush1.bf16.msra.mxu0 %v3552
    %3918 = vmatprep.subr.bf16.mxu0 %v3546
    %3919 = vmatpush1.bf16.msra.mxu0 %v3545
    %3920 = vmatprep.subr.bf16.mxu0 %v3539
    %3921 = vmatpush1.bf16.msra.mxu0 %v3538
    %3922 = vmatprep.subr.bf16.mxu0 %v3532
    %3923 = vmatpush1.bf16.msra.mxu0 %v3531
    %3924 = vmatprep.subr.bf16.mxu0 %v3637
    %3925 = vmatpush2.bf16.msra.mxu0 %v3636
    %3926 = vmatprep.subr.bf16.mxu0 %v3630
    %3927 = vmatpush2.bf16.msra.mxu0 %v3629
    %3928 = vmatprep.subr.bf16.mxu0 %v3623
    %3929 = vmatpush2.bf16.msra.mxu0 %v3622
    %3930 = vmatprep.subr.bf16.mxu0 %v3616
    %3931 = vmatpush2.bf16.msra.mxu0 %v3615
    %3932 = vmatprep.subr.bf16.mxu0 %v3609
    %3933 = vmatpush2.bf16.msra.mxu0 %v3608
    %3934 = vmatprep.subr.bf16.mxu0 %v3602
    %3935 = vmatpush2.bf16.msra.mxu0 %v3601
    %3936 = vmatprep.subr.bf16.mxu0 %v3595
    %3937 = vmatpush2.bf16.msra.mxu0 %v3594
    %3938 = vmatprep.subr.bf16.mxu0 %v3588
    %3939 = vmatpush2.bf16.msra.mxu0 %v3587
    %3940 = vmatprep.mubr.bf16.mxu0 %v2421
    %3941 = vmatmul.mubr.bf16.gmra.mxu0 %v2420
    %v3942 = vpop.f32.mrf.mxu0
    %v3943 = vadd.f32 %v3902, %v3942
    %v3944 = vpop.f32.mrf.mxu0
    %v3945 = vadd.f32 %v3904, %v3944
    %v3946 = vpop.f32.mrf.mxu0
    %v3947 = vpop.f32.mrf.mxu0
    %3948 = vdwg.mxu0
    %3949 = vmatprep.subr.bf16.mxu0 %v3471
    %3950 = vmatpush1.bf16.msra.mxu0 %v3470
    %3951 = vmatprep.subr.bf16.mxu0 %v3464
    %3952 = vmatpush1.bf16.msra.mxu0 %v3463
    %3953 = vmatprep.subr.bf16.mxu0 %v3457
    %3954 = vmatpush1.bf16.msra.mxu0 %v3456
    %3955 = vmatprep.subr.bf16.mxu0 %v3450
    %3956 = vmatpush1.bf16.msra.mxu0 %v3449
    %3957 = vmatprep.subr.bf16.mxu0 %v3443
    %3958 = vmatpush1.bf16.msra.mxu0 %v3442
    %3959 = vmatprep.subr.bf16.mxu0 %v3436
    %3960 = vmatpush1.bf16.msra.mxu0 %v3435
    %3961 = vmatprep.subr.bf16.mxu0 %v3429
    %3962 = vmatpush1.bf16.msra.mxu0 %v3428
    %3963 = vmatprep.subr.bf16.mxu0 %v3422
    %3964 = vmatpush1.bf16.msra.mxu0 %v3421
    %3965 = vmatprep.subr.bf16.mxu0 %v3527
    %3966 = vmatpush2.bf16.msra.mxu0 %v3526
    %3967 = vmatprep.subr.bf16.mxu0 %v3520
    %3968 = vmatpush2.bf16.msra.mxu0 %v3519
    %3969 = vmatprep.subr.bf16.mxu0 %v3513
    %3970 = vmatpush2.bf16.msra.mxu0 %v3512
    %3971 = vmatprep.subr.bf16.mxu0 %v3506
    %3972 = vmatpush2.bf16.msra.mxu0 %v3505
    %3973 = vmatprep.subr.bf16.mxu0 %v3499
    %3974 = vmatpush2.bf16.msra.mxu0 %v3498
    %3975 = vmatprep.subr.bf16.mxu0 %v3492
    %3976 = vmatpush2.bf16.msra.mxu0 %v3491
    %3977 = vmatprep.subr.bf16.mxu0 %v3485
    %3978 = vmatpush2.bf16.msra.mxu0 %v3484
    %3979 = vmatprep.subr.bf16.mxu0 %v3478
    %3980 = vmatpush2.bf16.msra.mxu0 %v3477
    %3981 = vmatprep.mubr.bf16.mxu0 %v2419
    %3982 = vmatmul.mubr.bf16.gmra.mxu0 %v2418
    %v3983 = vpop.f32.mrf.mxu0
    %v3984 = vadd.f32 %v2691, %v3983
    %v3985 = vpop.f32.mrf.mxu0
    %v3986 = vadd.f32 %v2695, %v3985
    %v3987 = vpop.f32.mrf.mxu0
    %v3988 = vpop.f32.mrf.mxu0
    %3989 = vdwg.mxu0
    %3990 = vmatprep.subr.bf16.mxu0 %v3583
    %3991 = vmatpush1.bf16.msra.mxu0 %v3582
    %3992 = vmatprep.subr.bf16.mxu0 %v3576
    %3993 = vmatpush1.bf16.msra.mxu0 %v3575
    %3994 = vmatprep.subr.bf16.mxu0 %v3569
    %3995 = vmatpush1.bf16.msra.mxu0 %v3568
    %3996 = vmatprep.subr.bf16.mxu0 %v3562
    %3997 = vmatpush1.bf16.msra.mxu0 %v3561
    %3998 = vmatprep.subr.bf16.mxu0 %v3555
    %3999 = vmatpush1.bf16.msra.mxu0 %v3554
    %4000 = vmatprep.subr.bf16.mxu0 %v3548
    %4001 = vmatpush1.bf16.msra.mxu0 %v3547
    %4002 = vmatprep.subr.bf16.mxu0 %v3541
    %4003 = vmatpush1.bf16.msra.mxu0 %v3540
    %4004 = vmatprep.subr.bf16.mxu0 %v3534
    %4005 = vmatpush1.bf16.msra.mxu0 %v3533
    %4006 = vmatprep.subr.bf16.mxu0 %v3639
    %4007 = vmatpush2.bf16.msra.mxu0 %v3638
    %4008 = vmatprep.subr.bf16.mxu0 %v3632
    %4009 = vmatpush2.bf16.msra.mxu0 %v3631
    %4010 = vmatprep.subr.bf16.mxu0 %v3625
    %4011 = vmatpush2.bf16.msra.mxu0 %v3624
    %4012 = vmatprep.subr.bf16.mxu0 %v3618
    %4013 = vmatpush2.bf16.msra.mxu0 %v3617
    %4014 = vmatprep.subr.bf16.mxu0 %v3611
    %4015 = vmatpush2.bf16.msra.mxu0 %v3610
    %4016 = vmatprep.subr.bf16.mxu0 %v3604
    %4017 = vmatpush2.bf16.msra.mxu0 %v3603
    %4018 = vmatprep.subr.bf16.mxu0 %v3597
    %4019 = vmatpush2.bf16.msra.mxu0 %v3596
    %4020 = vmatprep.subr.bf16.mxu0 %v3590
    %4021 = vmatpush2.bf16.msra.mxu0 %v3589
    %4022 = vmatprep.mubr.bf16.mxu0 %v2421
    %4023 = vmatmul.mubr.bf16.gmra.mxu0 %v2420
    %v4024 = vpop.f32.mrf.mxu0
    %v4025 = vadd.f32 %v3984, %v4024
    %v4026 = vpop.f32.mrf.mxu0
    %v4027 = vadd.f32 %v3986, %v4026
    %v4028 = vpop.f32.mrf.mxu0
    %v4029 = vpop.f32.mrf.mxu0
    %4030 = vdwg.mxu0
    %4031 = vmatprep.subr.bf16.mxu0 %v3473
    %4032 = vmatpush1.bf16.msra.mxu0 %v3472
    %4033 = vmatprep.subr.bf16.mxu0 %v3466
    %4034 = vmatpush1.bf16.msra.mxu0 %v3465
    %4035 = vmatprep.subr.bf16.mxu0 %v3459
    %4036 = vmatpush1.bf16.msra.mxu0 %v3458
    %4037 = vmatprep.subr.bf16.mxu0 %v3452
    %4038 = vmatpush1.bf16.msra.mxu0 %v3451
    %4039 = vmatprep.subr.bf16.mxu0 %v3445
    %4040 = vmatpush1.bf16.msra.mxu0 %v3444
    %4041 = vmatprep.subr.bf16.mxu0 %v3438
    %4042 = vmatpush1.bf16.msra.mxu0 %v3437
    %4043 = vmatprep.subr.bf16.mxu0 %v3431
    %4044 = vmatpush1.bf16.msra.mxu0 %v3430
    %4045 = vmatprep.subr.bf16.mxu0 %v3424
    %4046 = vmatpush1.bf16.msra.mxu0 %v3423
    %4047 = vmatprep.subr.bf16.mxu0 %v3529
    %4048 = vmatpush2.bf16.msra.mxu0 %v3528
    %4049 = vmatprep.subr.bf16.mxu0 %v3522
    %4050 = vmatpush2.bf16.msra.mxu0 %v3521
    %4051 = vmatprep.subr.bf16.mxu0 %v3515
    %4052 = vmatpush2.bf16.msra.mxu0 %v3514
    %4053 = vmatprep.subr.bf16.mxu0 %v3508
    %4054 = vmatpush2.bf16.msra.mxu0 %v3507
    %4055 = vmatprep.subr.bf16.mxu0 %v3501
    %4056 = vmatpush2.bf16.msra.mxu0 %v3500
    %4057 = vmatprep.subr.bf16.mxu0 %v3494
    %4058 = vmatpush2.bf16.msra.mxu0 %v3493
    %4059 = vmatprep.subr.bf16.mxu0 %v3487
    %4060 = vmatpush2.bf16.msra.mxu0 %v3486
    %4061 = vmatprep.subr.bf16.mxu0 %v3480
    %4062 = vmatpush2.bf16.msra.mxu0 %v3479
    %4063 = vmatprep.mubr.bf16.mxu0 %v2419
    %4064 = vmatmul.mubr.bf16.gmra.mxu0 %v2418
    %v4065 = vpop.f32.mrf.mxu0
    %v4066 = vadd.f32 %v2699, %v4065
    %v4067 = vpop.f32.mrf.mxu0
    %v4068 = vadd.f32 %v2703, %v4067
    %v4069 = vpop.f32.mrf.mxu0
    %v4070 = vpop.f32.mrf.mxu0
    %4071 = vdwg.mxu0
    %4072 = vmatprep.subr.bf16.mxu0 %v3585
    %4073 = vmatpush1.bf16.msra.mxu0 %v3584
    %4074 = vmatprep.subr.bf16.mxu0 %v3578
    %4075 = vmatpush1.bf16.msra.mxu0 %v3577
    %4076 = vmatprep.subr.bf16.mxu0 %v3571
    %4077 = vmatpush1.bf16.msra.mxu0 %v3570
    %4078 = vmatprep.subr.bf16.mxu0 %v3564
    %4079 = vmatpush1.bf16.msra.mxu0 %v3563
    %4080 = vmatprep.subr.bf16.mxu0 %v3557
    %4081 = vmatpush1.bf16.msra.mxu0 %v3556
    %4082 = vmatprep.subr.bf16.mxu0 %v3550
    %4083 = vmatpush1.bf16.msra.mxu0 %v3549
    %4084 = vmatprep.subr.bf16.mxu0 %v3543
    %4085 = vmatpush1.bf16.msra.mxu0 %v3542
    %4086 = vmatprep.subr.bf16.mxu0 %v3536
    %4087 = vmatpush1.bf16.msra.mxu0 %v3535
    %4088 = vmatprep.subr.bf16.mxu0 %v3641
    %4089 = vmatpush2.bf16.msra.mxu0 %v3640
    %4090 = vmatprep.subr.bf16.mxu0 %v3634
    %4091 = vmatpush2.bf16.msra.mxu0 %v3633
    %4092 = vmatprep.subr.bf16.mxu0 %v3627
    %4093 = vmatpush2.bf16.msra.mxu0 %v3626
    %4094 = vmatprep.subr.bf16.mxu0 %v3620
    %4095 = vmatpush2.bf16.msra.mxu0 %v3619
    %4096 = vmatprep.subr.bf16.mxu0 %v3613
    %4097 = vmatpush2.bf16.msra.mxu0 %v3612
    %4098 = vmatprep.subr.bf16.mxu0 %v3606
    %4099 = vmatpush2.bf16.msra.mxu0 %v3605
    %4100 = vmatprep.subr.bf16.mxu0 %v3599
    %4101 = vmatpush2.bf16.msra.mxu0 %v3598
    %4102 = vmatprep.subr.bf16.mxu0 %v3592
    %4103 = vmatpush2.bf16.msra.mxu0 %v3591
    %4104 = vmatprep.mubr.bf16.mxu0 %v2421
    %4105 = vmatmul.mubr.bf16.gmra.mxu0 %v2420
    %v4106 = vpop.f32.mrf.mxu0
    %v4107 = vadd.f32 %v4066, %v4106
    %v4108 = vpop.f32.mrf.mxu0
    %v4109 = vadd.f32 %v4068, %v4108
    %v4110 = vpop.f32.mrf.mxu0
    %v4111 = vpop.f32.mrf.mxu0
    %4112 = vdwg.mxu0
    %4113 = vmatprep.subr.bf16.mxu0 0
    %4114 = vmatpush1.bf16.msra.mxu0 %v3474
    %4115 = vmatprep.subr.bf16.mxu0 0
    %4116 = vmatpush1.bf16.msra.mxu0 %v3467
    %4117 = vmatprep.subr.bf16.mxu0 0
    %4118 = vmatpush1.bf16.msra.mxu0 %v3460
    %4119 = vmatprep.subr.bf16.mxu0 0
    %4120 = vmatpush1.bf16.msra.mxu0 %v3453
    %4121 = vmatprep.subr.bf16.mxu0 0
    %4122 = vmatpush1.bf16.msra.mxu0 %v3446
    %4123 = vmatprep.subr.bf16.mxu0 0
    %4124 = vmatpush1.bf16.msra.mxu0 %v3439
    %4125 = vmatprep.subr.bf16.mxu0 0
    %4126 = vmatpush1.bf16.msra.mxu0 %v3432
    %4127 = vmatprep.subr.bf16.mxu0 0
    %4128 = vmatpush1.bf16.msra.mxu0 %v3425
    %4129 = vmatprep.subr.bf16.mxu0 0
    %4130 = vmatpush2.bf16.msra.mxu0 %v3530
    %4131 = vmatprep.subr.bf16.mxu0 0
    %4132 = vmatpush2.bf16.msra.mxu0 %v3523
    %4133 = vmatprep.subr.bf16.mxu0 0
    %4134 = vmatpush2.bf16.msra.mxu0 %v3516
    %4135 = vmatprep.subr.bf16.mxu0 0
    %4136 = vmatpush2.bf16.msra.mxu0 %v3509
    %4137 = vmatprep.subr.bf16.mxu0 0
    %4138 = vmatpush2.bf16.msra.mxu0 %v3502
    %4139 = vmatprep.subr.bf16.mxu0 0
    %4140 = vmatpush2.bf16.msra.mxu0 %v3495
    %4141 = vmatprep.subr.bf16.mxu0 0
    %4142 = vmatpush2.bf16.msra.mxu0 %v3488
    %4143 = vmatprep.subr.bf16.mxu0 0
    %4144 = vmatpush2.bf16.msra.mxu0 %v3481
    %4145 = vmatprep.mubr.bf16.mxu0 %v2419
    %4146 = vmatmul.mubr.bf16.gmra.mxu0 %v2418
    %v4147 = vpop.f32.mrf.mxu0
    %v4148 = vadd.f32 %v2707, %v4147
    %v4149 = vpop.f32.mrf.mxu0
    %v4150 = vpop.f32.mrf.mxu0
    %v4151 = vpop.f32.mrf.mxu0
    %4152 = vdwg.mxu0
    %4153 = vmatprep.subr.bf16.mxu0 0
    %4154 = vmatpush1.bf16.msra.mxu0 %v3586
    %4155 = vmatprep.subr.bf16.mxu0 0
    %4156 = vmatpush1.bf16.msra.mxu0 %v3579
    %4157 = vmatprep.subr.bf16.mxu0 0
    %4158 = vmatpush1.bf16.msra.mxu0 %v3572
    %4159 = vmatprep.subr.bf16.mxu0 0
    %4160 = vmatpush1.bf16.msra.mxu0 %v3565
    %4161 = vmatprep.subr.bf16.mxu0 0
    %4162 = vmatpush1.bf16.msra.mxu0 %v3558
    %4163 = vmatprep.subr.bf16.mxu0 0
    %4164 = vmatpush1.bf16.msra.mxu0 %v3551
    %4165 = vmatprep.subr.bf16.mxu0 0
    %4166 = vmatpush1.bf16.msra.mxu0 %v3544
    %4167 = vmatprep.subr.bf16.mxu0 0
    %4168 = vmatpush1.bf16.msra.mxu0 %v3537
    %4169 = vmatprep.subr.bf16.mxu0 0
    %4170 = vmatpush2.bf16.msra.mxu0 %v3642
    %4171 = vmatprep.subr.bf16.mxu0 0
    %4172 = vmatpush2.bf16.msra.mxu0 %v3635
    %4173 = vmatprep.subr.bf16.mxu0 0
    %4174 = vmatpush2.bf16.msra.mxu0 %v3628
    %4175 = vmatprep.subr.bf16.mxu0 0
    %4176 = vmatpush2.bf16.msra.mxu0 %v3621
    %4177 = vmatprep.subr.bf16.mxu0 0
    %4178 = vmatpush2.bf16.msra.mxu0 %v3614
    %4179 = vmatprep.subr.bf16.mxu0 0
    %4180 = vmatpush2.bf16.msra.mxu0 %v3607
    %4181 = vmatprep.subr.bf16.mxu0 0
    %4182 = vmatpush2.bf16.msra.mxu0 %v3600
    %4183 = vmatprep.subr.bf16.mxu0 0
    %4184 = vmatpush2.bf16.msra.mxu0 %v3593
    %4185 = vmatprep.mubr.bf16.mxu0 %v2421
    %4186 = vmatmul.mubr.bf16.gmra.mxu0 %v2420
    %v4187 = vpop.f32.mrf.mxu0
    %v4188 = vadd.f32 %v4148, %v4187
    %v4189 = vpop.f32.mrf.mxu0
    %v4190 = vpop.f32.mrf.mxu0
    %v4191 = vpop.f32.mrf.mxu0
    %4192 = vdwg.mxu0
    %v4193 = vxor.u32 %v3943, 2147483648
    %v4194 = vxor.u32 %v3945, 2147483648
    %v4195 = vxor.u32 %v4025, 2147483648
    %v4196 = vxor.u32 %v4027, 2147483648
    %v4197 = vxor.u32 %v4107, 2147483648
    %v4198 = vxor.u32 %v4109, 2147483648
    %v4199 = vxor.u32 %v4188, 2147483648
    %v4200 = vmul.f32 %v4193, 1.442695
    %v4201 = vpow.pop %v4200
    %v4202 = vmul.f32 %v4194, 1.442695
    %v4203 = vpow.pop %v4202
    %v4204 = vmul.f32 %v4195, 1.442695
    %v4205 = vpow.pop %v4204
    %v4206 = vmul.f32 %v4196, 1.442695
    %v4207 = vpow.pop %v4206
    %v4208 = vmul.f32 %v4197, 1.442695
    %v4209 = vpow.pop %v4208
    %v4210 = vmul.f32 %v4198, 1.442695
    %v4211 = vpow.pop %v4210
    %v4212 = vmul.f32 %v4199, 1.442695
    %v4213 = vpow.pop %v4212
    %v4214 = vadd.f32 %v4201, 1.0
    %v4215 = vadd.f32 %v4203, 1.0
    %v4216 = vadd.f32 %v4205, 1.0
    %v4217 = vadd.f32 %v4207, 1.0
    %v4218 = vadd.f32 %v4209, 1.0
    %v4219 = vadd.f32 %v4211, 1.0
    %v4220 = vadd.f32 %v4213, 1.0
    %v4221 = vrcp.pop %v4214
    %v4222 = vmul.f32 1.0, %v4221
    %v4223 = vrcp.pop %v4215
    %v4224 = vmul.f32 1.0, %v4223
    %v4225 = vrcp.pop %v4216
    %v4226 = vmul.f32 1.0, %v4225
    %v4227 = vrcp.pop %v4217
    %v4228 = vmul.f32 1.0, %v4227
    %v4229 = vrcp.pop %v4218
    %v4230 = vmul.f32 1.0, %v4229
    %v4231 = vrcp.pop %v4219
    %v4232 = vmul.f32 1.0, %v4231
    %v4233 = vrcp.pop %v4220
    %v4234 = vmul.f32 1.0, %v4233
    %v4235 = vpack.c.bf16 %v4222, %v4222
    %v4236 = vpack.c.bf16 %v4224, %v4224
    %v4237 = vpack.c.bf16 %v4226, %v4226
    %v4238 = vpack.c.bf16 %v4228, %v4228
    %v4239 = vpack.c.bf16 %v4230, %v4230
    %v4240 = vpack.c.bf16 %v4232, %v4232
    %v4241 = vpack.c.bf16 %v4234, %v4234
    %v4249 = vcombine.low %v4235, %v4236
    %v4250 = vcombine.low %v4237, %v4238
    %v4251 = vcombine.low %v4239, %v4240
    %v4253 = vunpack.c.l.s4 1966171168
    %v4254 = vunpack.c.0.s8 %v4253
    %v4255 = vlaneseq
    %v4256 = vshrl.u32 %v4255, 7
    %v4257 = vsub.s32 %v4254, %v4256
    %v4258 = vrot.slane %v4249, %v4257
    %v4260 = vunpack.c.l.s4 1966171168
    %v4261 = vunpack.c.0.s8 %v4260
    %v4262 = vlaneseq
    %v4263 = vshrl.u32 %v4262, 7
    %v4264 = vsub.s32 %v4261, %v4263
    %v4265 = vrot.slane %v4250, %v4264
    %v4267 = vunpack.c.l.s4 1966171168
    %v4268 = vunpack.c.0.s8 %v4267
    %v4269 = vlaneseq
    %v4270 = vshrl.u32 %v4269, 7
    %v4271 = vsub.s32 %v4268, %v4270
    %v4272 = vrot.slane %v4251, %v4271
    %v4274 = vunpack.c.l.s4 1966171168
    %v4275 = vunpack.c.0.s8 %v4274
    %v4276 = vlaneseq
    %v4277 = vshrl.u32 %v4276, 7
    %v4278 = vsub.s32 %v4275, %v4277
    %v4279 = vrot.slane %v4241, %v4278
    %v4280 = vcombine.low %v4258, %v4265
    %v4281 = vcombine.low %v4272, %v4279
    %v4283 = vunpack.c.l.s4 1966171168
    %v4284 = vunpack.c.0.s8 %v4283
    %v4285 = vlaneseq
    %v4286 = vshrl.u32 %v4285, 7
    %v4287 = vsub.s32 %v4284, %v4286
    %v4288 = vrot.slane %v4280, %v4287
    %v4290 = vunpack.c.l.s4 1966171168
    %v4291 = vunpack.c.0.s8 %v4290
    %v4292 = vlaneseq
    %v4293 = vshrl.u32 %v4292, 7
    %v4294 = vsub.s32 %v4291, %v4293
    %v4295 = vrot.slane %v4281, %v4294
    %v4296 = vcombine.low %v4288, %v4295
    %vm4298 = vcmask 1040384
    %vm4299 = vcmask 1041409
    %vm4300 = vmor %vm4299, %vm4298
    %vm4301 = vcmask 1042434
    %vm4302 = vmor %vm4301, %vm4300
    %vm4303 = vcmask 1043459
    %vm4304 = vmor %vm4303, %vm4302
    %vm4305 = vcmask 1044484
    %vm4306 = vmor %vm4305, %vm4304
    %vm4307 = vcmask 1045509
    %vm4308 = vmor %vm4307, %vm4306
    %vm4309 = vcmask 129030
    %vm4310 = vmor %vm4309, %vm4308
    %4311 = vst.msk [vmem:[#allocation2] sm:$0x7f] %vm4310, %v4296
    // Predicated region
    $region42: #{tpu_custom_call.1} parent=1 // pred_check
      _
    $region43: #{tpu_custom_call.1} parent=1 // pred_check_branch
      %4313 = sbr.rel (0) target = $region45
    $region44: #{tpu_custom_call.1} parent=1 // pred_region
      %s4315 = ssub.s32 112, 112
      %4316 = vsyncadd [#allocation3], %s4315
      %s4318 = sshll.u32 [#allocation2], 4
      %s4319 = int_to_ptr.vmem [resolvable:$true] %s4318
      %4321 = dma.vmem_to_hbm [thread:$0]  %s4319, 112, %s10, [#allocation3]
    $region45: #{tpu_custom_call.1} parent=1 // pred_fallthru
      _
    // Predicated region
    $region46: #{tpu_custom_call.1} parent=1 // pred_check
      _
    $region47: #{tpu_custom_call.1} parent=1 // pred_check_branch
      %4323 = sbr.rel (0) target = $region49
    $region48: #{tpu_custom_call.1} parent=1 // pred_region
      %s4325 = ssub.s32 32, 32
      %4326 = vsyncadd [#allocation5], %s4325
      %s4328 = sshll.u32 [#allocation4], 4
      %s4329 = int_to_ptr.vmem [resolvable:$true] %s4328
      %4331 = dma.vmem_to_hbm [thread:$0]  %s4329, 32, %s11, [#allocation5]
    $region49: #{tpu_custom_call.1} parent=1 // pred_fallthru
      _
    // Predicated region
    $region50: #{tpu_custom_call.1} parent=1 // pred_check
      _
    $region51: #{tpu_custom_call.1} parent=1 // pred_check_branch
      %4333 = sbr.rel (0) target = $region53
    $region52: #{tpu_custom_call.1} parent=1 // pred_region
      %s4335 = ssub.s32 32, 32
      %4336 = vsyncadd [#allocation5], %s4335
      %s4338 = sshll.u32 [#allocation6], 4
      %s4339 = int_to_ptr.vmem [resolvable:$true] %s4338
      %4341 = dma.vmem_to_hbm [thread:$0]  %s4339, 32, %s12, [#allocation5]
    $region53: #{tpu_custom_call.1} parent=1 // pred_fallthru
      _
    // Predicated region
    $region54: #{tpu_custom_call.1} parent=1 // pred_check
      _
    $region55: #{tpu_custom_call.1} parent=1 // pred_check_branch
      %4343 = sbr.rel (0) target = $region57
    $region56: #{tpu_custom_call.1} parent=1 // pred_region
      %4344 = dma.done [#allocation3], 112
    $region57: #{tpu_custom_call.1} parent=1 // pred_fallthru
      _
    // Predicated region
    $region58: #{tpu_custom_call.1} parent=1 // pred_check
      _
    $region59: #{tpu_custom_call.1} parent=1 // pred_check_branch
      %4346 = sbr.rel (0) target = $region61
    $region60: #{tpu_custom_call.1} parent=1 // pred_region
      %4347 = dma.done [#allocation5], 32
    $region61: #{tpu_custom_call.1} parent=1 // pred_fallthru
      _
    // Predicated region
    $region62: #{tpu_custom_call.1} parent=1 // pred_check
      _
    $region63: #{tpu_custom_call.1} parent=1 // pred_check_branch
      %4349 = sbr.rel (0) target = $region65
    $region64: #{tpu_custom_call.1} parent=1 // pred_region
      %4350 = dma.done [#allocation5], 32
    $region65: #{tpu_custom_call.1} parent=1 // pred_fallthru
      _
    %4351 = vsyncpa [#allocation3], 1
    %4352 = vsyncpa [#allocation5], 1

</llo_original>
